<compile_context>
chip_gen: v6e
topology: v6e:2x2x1
jax: 0.10.0
libtpu: 0.0.40
codegen_flags: <defaults>
</compile_context>

<pallas_src>
import numpy as np
import jax
import jax.numpy as jnp
from jax.experimental import pallas as pl
from jax.experimental.pallas import tpu as pltpu

# ----------------------------- small, module-consistent config -----------------
IMG = 16          # img_size
PATCH = 8         # patch_size (== stride -> conv2d == im2col + matmul)
CHANNELS = 3
EMBED = 32        # embed_dim (d_model)
DEPTH = 2         # number of Mamba blocks
NUM_CLASSES = 10
D_STATE = 8       # Mamba d_state
D_CONV = 4        # Mamba d_conv
EXPAND = 2
D_INNER = EXPAND * EMBED
DT_RANK = max(1, -(-EMBED // 16))      # ceil(embed/16)
NORM_EPS = 1e-5
SHARED_LAYERS = 1
NSHARED = DEPTH // SHARED_LAYERS
SIMAM_LAMBDA = 1e-3
INPUT_RELU = True                      # exercise the simam path (constructor flag)

NUM_PATCHES = (IMG // PATCH) * (IMG // PATCH)   # 4
TOKEN_POS = NUM_PATCHES // 2                    # cls token inserted in the middle
SEQ = NUM_PATCHES + 1                           # tokens per image (incl. cls)
CPP = CHANNELS * PATCH * PATCH
assert SEQ - TOKEN_POS - 1 == TOKEN_POS, "addv4 prompt path requires equal segment lengths"


def _fspec(shape):
    """Full-array BlockSpec for a grid=(1,) call."""
    zeros = (0,) * len(shape)
    return pl.BlockSpec(shape, lambda i, z=zeros: z)


_ARB1 = pltpu.CompilerParams(dimension_semantics=("arbitrary",))


# ----------------------------- kernel 1: simam ----------------------------------
def pallas_simam(x, e_lambda=SIMAM_LAMBDA):
    """simam_module.forward on NCHW input (reduction over H*W per (b, c))."""
    B, C, H, W = x.shape
    n = float(H * W - 1)
    x2 = x.reshape(B * C, H * W)

    def kernel(x_ref, o_ref):
        xv = x_ref[...]
        mu = jnp.mean(xv, axis=-1, keepdims=True)
        d2 = (xv - mu) ** 2
        y = d2 / (4.0 * (jnp.sum(d2, axis=-1, keepdims=True) / n + e_lambda)) + 0.5
        o_ref[...] = xv * jax.nn.sigmoid(y)

    out = pl.pallas_call(
        kernel,
        out_shape=jax.ShapeDtypeStruct(x2.shape, jnp.float32),
        grid=(1,),
        in_specs=[_fspec(x2.shape)],
        out_specs=_fspec(x2.shape),
        compiler_params=_ARB1,
    )(x2)
    return out.reshape(B, C, H, W)


# ----------------------------- kernel 2: full fused Vim forward ------------------
def _vim_kernel(patches_ref, pos_ref, rep_ref, sel_ref, sum_ref,
                pw_ref, pb_ref, cls_ref,
                pg_w1_ref, pg_b1_ref, pg_w2_ref, pg_b2_ref,
                pgs_w_ref, pgs_b_ref, psc_ref, pssc_ref,
                nw_ref, nb_ref, inw_ref, cw_ref, cb_ref,
                wd_ref, wbc_ref, dtb_ref, abig_ref, dvec_ref, ow_ref,
                nfw_ref, nfb_ref, hw_ref, hb_ref,
                logits_ref, hid_ref, hs_ref):
    f32, bf16 = jnp.float32, jnp.bfloat16
    B = patches_ref.shape[0] // NUM_PATCHES
    BL = B * SEQ
    tp = TOKEN_POS
    Din, N, K, D = D_INNER, D_STATE, D_CONV, EMBED

    def mm(x, w):                                    # bf16 MXU matmul, f32 accumulation
        return jnp.dot(x.astype(bf16), w, preferred_element_type=f32)

    # ---- patch embed (single batched MXU matmul) + cls-token insertion (once) ----
    tok = mm(patches_ref[...], pw_ref[...]) + pb_ref[...]            # (B*nP, D)
    cls = cls_ref[...]                                               # (1, D)
    rows = []
    for b in range(B):
        tb = tok[b * NUM_PATCHES:(b + 1) * NUM_PATCHES, :]
        rows += [tb[:tp, :], cls, tb[tp:, :]]
    hidden = jnp.concatenate(rows, axis=0)                           # (BL, D) token slab

    # ---- shared row-position masks / scan constants (loaded once, reused per layer) ----
    pos = pos_ref[...]                                               # (BL, 1) token index in seq
    seg1_m = (pos < float(tp)).astype(f32)                           # rows before the cls token
    seg2_m = (pos > float(tp)).astype(f32)                           # rows after the cls token
    rep = rep_ref[...]                                               # (BL*N, BL) row-repeat matrix
    sel = sel_ref[...]                                               # (BL*N, N)  state-select mask
    summ = sum_ref[...]                                              # (BL, BL*N) block-sum matrix

    residual = None                                                  # layer 0: residual == hidden
    for i in range(DEPTH):
        j = i // SHARED_LAYERS
        # ======== prompt (addv4): incorporate_prompt (i==0) / incorporate_deep_prompt ====
        scale = psc_ref[i:i + 1, :]
        sscale = pssc_ref[j:j + 1, :]
        w1, b1 = pg_w1_ref[i], pg_b1_ref[i]
        w2, b2 = pg_w2_ref[i], pg_b2_ref[i]
        wsh, bsh = pgs_w_ref[j], pgs_b_ref[j]

        def gen(r, w1=w1, b1=b1, w2=w2, b2=b2):      # Linear(D,64) -> Linear(64,D) -> SiLU
            h = mm(r, w1) + b1
            h = mm(h, w2) + b2
            return h * jax.nn.sigmoid(h)

        def gsh(r, wsh=wsh, bsh=bsh):                # Linear(D,D) -> SiLU (shared generator)
            h = mm(r, wsh) + bsh
            return h * jax.nn.sigmoid(h)

        g_all = gen(hidden)                          # one batched pass over all rows
        gs1 = gsh(hidden)                            # gsh(old seg1), read at the seg1 rows
        hidden = hidden + seg1_m * (g_all * scale + gs1 * sscale)     # seg1 updated FIRST
        gs2 = gsh(hidden)                            # gsh(updated seg1), at the seg1 rows
        gs2_sh = jnp.concatenate(                    # shift tp+1 rows down -> lands on seg2 rows
            [jnp.zeros((tp + 1, D), f32), gs2[:BL - (tp + 1), :]], axis=0)
        hidden = hidden + seg2_m * (g_all * scale + gs2_sh * sscale)

        # ======== Block: residual add + LayerNorm (layer 0: residual = hidden, no add) ====
        resid = hidden if residual is None else residual + hidden
        residual = resid
        mu = jnp.mean(resid, axis=-1, keepdims=True)
        var = jnp.mean((resid - mu) ** 2, axis=-1, keepdims=True)
        hnorm = (resid - mu) * jax.lax.rsqrt(var + NORM_EPS)
        hnorm = hnorm * nw_ref[i] + nb_ref[i]

        # ======== Mamba mixer ====
        xz = mm(hnorm, inw_ref[i])                   # (BL, 2*Din): lane-dense 128-wide output
        x_in = xz[:, :Din]
        z_in = xz[:, Din:]

        # causal depthwise conv + SiLU on the whole (BL, Din) slab (masked shifted taps)
        cw, cb = cw_ref[i], cb_ref[i]
        xpad = jnp.concatenate([jnp.zeros((K - 1, Din), f32), x_in], axis=0)
        conv = cb
        for k in range(K):
            s = K - 1 - k
            contrib = xpad[k:k + BL, :] * cw[k:k + 1, :]
            if s > 0:                                # zero the first s rows of every sequence
                contrib = jnp.where(pos >= float(s), contrib, 0.0)
            conv = conv + contrib
        xc = conv * jax.nn.sigmoid(conv)             # (BL, Din)

        # delta / B / C projections (dt_proj folded into wdelta; outputs start at lane 0)
        delta = jax.nn.softplus(mm(xc, wd_ref[i]) + dtb_ref[i])       # (BL, Din)
        bc = mm(xc, wbc_ref[i])                                       # (BL, 2N)
        du = delta * xc                                               # (BL, Din)

        # bulk scan precomputes in bt-major (BL*N, Din) layout -- all off the serial h-chain
        delta_rep = jnp.dot(rep, delta, preferred_element_type=f32)   # (BL*N, Din) exact copy
        du_rep = jnp.dot(rep, du, preferred_element_type=f32)         # (BL*N, Din)
        bc_rep = jnp.dot(rep, bc, preferred_element_type=f32)         # (BL*N, 2N)
        b_col = jnp.sum(bc_rep[:, :N] * sel, axis=-1, keepdims=True)  # (BL*N, 1)  B_t[n]
        c_col = jnp.sum(bc_rep[:, N:] * sel, axis=-1, keepdims=True)  # (BL*N, 1)  C_t[n]
        dA_big = jnp.exp(delta_rep * abig_ref[i])    # ONE bulk EUP exp pass     (BL*N, Din)
        bdu_big = b_col * du_rep                     # B_t * (delta*u)_t         (BL*N, Din)

        # serial recurrence: h_t = dA_t*h_{t-1} + Bdu_t  (VPU mul+add + aligned scratch store)
        for b in range(B):
            base = b * SEQ * N
            h = bdu_big[base:base + N, :]            # t = 0: previous state is zero
            hs_ref[base:base + N, :] = h
            for t in range(1, SEQ):
                r0 = base + t * N
                h = dA_big[r0:r0 + N, :] * h + bdu_big[r0:r0 + N, :]
                hs_ref[r0:r0 + N, :] = h

        # deferred C-reduction: one bulk multiply + one small f32 MXU matmul
        y = jnp.dot(summ, c_col * hs_ref[...], preferred_element_type=f32)   # (BL, Din)
        y = y + dvec_ref[i] * xc                     # + D * u
        y = y * (z_in * jax.nn.sigmoid(z_in))        # SiLU(z) gate

        hidden = mm(y, ow_ref[i])                    # out_proj -> (BL, D)

    # ======== final residual add + LayerNorm + classification head ====
    resid = residual + hidden
    mu = jnp.mean(resid, axis=-1, keepdims=True)
    var = jnp.mean((resid - mu) ** 2, axis=-1, keepdims=True)
    hn = (resid - mu) * jax.lax.rsqrt(var + NORM_EPS)
    hn = hn * nfw_ref[...] + nfb_ref[...]
    hid_ref[...] = hn                                                # (BL, D)
    cls_rows = jnp.concatenate(                                      # gather the B cls rows once
        [hn[b * SEQ + tp:b * SEQ + tp + 1, :] for b in range(B)], axis=0)     # (B, D)
    logits_ref[...] = mm(cls_rows, hw_ref[...]) + hb_ref[...]        # one (B,D)@(D,NC) matmul


def pallas_vim(patches, p, B):
    """Everything after simam/im2col, fused into a single pallas_call."""
    BL = B * SEQ
    M = BL * D_STATE
    # Constant index/selection matrices for the bt-major scan layout (trace-time constants).
    rows = np.arange(M)
    rep = (rows[:, None] // D_STATE == np.arange(BL)[None, :]).astype(np.float32)   # (M, BL)
    sel = (rows[:, None] % D_STATE == np.arange(D_STATE)[None, :]).astype(np.float32)  # (M, N)
    summ = np.ascontiguousarray(rep.T)                                               # (BL, M)
    pos = (np.arange(BL) % SEQ).astype(np.float32)[:, None]                          # (BL, 1)
    a_big = jnp.tile(p["A_T"], (1, BL, 1))       # (DEPTH, BL*N, Din): A block per (b, t)

    arrays = (patches, jnp.asarray(pos), jnp.asarray(rep), jnp.asarray(sel), jnp.asarray(summ),
              p["patch_w"], p["patch_b"], p["cls_token"],
              p["pg_w1"], p["pg_b1"], p["pg_w2"], p["pg_b2"],
              p["pgs_w"], p["pgs_b"], p["prompt_scale"], p["prompt_shared_scale"],
              p["norm_w"], p["norm_b"], p["in_proj_w"], p["conv_w"], p["conv_b"],
              p["wdelta"], p["wbc"], p["dt_proj_b"], a_big, p["D"], p["out_proj_w"],
              p["norm_f_w"], p["norm_f_b"], p["head_w"], p["head_b"])
    return pl.pallas_call(
        _vim_kernel,
        out_shape=(jax.ShapeDtypeStruct((B, NUM_CLASSES), jnp.float32),
                   jax.ShapeDtypeStruct((BL, EMBED), jnp.float32)),
        grid=(1,),
        in_specs=[_fspec(a.shape) for a in arrays],
        out_specs=(_fspec((B, NUM_CLASSES)), _fspec((BL, EMBED))),
        scratch_shapes=[pltpu.VMEM((M, D_INNER), jnp.float32)],      # scan state history
        compiler_params=_ARB1,
    )(*arrays)


# ----------------------------- model glue ---------------------------------------
def vision_mamba_forward(params, x):
    """Returns (head(hidden[:, token_position, :]), hidden) like the PyTorch forward."""
    B = x.shape[0]
    if INPUT_RELU:
        x = pallas_simam(x)

    # PatchEmbed: Conv2d(C, E, k=P, s=P) + flatten(2).transpose(1,2) == im2col + matmul.
    nH = nW = IMG // PATCH
    patches = (x.reshape(B, CHANNELS, nH, PATCH, nW, PATCH)
                 .transpose(0, 2, 4, 1, 3, 5)
                 .reshape(B * nH * nW, CPP))

    logits, hid2 = pallas_vim(patches, params, B)
    return logits, hid2.reshape(B, SEQ, EMBED)


# ----------------------------- deterministic parameter init ---------------------
def init_params(key):
    keys = iter(jax.random.split(key, 64))

    def normal(shape, std=0.02):
        return std * jax.random.normal(next(keys), shape, dtype=jnp.float32)

    def bf(a):                     # matmul weights live in bf16 (MXU-native)
        return a.astype(jnp.bfloat16)

    p = {}
    p["patch_w"] = bf(normal((CPP, EMBED)))
    p["patch_b"] = jnp.zeros((1, EMBED), jnp.float32)
    p["cls_token"] = normal((1, EMBED))
    # prompt_scale is hardcoded [24, embed_dim] in the module; small non-zero init.
    p["prompt_scale"] = normal((24, EMBED), std=0.1)
    p["prompt_shared_scale"] = normal((NSHARED, EMBED), std=0.1)
    p["pg_w1"] = bf(normal((DEPTH, EMBED, 64)))
    p["pg_b1"] = jnp.zeros((DEPTH, 1, 64), jnp.float32)
    p["pg_w2"] = bf(normal((DEPTH, 64, EMBED)))
    p["pg_b2"] = jnp.zeros((DEPTH, 1, EMBED), jnp.float32)
    p["pgs_w"] = bf(normal((NSHARED, EMBED, EMBED)))
    p["pgs_b"] = jnp.zeros((NSHARED, 1, EMBED), jnp.float32)

    p["norm_w"] = jnp.ones((DEPTH, 1, EMBED), jnp.float32)
    p["norm_b"] = jnp.zeros((DEPTH, 1, EMBED), jnp.float32)
    p["in_proj_w"] = bf(normal((DEPTH, EMBED, 2 * D_INNER)))
    p["conv_w"] = normal((DEPTH, D_CONV, D_INNER), std=0.2)
    p["conv_b"] = jnp.zeros((DEPTH, 1, D_INNER), jnp.float32)

    wdelta, wbc = [], []
    for _ in range(DEPTH):
        x_proj_w = normal((D_INNER, DT_RANK + 2 * D_STATE))
        dt_proj_w = normal((DT_RANK, D_INNER), std=0.2)
        # Fold dt_proj into x_proj: delta_raw = xc @ (x_proj[:, :R] @ dt_proj) + dt_b.
        wdelta.append(x_proj_w[:, :DT_RANK] @ dt_proj_w)             # (Din, Din)
        wbc.append(x_proj_w[:, DT_RANK:])                            # (Din, 2N)
    p["wdelta"] = bf(jnp.stack(wdelta))
    p["wbc"] = bf(jnp.stack(wbc))
    p["dt_proj_b"] = normal((DEPTH, 1, D_INNER), std=0.1)
    # A = -[1..N] per channel (standard Mamba init), stored state-major as (N, Din).
    a_t = -jnp.broadcast_to(jnp.arange(1, D_STATE + 1, dtype=jnp.float32)[:, None],
                            (D_STATE, D_INNER))
    p["A_T"] = jnp.tile(a_t[None], (DEPTH, 1, 1))
    p["D"] = jnp.ones((DEPTH, 1, D_INNER), jnp.float32)
    p["out_proj_w"] = bf(normal((DEPTH, D_INNER, EMBED)))

    p["norm_f_w"] = jnp.ones((1, EMBED), jnp.float32)
    p["norm_f_b"] = jnp.zeros((1, EMBED), jnp.float32)
    p["head_w"] = bf(normal((EMBED, NUM_CLASSES)))
    p["head_b"] = jnp.zeros((1, NUM_CLASSES), jnp.float32)
    return p


# ----------------------------- main ----------------------------------------------
if __name__ == "__main__":
    root = jax.random.PRNGKey(0)
    pkey, xkey = jax.random.split(root)
    params = init_params(pkey)
    x = jax.random.normal(xkey, (2, CHANNELS, IMG, IMG), dtype=jnp.float32)

    fwd = jax.jit(vision_mamba_forward)
    logits, hidden = fwd(params, x)
    jax.block_until_ready((logits, hidden))

    assert logits.shape == (2, NUM_CLASSES), logits.shape
    assert hidden.shape == (2, SEQ, EMBED), hidden.shape
    assert bool(jnp.all(jnp.isfinite(logits))) and bool(jnp.all(jnp.isfinite(hidden)))
    print("KERNEL_OK")
</pallas_src>

<mosaic_0001>
module attributes {stable_mosaic.version = 11 : i64} {
  func.func @kernel(%arg0: i32, %arg1: memref<6x256xf32, #tpu.memory_space<vmem>>, %arg2: memref<6x256xf32, #tpu.memory_space<vmem>>) attributes {dimension_semantics = [#tpu.dimension_semantics<arbitrary>], iteration_bounds = array<i64: 1>, scalar_prefetch = 0 : i64, scratch_operands = 0 : i64, tpu.core_type = #tpu.core_type<tc>, window_params = [{pipeline_mode = #tpu.pipeline_mode<synchronous>, transform_indices = @transform_0, window_bounds = array<i64: 6, 256>}, {pipeline_mode = #tpu.pipeline_mode<synchronous>, transform_indices = @transform_1, window_bounds = array<i64: 6, 256>}]} {
    %c0 = arith.constant 0 : index
    %c0_0 = arith.constant 0 : index
    %0 = vector.load %arg1[%c0, %c0_0] : memref<6x256xf32, #tpu.memory_space<vmem>>, vector<6x256xf32>
    %cst = arith.constant dense<0.000000e+00> : vector<6xf32>
    %1 = vector.multi_reduction <add>, %0, %cst [1] : vector<6x256xf32> to vector<6xf32>
    %2 = vector.shape_cast %1 : vector<6xf32> to vector<6x1xf32>
    %cst_1 = arith.constant 2.560000e+02 : f32
    %3 = vector.broadcast %cst_1 : f32 to vector<6x1xf32>
    %4 = arith.divf %2, %3 : vector<6x1xf32>
    %5 = vector.broadcast %4 : vector<6x1xf32> to vector<6x256xf32>
    %6 = arith.subf %0, %5 : vector<6x256xf32>
    %7 = arith.mulf %6, %6 : vector<6x256xf32>
    %cst_2 = arith.constant dense<0.000000e+00> : vector<6xf32>
    %8 = vector.multi_reduction <add>, %7, %cst_2 [1] : vector<6x256xf32> to vector<6xf32>
    %9 = vector.shape_cast %8 : vector<6xf32> to vector<6x1xf32>
    %cst_3 = arith.constant 2.550000e+02 : f32
    %10 = vector.broadcast %cst_3 : f32 to vector<6x1xf32>
    %11 = arith.divf %9, %10 : vector<6x1xf32>
    %cst_4 = arith.constant 1.000000e-03 : f32
    %12 = vector.broadcast %cst_4 : f32 to vector<6x1xf32>
    %13 = arith.addf %11, %12 : vector<6x1xf32>
    %cst_5 = arith.constant 4.000000e+00 : f32
    %14 = vector.broadcast %cst_5 : f32 to vector<6x1xf32>
    %15 = arith.mulf %14, %13 : vector<6x1xf32>
    %16 = vector.broadcast %15 : vector<6x1xf32> to vector<6x256xf32>
    %17 = arith.divf %7, %16 : vector<6x256xf32>
    %cst_6 = arith.constant 5.000000e-01 : f32
    %18 = vector.broadcast %cst_6 : f32 to vector<6x256xf32>
    %19 = arith.addf %17, %18 : vector<6x256xf32>
    %20 = arith.negf %19 : vector<6x256xf32>
    %21 = math.exp %20 : vector<6x256xf32>
    %cst_7 = arith.constant 1.000000e+00 : f32
    %22 = vector.broadcast %cst_7 : f32 to vector<6x256xf32>
    %23 = arith.addf %22, %21 : vector<6x256xf32>
    %24 = arith.divf %22, %23 : vector<6x256xf32>
    %25 = arith.mulf %0, %24 : vector<6x256xf32>
    %c0_8 = arith.constant 0 : index
    %c0_9 = arith.constant 0 : index
    %26 = vector.load %arg2[%c0_8, %c0_9] : memref<6x256xf32, #tpu.memory_space<vmem>>, vector<6x256xf32>
    tpu.vector_store %arg2[%c0_8, %c0_9], %25 {strides = array<i32>} : memref<6x256xf32, #tpu.memory_space<vmem>>, vector<6x256xf32>,
    return
  }
  func.func @transform_0(%arg0: i32) -> (i32, i32) {
    %c0_i32 = arith.constant 0 : i32
    %c0_i32_0 = arith.constant 0 : i32
    %c0_i32_1 = arith.constant 0 : i32
    return %c0_i32, %c0_i32_0 : i32, i32
  }
  func.func @transform_1(%arg0: i32) -> (i32, i32) {
    %c0_i32 = arith.constant 0 : i32
    %c0_i32_0 = arith.constant 0 : i32
    %c0_i32_1 = arith.constant 0 : i32
    return %c0_i32, %c0_i32_0 : i32, i32
  }
}

module attributes {stable_mosaic.version = 11 : i64} {
  func.func @_vim_kernel(%arg0: i32, %arg1: memref<8x192xf32, #tpu.memory_space<vmem>>, %arg2: memref<10x1xf32, #tpu.memory_space<vmem>>, %arg3: memref<80x10xf32, #tpu.memory_space<vmem>>, %arg4: memref<80x8xf32, #tpu.memory_space<vmem>>, %arg5: memref<10x80xf32, #tpu.memory_space<vmem>>, %arg6: memref<192x32xbf16, #tpu.memory_space<vmem>>, %arg7: memref<1x32xf32, #tpu.memory_space<vmem>>, %arg8: memref<1x32xf32, #tpu.memory_space<vmem>>, %arg9: memref<2x32x64xbf16, #tpu.memory_space<vmem>>, %arg10: memref<2x1x64xf32, #tpu.memory_space<vmem>>, %arg11: memref<2x64x32xbf16, #tpu.memory_space<vmem>>, %arg12: memref<2x1x32xf32, #tpu.memory_space<vmem>>, %arg13: memref<2x32x32xbf16, #tpu.memory_space<vmem>>, %arg14: memref<2x1x32xf32, #tpu.memory_space<vmem>>, %arg15: memref<24x32xf32, #tpu.memory_space<vmem>>, %arg16: memref<2x32xf32, #tpu.memory_space<vmem>>, %arg17: memref<2x1x32xf32, #tpu.memory_space<vmem>>, %arg18: memref<2x1x32xf32, #tpu.memory_space<vmem>>, %arg19: memref<2x32x128xbf16, #tpu.memory_space<vmem>>, %arg20: memref<2x4x64xf32, #tpu.memory_space<vmem>>, %arg21: memref<2x1x64xf32, #tpu.memory_space<vmem>>, %arg22: memref<2x64x64xbf16, #tpu.memory_space<vmem>>, %arg23: memref<2x64x16xbf16, #tpu.memory_space<vmem>>, %arg24: memref<2x1x64xf32, #tpu.memory_space<vmem>>, %arg25: memref<2x80x64xf32, #tpu.memory_space<vmem>>, %arg26: memref<2x1x64xf32, #tpu.memory_space<vmem>>, %arg27: memref<2x64x32xbf16, #tpu.memory_space<vmem>>, %arg28: memref<1x32xf32, #tpu.memory_space<vmem>>, %arg29: memref<1x32xf32, #tpu.memory_space<vmem>>, %arg30: memref<32x10xbf16, #tpu.memory_space<vmem>>, %arg31: memref<1x10xf32, #tpu.memory_space<vmem>>, %arg32: memref<2x10xf32, #tpu.memory_space<vmem>>, %arg33: memref<10x32xf32, #tpu.memory_space<vmem>>, %arg34: memref<80x64xf32, #tpu.memory_space<vmem>>) attributes {dimension_semantics = [#tpu.dimension_semantics<arbitrary>], iteration_bounds = array<i64: 1>, scalar_prefetch = 0 : i64, scratch_operands = 1 : i64, tpu.core_type = #tpu.core_type<tc>, window_params = [{pipeline_mode = #tpu.pipeline_mode<synchronous>, transform_indices = @transform_0, window_bounds = array<i64: 8, 192>}, {pipeline_mode = #tpu.pipeline_mode<synchronous>, transform_indices = @transform_1, window_bounds = array<i64: 10, 1>}, {pipeline_mode = #tpu.pipeline_mode<synchronous>, transform_indices = @transform_2, window_bounds = array<i64: 80, 10>}, {pipeline_mode = #tpu.pipeline_mode<synchronous>, transform_indices = @transform_3, window_bounds = array<i64: 80, 8>}, {pipeline_mode = #tpu.pipeline_mode<synchronous>, transform_indices = @transform_4, window_bounds = array<i64: 10, 80>}, {pipeline_mode = #tpu.pipeline_mode<synchronous>, transform_indices = @transform_5, window_bounds = array<i64: 192, 32>}, {pipeline_mode = #tpu.pipeline_mode<synchronous>, transform_indices = @transform_6, window_bounds = array<i64: 1, 32>}, {pipeline_mode = #tpu.pipeline_mode<synchronous>, transform_indices = @transform_7, window_bounds = array<i64: 1, 32>}, {pipeline_mode = #tpu.pipeline_mode<synchronous>, transform_indices = @transform_8, window_bounds = array<i64: 2, 32, 64>}, {pipeline_mode = #tpu.pipeline_mode<synchronous>, transform_indices = @transform_9, window_bounds = array<i64: 2, 1, 64>}, {pipeline_mode = #tpu.pipeline_mode<synchronous>, transform_indices = @transform_10, window_bounds = array<i64: 2, 64, 32>}, {pipeline_mode = #tpu.pipeline_mode<synchronous>, transform_indices = @transform_11, window_bounds = array<i64: 2, 1, 32>}, {pipeline_mode = #tpu.pipeline_mode<synchronous>, transform_indices = @transform_12, window_bounds = array<i64: 2, 32, 32>}, {pipeline_mode = #tpu.pipeline_mode<synchronous>, transform_indices = @transform_13, window_bounds = array<i64: 2, 1, 32>}, {pipeline_mode = #tpu.pipeline_mode<synchronous>, transform_indices = @transform_14, window_bounds = array<i64: 24, 32>}, {pipeline_mode = #tpu.pipeline_mode<synchronous>, transform_indices = @transform_15, window_bounds = array<i64: 2, 32>}, {pipeline_mode = #tpu.pipeline_mode<synchronous>, transform_indices = @transform_16, window_bounds = array<i64: 2, 1, 32>}, {pipeline_mode = #tpu.pipeline_mode<synchronous>, transform_indices = @transform_17, window_bounds = array<i64: 2, 1, 32>}, {pipeline_mode = #tpu.pipeline_mode<synchronous>, transform_indices = @transform_18, window_bounds = array<i64: 2, 32, 128>}, {pipeline_mode = #tpu.pipeline_mode<synchronous>, transform_indices = @transform_19, window_bounds = array<i64: 2, 4, 64>}, {pipeline_mode = #tpu.pipeline_mode<synchronous>, transform_indices = @transform_20, window_bounds = array<i64: 2, 1, 64>}, {pipeline_mode = #tpu.pipeline_mode<synchronous>, transform_indices = @transform_21, window_bounds = array<i64: 2, 64, 64>}, {pipeline_mode = #tpu.pipeline_mode<synchronous>, transform_indices = @transform_22, window_bounds = array<i64: 2, 64, 16>}, {pipeline_mode = #tpu.pipeline_mode<synchronous>, transform_indices = @transform_23, window_bounds = array<i64: 2, 1, 64>}, {pipeline_mode = #tpu.pipeline_mode<synchronous>, transform_indices = @transform_24, window_bounds = array<i64: 2, 80, 64>}, {pipeline_mode = #tpu.pipeline_mode<synchronous>, transform_indices = @transform_25, window_bounds = array<i64: 2, 1, 64>}, {pipeline_mode = #tpu.pipeline_mode<synchronous>, transform_indices = @transform_26, window_bounds = array<i64: 2, 64, 32>}, {pipeline_mode = #tpu.pipeline_mode<synchronous>, transform_indices = @transform_27, window_bounds = array<i64: 1, 32>}, {pipeline_mode = #tpu.pipeline_mode<synchronous>, transform_indices = @transform_28, window_bounds = array<i64: 1, 32>}, {pipeline_mode = #tpu.pipeline_mode<synchronous>, transform_indices = @transform_29, window_bounds = array<i64: 32, 10>}, {pipeline_mode = #tpu.pipeline_mode<synchronous>, transform_indices = @transform_30, window_bounds = array<i64: 1, 10>}, {pipeline_mode = #tpu.pipeline_mode<synchronous>, transform_indices = @transform_31, window_bounds = array<i64: 2, 10>}, {pipeline_mode = #tpu.pipeline_mode<synchronous>, transform_indices = @transform_32, window_bounds = array<i64: 10, 32>}]} {
    %c0 = arith.constant 0 : index
    %c0_0 = arith.constant 0 : index
    %0 = vector.load %arg1[%c0, %c0_0] : memref<8x192xf32, #tpu.memory_space<vmem>>, vector<8x192xf32>
    %c0_1 = arith.constant 0 : index
    %c0_2 = arith.constant 0 : index
    %1 = vector.load %arg6[%c0_1, %c0_2] : memref<192x32xbf16, #tpu.memory_space<vmem>>, vector<192x32xbf16>
    %2 = arith.truncf %0 : vector<8x192xf32> to vector<8x192xbf16>
    %cst = arith.constant dense<0.000000e+00> : vector<8x32xf32>
    %3 = tpu.matmul %2, %1, %cst {dimension_numbers = #tpu.dot_dimension_numbers<[1], [0], [0], [1], [0, 0, 1, 1], [], []>} : vector<8x192xbf16>, vector<192x32xbf16>, vector<8x32xf32> -> vector<8x32xf32>
    %c0_3 = arith.constant 0 : index
    %c0_4 = arith.constant 0 : index
    %4 = vector.load %arg7[%c0_3, %c0_4] : memref<1x32xf32, #tpu.memory_space<vmem>>, vector<1x32xf32>
    %5 = vector.broadcast %4 : vector<1x32xf32> to vector<8x32xf32>
    %6 = arith.addf %3, %5 : vector<8x32xf32>
    %c0_5 = arith.constant 0 : index
    %c0_6 = arith.constant 0 : index
    %7 = vector.load %arg8[%c0_5, %c0_6] : memref<1x32xf32, #tpu.memory_space<vmem>>, vector<1x32xf32>
    %8 = vector.extract_strided_slice %6 {offsets = [0, 0], sizes = [4, 32], strides = [1, 1]} : vector<8x32xf32> to vector<4x32xf32>
    %9 = vector.extract_strided_slice %8 {offsets = [0, 0], sizes = [2, 32], strides = [1, 1]} : vector<4x32xf32> to vector<2x32xf32>
    %10 = vector.extract_strided_slice %8 {offsets = [2, 0], sizes = [2, 32], strides = [1, 1]} : vector<4x32xf32> to vector<2x32xf32>
    %11 = vector.extract_strided_slice %6 {offsets = [4, 0], sizes = [4, 32], strides = [1, 1]} : vector<8x32xf32> to vector<4x32xf32>
    %12 = vector.extract_strided_slice %11 {offsets = [0, 0], sizes = [2, 32], strides = [1, 1]} : vector<4x32xf32> to vector<2x32xf32>
    %13 = vector.extract_strided_slice %11 {offsets = [2, 0], sizes = [2, 32], strides = [1, 1]} : vector<4x32xf32> to vector<2x32xf32>
    %14 = tpu.concatenate %9, %7, %10, %12, %7, %13 in 0 : vector<2x32xf32>, vector<1x32xf32>, vector<2x32xf32>, vector<2x32xf32>, vector<1x32xf32>, vector<2x32xf32> -> vector<10x32xf32>
    %c0_7 = arith.constant 0 : index
    %c0_8 = arith.constant 0 : index
    %15 = vector.load %arg2[%c0_7, %c0_8] : memref<10x1xf32, #tpu.memory_space<vmem>>, vector<10x1xf32>
    %cst_9 = arith.constant 2.000000e+00 : f32
    %16 = vector.broadcast %cst_9 : f32 to vector<10x1xf32>
    %17 = arith.cmpf olt, %15, %16 : vector<10x1xf32>
    %18 = arith.extui %17 : vector<10x1xi1> to vector<10x1xi32>
    %19 = arith.sitofp %18 : vector<10x1xi32> to vector<10x1xf32>
    %cst_10 = arith.constant 2.000000e+00 : f32
    %20 = vector.broadcast %cst_10 : f32 to vector<10x1xf32>
    %21 = arith.cmpf ogt, %15, %20 : vector<10x1xf32>
    %22 = arith.extui %21 : vector<10x1xi1> to vector<10x1xi32>
    %23 = arith.sitofp %22 : vector<10x1xi32> to vector<10x1xf32>
    %c0_11 = arith.constant 0 : index
    %c0_12 = arith.constant 0 : index
    %24 = vector.load %arg3[%c0_11, %c0_12] : memref<80x10xf32, #tpu.memory_space<vmem>>, vector<80x10xf32>
    %c0_13 = arith.constant 0 : index
    %c0_14 = arith.constant 0 : index
    %25 = vector.load %arg4[%c0_13, %c0_14] : memref<80x8xf32, #tpu.memory_space<vmem>>, vector<80x8xf32>
    %c0_15 = arith.constant 0 : index
    %c0_16 = arith.constant 0 : index
    %26 = vector.load %arg5[%c0_15, %c0_16] : memref<10x80xf32, #tpu.memory_space<vmem>>, vector<10x80xf32>
    %c0_17 = arith.constant 0 : index
    %c0_18 = arith.constant 0 : index
    %27 = vector.load %arg15[%c0_17, %c0_18] : memref<24x32xf32, #tpu.memory_space<vmem>>, vector<1x32xf32>
    %c0_19 = arith.constant 0 : index
    %c0_20 = arith.constant 0 : index
    %28 = vector.load %arg16[%c0_19, %c0_20] : memref<2x32xf32, #tpu.memory_space<vmem>>, vector<1x32xf32>
    %c0_21 = arith.constant 0 : index
    %c0_22 = arith.constant 0 : index
    %c0_23 = arith.constant 0 : index
    %29 = vector.load %arg9[%c0_21, %c0_22, %c0_23] : memref<2x32x64xbf16, #tpu.memory_space<vmem>>, vector<1x32x64xbf16>
    %30 = vector.shape_cast %29 : vector<1x32x64xbf16> to vector<32x64xbf16>
    %c0_24 = arith.constant 0 : index
    %c0_25 = arith.constant 0 : index
    %c0_26 = arith.constant 0 : index
    %31 = vector.load %arg10[%c0_24, %c0_25, %c0_26] : memref<2x1x64xf32, #tpu.memory_space<vmem>>, vector<1x1x64xf32>
    %32 = vector.shape_cast %31 : vector<1x1x64xf32> to vector<1x64xf32>
    %c0_27 = arith.constant 0 : index
    %c0_28 = arith.constant 0 : index
    %c0_29 = arith.constant 0 : index
    %33 = vector.load %arg11[%c0_27, %c0_28, %c0_29] : memref<2x64x32xbf16, #tpu.memory_space<vmem>>, vector<1x64x32xbf16>
    %34 = vector.shape_cast %33 : vector<1x64x32xbf16> to vector<64x32xbf16>
    %c0_30 = arith.constant 0 : index
    %c0_31 = arith.constant 0 : index
    %c0_32 = arith.constant 0 : index
    %35 = vector.load %arg12[%c0_30, %c0_31, %c0_32] : memref<2x1x32xf32, #tpu.memory_space<vmem>>, vector<1x1x32xf32>
    %36 = vector.shape_cast %35 : vector<1x1x32xf32> to vector<1x32xf32>
    %c0_33 = arith.constant 0 : index
    %c0_34 = arith.constant 0 : index
    %c0_35 = arith.constant 0 : index
    %37 = vector.load %arg13[%c0_33, %c0_34, %c0_35] : memref<2x32x32xbf16, #tpu.memory_space<vmem>>, vector<1x32x32xbf16>
    %38 = vector.shape_cast %37 : vector<1x32x32xbf16> to vector<32x32xbf16>
    %c0_36 = arith.constant 0 : index
    %c0_37 = arith.constant 0 : index
    %c0_38 = arith.constant 0 : index
    %39 = vector.load %arg14[%c0_36, %c0_37, %c0_38] : memref<2x1x32xf32, #tpu.memory_space<vmem>>, vector<1x1x32xf32>
    %40 = vector.shape_cast %39 : vector<1x1x32xf32> to vector<1x32xf32>
    %41 = arith.truncf %14 : vector<10x32xf32> to vector<10x32xbf16>
    %cst_39 = arith.constant dense<0.000000e+00> : vector<10x64xf32>
    %42 = tpu.matmul %41, %30, %cst_39 {dimension_numbers = #tpu.dot_dimension_numbers<[1], [0], [0], [1], [0, 0, 1, 1], [], []>} : vector<10x32xbf16>, vector<32x64xbf16>, vector<10x64xf32> -> vector<10x64xf32>
    %43 = vector.broadcast %32 : vector<1x64xf32> to vector<10x64xf32>
    %44 = arith.addf %42, %43 : vector<10x64xf32>
    %45 = arith.truncf %44 : vector<10x64xf32> to vector<10x64xbf16>
    %cst_40 = arith.constant dense<0.000000e+00> : vector<10x32xf32>
    %46 = tpu.matmul %45, %34, %cst_40 {dimension_numbers = #tpu.dot_dimension_numbers<[1], [0], [0], [1], [0, 0, 1, 1], [], []>} : vector<10x64xbf16>, vector<64x32xbf16>, vector<10x32xf32> -> vector<10x32xf32>
    %47 = vector.broadcast %36 : vector<1x32xf32> to vector<10x32xf32>
    %48 = arith.addf %46, %47 : vector<10x32xf32>
    %49 = arith.negf %48 : vector<10x32xf32>
    %50 = math.exp %49 : vector<10x32xf32>
    %cst_41 = arith.constant 1.000000e+00 : f32
    %51 = vector.broadcast %cst_41 : f32 to vector<10x32xf32>
    %52 = arith.addf %51, %50 : vector<10x32xf32>
    %53 = arith.divf %51, %52 : vector<10x32xf32>
    %54 = arith.mulf %48, %53 : vector<10x32xf32>
    %55 = arith.truncf %14 : vector<10x32xf32> to vector<10x32xbf16>
    %cst_42 = arith.constant dense<0.000000e+00> : vector<10x32xf32>
    %56 = tpu.matmul %55, %38, %cst_42 {dimension_numbers = #tpu.dot_dimension_numbers<[1], [0], [0], [1], [0, 0, 1, 1], [], []>} : vector<10x32xbf16>, vector<32x32xbf16>, vector<10x32xf32> -> vector<10x32xf32>
    %57 = vector.broadcast %40 : vector<1x32xf32> to vector<10x32xf32>
    %58 = arith.addf %56, %57 : vector<10x32xf32>
    %59 = arith.negf %58 : vector<10x32xf32>
    %60 = math.exp %59 : vector<10x32xf32>
    %cst_43 = arith.constant 1.000000e+00 : f32
    %61 = vector.broadcast %cst_43 : f32 to vector<10x32xf32>
    %62 = arith.addf %61, %60 : vector<10x32xf32>
    %63 = arith.divf %61, %62 : vector<10x32xf32>
    %64 = arith.mulf %58, %63 : vector<10x32xf32>
    %65 = vector.broadcast %27 : vector<1x32xf32> to vector<10x32xf32>
    %66 = arith.mulf %54, %65 : vector<10x32xf32>
    %67 = vector.broadcast %28 : vector<1x32xf32> to vector<10x32xf32>
    %68 = arith.mulf %64, %67 : vector<10x32xf32>
    %69 = arith.addf %66, %68 : vector<10x32xf32>
    %70 = vector.broadcast %19 : vector<10x1xf32> to vector<10x32xf32>
    %71 = arith.mulf %70, %69 : vector<10x32xf32>
    %72 = arith.addf %14, %71 : vector<10x32xf32>
    %73 = arith.truncf %72 : vector<10x32xf32> to vector<10x32xbf16>
    %cst_44 = arith.constant dense<0.000000e+00> : vector<10x32xf32>
    %74 = tpu.matmul %73, %38, %cst_44 {dimension_numbers = #tpu.dot_dimension_numbers<[1], [0], [0], [1], [0, 0, 1, 1], [], []>} : vector<10x32xbf16>, vector<32x32xbf16>, vector<10x32xf32> -> vector<10x32xf32>
    %75 = vector.broadcast %40 : vector<1x32xf32> to vector<10x32xf32>
    %76 = arith.addf %74, %75 : vector<10x32xf32>
    %77 = arith.negf %76 : vector<10x32xf32>
    %78 = math.exp %77 : vector<10x32xf32>
    %cst_45 = arith.constant 1.000000e+00 : f32
    %79 = vector.broadcast %cst_45 : f32 to vector<10x32xf32>
    %80 = arith.addf %79, %78 : vector<10x32xf32>
    %81 = arith.divf %79, %80 : vector<10x32xf32>
    %82 = arith.mulf %76, %81 : vector<10x32xf32>
    %cst_46 = arith.constant 0.000000e+00 : f32
    %83 = vector.broadcast %cst_46 : f32 to vector<3x32xf32>
    %84 = vector.extract_strided_slice %82 {offsets = [0, 0], sizes = [7, 32], strides = [1, 1]} : vector<10x32xf32> to vector<7x32xf32>
    %85 = tpu.concatenate %83, %84 in 0 : vector<3x32xf32>, vector<7x32xf32> -> vector<10x32xf32>
    %86 = vector.broadcast %27 : vector<1x32xf32> to vector<10x32xf32>
    %87 = arith.mulf %54, %86 : vector<10x32xf32>
    %88 = vector.broadcast %28 : vector<1x32xf32> to vector<10x32xf32>
    %89 = arith.mulf %85, %88 : vector<10x32xf32>
    %90 = arith.addf %87, %89 : vector<10x32xf32>
    %91 = vector.broadcast %23 : vector<10x1xf32> to vector<10x32xf32>
    %92 = arith.mulf %91, %90 : vector<10x32xf32>
    %93 = arith.addf %72, %92 : vector<10x32xf32>
    %cst_47 = arith.constant dense<0.000000e+00> : vector<10xf32>
    %94 = vector.multi_reduction <add>, %93, %cst_47 [1] : vector<10x32xf32> to vector<10xf32>
    %95 = vector.shape_cast %94 : vector<10xf32> to vector<10x1xf32>
    %cst_48 = arith.constant 3.200000e+01 : f32
    %96 = vector.broadcast %cst_48 : f32 to vector<10x1xf32>
    %97 = arith.divf %95, %96 : vector<10x1xf32>
    %98 = vector.broadcast %97 : vector<10x1xf32> to vector<10x32xf32>
    %99 = arith.subf %93, %98 : vector<10x32xf32>
    %100 = arith.mulf %99, %99 : vector<10x32xf32>
    %cst_49 = arith.constant dense<0.000000e+00> : vector<10xf32>
    %101 = vector.multi_reduction <add>, %100, %cst_49 [1] : vector<10x32xf32> to vector<10xf32>
    %102 = vector.shape_cast %101 : vector<10xf32> to vector<10x1xf32>
    %cst_50 = arith.constant 3.200000e+01 : f32
    %103 = vector.broadcast %cst_50 : f32 to vector<10x1xf32>
    %104 = arith.divf %102, %103 : vector<10x1xf32>
    %105 = vector.broadcast %97 : vector<10x1xf32> to vector<10x32xf32>
    %106 = arith.subf %93, %105 : vector<10x32xf32>
    %cst_51 = arith.constant 9.99999974E-6 : f32
    %107 = vector.broadcast %cst_51 : f32 to vector<10x1xf32>
    %108 = arith.addf %104, %107 : vector<10x1xf32>
    %109 = math.rsqrt %108 : vector<10x1xf32>
    %110 = vector.broadcast %109 : vector<10x1xf32> to vector<10x32xf32>
    %111 = arith.mulf %106, %110 : vector<10x32xf32>
    %c0_52 = arith.constant 0 : index
    %c0_53 = arith.constant 0 : index
    %c0_54 = arith.constant 0 : index
    %112 = vector.load %arg17[%c0_52, %c0_53, %c0_54] : memref<2x1x32xf32, #tpu.memory_space<vmem>>, vector<1x1x32xf32>
    %113 = vector.shape_cast %112 : vector<1x1x32xf32> to vector<1x32xf32>
    %114 = vector.broadcast %113 : vector<1x32xf32> to vector<10x32xf32>
    %115 = arith.mulf %111, %114 : vector<10x32xf32>
    %c0_55 = arith.constant 0 : index
    %c0_56 = arith.constant 0 : index
    %c0_57 = arith.constant 0 : index
    %116 = vector.load %arg18[%c0_55, %c0_56, %c0_57] : memref<2x1x32xf32, #tpu.memory_space<vmem>>, vector<1x1x32xf32>
    %117 = vector.shape_cast %116 : vector<1x1x32xf32> to vector<1x32xf32>
    %118 = vector.broadcast %117 : vector<1x32xf32> to vector<10x32xf32>
    %119 = arith.addf %115, %118 : vector<10x32xf32>
    %c0_58 = arith.constant 0 : index
    %c0_59 = arith.constant 0 : index
    %c0_60 = arith.constant 0 : index
    %120 = vector.load %arg19[%c0_58, %c0_59, %c0_60] : memref<2x32x128xbf16, #tpu.memory_space<vmem>>, vector<1x32x128xbf16>
    %121 = vector.shape_cast %120 : vector<1x32x128xbf16> to vector<32x128xbf16>
    %122 = arith.truncf %119 : vector<10x32xf32> to vector<10x32xbf16>
    %cst_61 = arith.constant dense<0.000000e+00> : vector<10x128xf32>
    %123 = tpu.matmul %122, %121, %cst_61 {dimension_numbers = #tpu.dot_dimension_numbers<[1], [0], [0], [1], [0, 0, 1, 1], [], []>} : vector<10x32xbf16>, vector<32x128xbf16>, vector<10x128xf32> -> vector<10x128xf32>
    %124 = vector.extract_strided_slice %123 {offsets = [0, 0], sizes = [10, 64], strides = [1, 1]} : vector<10x128xf32> to vector<10x64xf32>
    %125 = vector.extract_strided_slice %123 {offsets = [0, 64], sizes = [10, 64], strides = [1, 1]} : vector<10x128xf32> to vector<10x64xf32>
    %c0_62 = arith.constant 0 : index
    %c0_63 = arith.constant 0 : index
    %c0_64 = arith.constant 0 : index
    %126 = vector.load %arg20[%c0_62, %c0_63, %c0_64] : memref<2x4x64xf32, #tpu.memory_space<vmem>>, vector<1x4x64xf32>
    %127 = vector.shape_cast %126 : vector<1x4x64xf32> to vector<4x64xf32>
    %c0_65 = arith.constant 0 : index
    %c0_66 = arith.constant 0 : index
    %c0_67 = arith.constant 0 : index
    %128 = vector.load %arg21[%c0_65, %c0_66, %c0_67] : memref<2x1x64xf32, #tpu.memory_space<vmem>>, vector<1x1x64xf32>
    %129 = vector.shape_cast %128 : vector<1x1x64xf32> to vector<1x64xf32>
    %cst_68 = arith.constant 0.000000e+00 : f32
    %130 = vector.broadcast %cst_68 : f32 to vector<3x64xf32>
    %131 = tpu.concatenate %130, %124 in 0 : vector<3x64xf32>, vector<10x64xf32> -> vector<13x64xf32>
    %132 = vector.extract_strided_slice %131 {offsets = [0, 0], sizes = [10, 64], strides = [1, 1]} : vector<13x64xf32> to vector<10x64xf32>
    %133 = vector.extract_strided_slice %127 {offsets = [0, 0], sizes = [1, 64], strides = [1, 1]} : vector<4x64xf32> to vector<1x64xf32>
    %134 = vector.broadcast %133 : vector<1x64xf32> to vector<10x64xf32>
    %135 = arith.mulf %132, %134 : vector<10x64xf32>
    %cst_69 = arith.constant 3.000000e+00 : f32
    %136 = vector.broadcast %cst_69 : f32 to vector<10x1xf32>
    %137 = arith.cmpf oge, %15, %136 : vector<10x1xf32>
    %cst_70 = arith.constant 0.000000e+00 : f32
    %138 = vector.shape_cast %137 : vector<10x1xi1> to vector<10x1xi1>
    %139 = vector.broadcast %138 : vector<10x1xi1> to vector<10x64xi1>
    %140 = vector.broadcast %cst_70 : f32 to vector<10x64xf32>
    %141 = arith.select %139, %135, %140 : vector<10x64xi1>, vector<10x64xf32>
    %142 = vector.broadcast %129 : vector<1x64xf32> to vector<10x64xf32>
    %143 = arith.addf %142, %141 : vector<10x64xf32>
    %144 = vector.extract_strided_slice %131 {offsets = [1, 0], sizes = [10, 64], strides = [1, 1]} : vector<13x64xf32> to vector<10x64xf32>
    %145 = vector.extract_strided_slice %127 {offsets = [1, 0], sizes = [1, 64], strides = [1, 1]} : vector<4x64xf32> to vector<1x64xf32>
    %146 = vector.broadcast %145 : vector<1x64xf32> to vector<10x64xf32>
    %147 = arith.mulf %144, %146 : vector<10x64xf32>
    %cst_71 = arith.constant 2.000000e+00 : f32
    %148 = vector.broadcast %cst_71 : f32 to vector<10x1xf32>
    %149 = arith.cmpf oge, %15, %148 : vector<10x1xf32>
    %cst_72 = arith.constant 0.000000e+00 : f32
    %150 = vector.shape_cast %149 : vector<10x1xi1> to vector<10x1xi1>
    %151 = vector.broadcast %150 : vector<10x1xi1> to vector<10x64xi1>
    %152 = vector.broadcast %cst_72 : f32 to vector<10x64xf32>
    %153 = arith.select %151, %147, %152 : vector<10x64xi1>, vector<10x64xf32>
    %154 = arith.addf %143, %153 : vector<10x64xf32>
    %155 = vector.extract_strided_slice %131 {offsets = [2, 0], sizes = [10, 64], strides = [1, 1]} : vector<13x64xf32> to vector<10x64xf32>
    %156 = vector.extract_strided_slice %127 {offsets = [2, 0], sizes = [1, 64], strides = [1, 1]} : vector<4x64xf32> to vector<1x64xf32>
    %157 = vector.broadcast %156 : vector<1x64xf32> to vector<10x64xf32>
    %158 = arith.mulf %155, %157 : vector<10x64xf32>
    %cst_73 = arith.constant 1.000000e+00 : f32
    %159 = vector.broadcast %cst_73 : f32 to vector<10x1xf32>
    %160 = arith.cmpf oge, %15, %159 : vector<10x1xf32>
    %cst_74 = arith.constant 0.000000e+00 : f32
    %161 = vector.shape_cast %160 : vector<10x1xi1> to vector<10x1xi1>
    %162 = vector.broadcast %161 : vector<10x1xi1> to vector<10x64xi1>
    %163 = vector.broadcast %cst_74 : f32 to vector<10x64xf32>
    %164 = arith.select %162, %158, %163 : vector<10x64xi1>, vector<10x64xf32>
    %165 = arith.addf %154, %164 : vector<10x64xf32>
    %166 = vector.extract_strided_slice %131 {offsets = [3, 0], sizes = [10, 64], strides = [1, 1]} : vector<13x64xf32> to vector<10x64xf32>
    %167 = vector.extract_strided_slice %127 {offsets = [3, 0], sizes = [1, 64], strides = [1, 1]} : vector<4x64xf32> to vector<1x64xf32>
    %168 = vector.broadcast %167 : vector<1x64xf32> to vector<10x64xf32>
    %169 = arith.mulf %166, %168 : vector<10x64xf32>
    %170 = arith.addf %165, %169 : vector<10x64xf32>
    %171 = arith.negf %170 : vector<10x64xf32>
    %172 = math.exp %171 : vector<10x64xf32>
    %cst_75 = arith.constant 1.000000e+00 : f32
    %173 = vector.broadcast %cst_75 : f32 to vector<10x64xf32>
    %174 = arith.addf %173, %172 : vector<10x64xf32>
    %175 = arith.divf %173, %174 : vector<10x64xf32>
    %176 = arith.mulf %170, %175 : vector<10x64xf32>
    %c0_76 = arith.constant 0 : index
    %c0_77 = arith.constant 0 : index
    %c0_78 = arith.constant 0 : index
    %177 = vector.load %arg22[%c0_76, %c0_77, %c0_78] : memref<2x64x64xbf16, #tpu.memory_space<vmem>>, vector<1x64x64xbf16>
    %178 = vector.shape_cast %177 : vector<1x64x64xbf16> to vector<64x64xbf16>
    %179 = arith.truncf %176 : vector<10x64xf32> to vector<10x64xbf16>
    %cst_79 = arith.constant dense<0.000000e+00> : vector<10x64xf32>
    %180 = tpu.matmul %179, %178, %cst_79 {dimension_numbers = #tpu.dot_dimension_numbers<[1], [0], [0], [1], [0, 0, 1, 1], [], []>} : vector<10x64xbf16>, vector<64x64xbf16>, vector<10x64xf32> -> vector<10x64xf32>
    %c0_80 = arith.constant 0 : index
    %c0_81 = arith.constant 0 : index
    %c0_82 = arith.constant 0 : index
    %181 = vector.load %arg24[%c0_80, %c0_81, %c0_82] : memref<2x1x64xf32, #tpu.memory_space<vmem>>, vector<1x1x64xf32>
    %182 = vector.shape_cast %181 : vector<1x1x64xf32> to vector<1x64xf32>
    %183 = vector.broadcast %182 : vector<1x64xf32> to vector<10x64xf32>
    %184 = arith.addf %180, %183 : vector<10x64xf32>
    %cst_83 = arith.constant 0.000000e+00 : f32
    %185 = vector.broadcast %cst_83 : f32 to vector<10x64xf32>
    %186 = arith.maximumf %184, %185 : vector<10x64xf32>
    %187 = vector.broadcast %cst_83 : f32 to vector<10x64xf32>
    %188 = arith.subf %184, %187 : vector<10x64xf32>
    %189 = arith.cmpf one, %188, %188 : vector<10x64xf32>
    %190 = vector.broadcast %cst_83 : f32 to vector<10x64xf32>
    %191 = arith.addf %184, %190 : vector<10x64xf32>
    %192 = math.absf %188 : vector<10x64xf32>
    %cst_84 = arith.constant 0.000000e+00 : f32
    %193 = vector.broadcast %cst_84 : f32 to vector<10x64xf32>
    %194 = arith.subf %193, %192 : vector<10x64xf32>
    %195 = math.exp %194 : vector<10x64xf32>
    %196 = math.log1p %195 : vector<10x64xf32>
    %197 = arith.addf %186, %196 : vector<10x64xf32>
    %198 = arith.select %189, %191, %197 : vector<10x64xi1>, vector<10x64xf32>
    %c0_85 = arith.constant 0 : index
    %c0_86 = arith.constant 0 : index
    %c0_87 = arith.constant 0 : index
    %199 = vector.load %arg23[%c0_85, %c0_86, %c0_87] : memref<2x64x16xbf16, #tpu.memory_space<vmem>>, vector<1x64x16xbf16>
    %200 = vector.shape_cast %199 : vector<1x64x16xbf16> to vector<64x16xbf16>
    %201 = arith.truncf %176 : vector<10x64xf32> to vector<10x64xbf16>
    %cst_88 = arith.constant dense<0.000000e+00> : vector<10x16xf32>
    %202 = tpu.matmul %201, %200, %cst_88 {dimension_numbers = #tpu.dot_dimension_numbers<[1], [0], [0], [1], [0, 0, 1, 1], [], []>} : vector<10x64xbf16>, vector<64x16xbf16>, vector<10x16xf32> -> vector<10x16xf32>
    %203 = arith.mulf %198, %176 : vector<10x64xf32>
    %cst_89 = arith.constant dense<0.000000e+00> : vector<80x64xf32>
    %204 = tpu.matmul %24, %198, %cst_89 {dimension_numbers = #tpu.dot_dimension_numbers<[1], [0], [0], [1], [0, 0, 1, 1], [], []>} : vector<80x10xf32>, vector<10x64xf32>, vector<80x64xf32> -> vector<80x64xf32>
    %cst_90 = arith.constant dense<0.000000e+00> : vector<80x64xf32>
    %205 = tpu.matmul %24, %203, %cst_90 {dimension_numbers = #tpu.dot_dimension_numbers<[1], [0], [0], [1], [0, 0, 1, 1], [], []>} : vector<80x10xf32>, vector<10x64xf32>, vector<80x64xf32> -> vector<80x64xf32>
    %cst_91 = arith.constant dense<0.000000e+00> : vector<80x16xf32>
    %206 = tpu.matmul %24, %202, %cst_91 {dimension_numbers = #tpu.dot_dimension_numbers<[1], [0], [0], [1], [0, 0, 1, 1], [], []>} : vector<80x10xf32>, vector<10x16xf32>, vector<80x16xf32> -> vector<80x16xf32>
    %207 = vector.extract_strided_slice %206 {offsets = [0, 0], sizes = [80, 8], strides = [1, 1]} : vector<80x16xf32> to vector<80x8xf32>
    %208 = arith.mulf %207, %25 : vector<80x8xf32>
    %cst_92 = arith.constant dense<0.000000e+00> : vector<80xf32>
    %209 = vector.multi_reduction <add>, %208, %cst_92 [1] : vector<80x8xf32> to vector<80xf32>
    %210 = vector.shape_cast %209 : vector<80xf32> to vector<80x1xf32>
    %211 = vector.extract_strided_slice %206 {offsets = [0, 8], sizes = [80, 8], strides = [1, 1]} : vector<80x16xf32> to vector<80x8xf32>
    %212 = arith.mulf %211, %25 : vector<80x8xf32>
    %cst_93 = arith.constant dense<0.000000e+00> : vector<80xf32>
    %213 = vector.multi_reduction <add>, %212, %cst_93 [1] : vector<80x8xf32> to vector<80xf32>
    %214 = vector.shape_cast %213 : vector<80xf32> to vector<80x1xf32>
    %c0_94 = arith.constant 0 : index
    %c0_95 = arith.constant 0 : index
    %c0_96 = arith.constant 0 : index
    %215 = vector.load %arg25[%c0_94, %c0_95, %c0_96] : memref<2x80x64xf32, #tpu.memory_space<vmem>>, vector<1x80x64xf32>
    %216 = vector.shape_cast %215 : vector<1x80x64xf32> to vector<80x64xf32>
    %217 = arith.mulf %204, %216 : vector<80x64xf32>
    %218 = math.exp %217 : vector<80x64xf32>
    %219 = vector.broadcast %210 : vector<80x1xf32> to vector<80x64xf32>
    %220 = arith.mulf %219, %205 : vector<80x64xf32>
    %221 = vector.extract_strided_slice %220 {offsets = [0, 0], sizes = [8, 64], strides = [1, 1]} : vector<80x64xf32> to vector<8x64xf32>
    %c0_97 = arith.constant 0 : index
    %c0_98 = arith.constant 0 : index
    %222 = vector.load %arg34[%c0_97, %c0_98] : memref<80x64xf32, #tpu.memory_space<vmem>>, vector<8x64xf32>
    tpu.vector_store %arg34[%c0_97, %c0_98], %221 {strides = array<i32>} : memref<80x64xf32, #tpu.memory_space<vmem>>, vector<8x64xf32>,
    %223 = vector.extract_strided_slice %218 {offsets = [8, 0], sizes = [8, 64], strides = [1, 1]} : vector<80x64xf32> to vector<8x64xf32>
    %224 = arith.mulf %223, %221 : vector<8x64xf32>
    %225 = vector.extract_strided_slice %220 {offsets = [8, 0], sizes = [8, 64], strides = [1, 1]} : vector<80x64xf32> to vector<8x64xf32>
    %226 = arith.addf %224, %225 : vector<8x64xf32>
    %c8 = arith.constant 8 : index
    %c0_99 = arith.constant 0 : index
    %227 = vector.load %arg34[%c8, %c0_99] : memref<80x64xf32, #tpu.memory_space<vmem>>, vector<8x64xf32>
    tpu.vector_store %arg34[%c8, %c0_99], %226 {strides = array<i32>} : memref<80x64xf32, #tpu.memory_space<vmem>>, vector<8x64xf32>,
    %228 = vector.extract_strided_slice %218 {offsets = [16, 0], sizes = [8, 64], strides = [1, 1]} : vector<80x64xf32> to vector<8x64xf32>
    %229 = arith.mulf %228, %226 : vector<8x64xf32>
    %230 = vector.extract_strided_slice %220 {offsets = [16, 0], sizes = [8, 64], strides = [1, 1]} : vector<80x64xf32> to vector<8x64xf32>
    %231 = arith.addf %229, %230 : vector<8x64xf32>
    %c16 = arith.constant 16 : index
    %c0_100 = arith.constant 0 : index
    %232 = vector.load %arg34[%c16, %c0_100] : memref<80x64xf32, #tpu.memory_space<vmem>>, vector<8x64xf32>
    tpu.vector_store %arg34[%c16, %c0_100], %231 {strides = array<i32>} : memref<80x64xf32, #tpu.memory_space<vmem>>, vector<8x64xf32>,
    %233 = vector.extract_strided_slice %218 {offsets = [24, 0], sizes = [8, 64], strides = [1, 1]} : vector<80x64xf32> to vector<8x64xf32>
    %234 = arith.mulf %233, %231 : vector<8x64xf32>
    %235 = vector.extract_strided_slice %220 {offsets = [24, 0], sizes = [8, 64], strides = [1, 1]} : vector<80x64xf32> to vector<8x64xf32>
    %236 = arith.addf %234, %235 : vector<8x64xf32>
    %c24 = arith.constant 24 : index
    %c0_101 = arith.constant 0 : index
    %237 = vector.load %arg34[%c24, %c0_101] : memref<80x64xf32, #tpu.memory_space<vmem>>, vector<8x64xf32>
    tpu.vector_store %arg34[%c24, %c0_101], %236 {strides = array<i32>} : memref<80x64xf32, #tpu.memory_space<vmem>>, vector<8x64xf32>,
    %238 = vector.extract_strided_slice %218 {offsets = [32, 0], sizes = [8, 64], strides = [1, 1]} : vector<80x64xf32> to vector<8x64xf32>
    %239 = arith.mulf %238, %236 : vector<8x64xf32>
    %240 = vector.extract_strided_slice %220 {offsets = [32, 0], sizes = [8, 64], strides = [1, 1]} : vector<80x64xf32> to vector<8x64xf32>
    %241 = arith.addf %239, %240 : vector<8x64xf32>
    %c32 = arith.constant 32 : index
    %c0_102 = arith.constant 0 : index
    %242 = vector.load %arg34[%c32, %c0_102] : memref<80x64xf32, #tpu.memory_space<vmem>>, vector<8x64xf32>
    tpu.vector_store %arg34[%c32, %c0_102], %241 {strides = array<i32>} : memref<80x64xf32, #tpu.memory_space<vmem>>, vector<8x64xf32>,
    %243 = vector.extract_strided_slice %220 {offsets = [40, 0], sizes = [8, 64], strides = [1, 1]} : vector<80x64xf32> to vector<8x64xf32>
    %c40 = arith.constant 40 : index
    %c0_103 = arith.constant 0 : index
    %244 = vector.load %arg34[%c40, %c0_103] : memref<80x64xf32, #tpu.memory_space<vmem>>, vector<8x64xf32>
    tpu.vector_store %arg34[%c40, %c0_103], %243 {strides = array<i32>} : memref<80x64xf32, #tpu.memory_space<vmem>>, vector<8x64xf32>,
    %245 = vector.extract_strided_slice %218 {offsets = [48, 0], sizes = [8, 64], strides = [1, 1]} : vector<80x64xf32> to vector<8x64xf32>
    %246 = arith.mulf %245, %243 : vector<8x64xf32>
    %247 = vector.extract_strided_slice %220 {offsets = [48, 0], sizes = [8, 64], strides = [1, 1]} : vector<80x64xf32> to vector<8x64xf32>
    %248 = arith.addf %246, %247 : vector<8x64xf32>
    %c48 = arith.constant 48 : index
    %c0_104 = arith.constant 0 : index
    %249 = vector.load %arg34[%c48, %c0_104] : memref<80x64xf32, #tpu.memory_space<vmem>>, vector<8x64xf32>
    tpu.vector_store %arg34[%c48, %c0_104], %248 {strides = array<i32>} : memref<80x64xf32, #tpu.memory_space<vmem>>, vector<8x64xf32>,
    %250 = vector.extract_strided_slice %218 {offsets = [56, 0], sizes = [8, 64], strides = [1, 1]} : vector<80x64xf32> to vector<8x64xf32>
    %251 = arith.mulf %250, %248 : vector<8x64xf32>
    %252 = vector.extract_strided_slice %220 {offsets = [56, 0], sizes = [8, 64], strides = [1, 1]} : vector<80x64xf32> to vector<8x64xf32>
    %253 = arith.addf %251, %252 : vector<8x64xf32>
    %c56 = arith.constant 56 : index
    %c0_105 = arith.constant 0 : index
    %254 = vector.load %arg34[%c56, %c0_105] : memref<80x64xf32, #tpu.memory_space<vmem>>, vector<8x64xf32>
    tpu.vector_store %arg34[%c56, %c0_105], %253 {strides = array<i32>} : memref<80x64xf32, #tpu.memory_space<vmem>>, vector<8x64xf32>,
    %255 = vector.extract_strided_slice %218 {offsets = [64, 0], sizes = [8, 64], strides = [1, 1]} : vector<80x64xf32> to vector<8x64xf32>
    %256 = arith.mulf %255, %253 : vector<8x64xf32>
    %257 = vector.extract_strided_slice %220 {offsets = [64, 0], sizes = [8, 64], strides = [1, 1]} : vector<80x64xf32> to vector<8x64xf32>
    %258 = arith.addf %256, %257 : vector<8x64xf32>
    %c64 = arith.constant 64 : index
    %c0_106 = arith.constant 0 : index
    %259 = vector.load %arg34[%c64, %c0_106] : memref<80x64xf32, #tpu.memory_space<vmem>>, vector<8x64xf32>
    tpu.vector_store %arg34[%c64, %c0_106], %258 {strides = array<i32>} : memref<80x64xf32, #tpu.memory_space<vmem>>, vector<8x64xf32>,
    %260 = vector.extract_strided_slice %218 {offsets = [72, 0], sizes = [8, 64], strides = [1, 1]} : vector<80x64xf32> to vector<8x64xf32>
    %261 = arith.mulf %260, %258 : vector<8x64xf32>
    %262 = vector.extract_strided_slice %220 {offsets = [72, 0], sizes = [8, 64], strides = [1, 1]} : vector<80x64xf32> to vector<8x64xf32>
    %263 = arith.addf %261, %262 : vector<8x64xf32>
    %c72 = arith.constant 72 : index
    %c0_107 = arith.constant 0 : index
    %264 = vector.load %arg34[%c72, %c0_107] : memref<80x64xf32, #tpu.memory_space<vmem>>, vector<8x64xf32>
    tpu.vector_store %arg34[%c72, %c0_107], %263 {strides = array<i32>} : memref<80x64xf32, #tpu.memory_space<vmem>>, vector<8x64xf32>,
    %c0_108 = arith.constant 0 : index
    %c0_109 = arith.constant 0 : index
    %265 = vector.load %arg34[%c0_108, %c0_109] : memref<80x64xf32, #tpu.memory_space<vmem>>, vector<80x64xf32>
    %266 = vector.broadcast %214 : vector<80x1xf32> to vector<80x64xf32>
    %267 = arith.mulf %266, %265 : vector<80x64xf32>
    %cst_110 = arith.constant dense<0.000000e+00> : vector<10x64xf32>
    %268 = tpu.matmul %26, %267, %cst_110 {dimension_numbers = #tpu.dot_dimension_numbers<[1], [0], [0], [1], [0, 0, 1, 1], [], []>} : vector<10x80xf32>, vector<80x64xf32>, vector<10x64xf32> -> vector<10x64xf32>
    %c0_111 = arith.constant 0 : index
    %c0_112 = arith.constant 0 : index
    %c0_113 = arith.constant 0 : index
    %269 = vector.load %arg26[%c0_111, %c0_112, %c0_113] : memref<2x1x64xf32, #tpu.memory_space<vmem>>, vector<1x1x64xf32>
    %270 = vector.shape_cast %269 : vector<1x1x64xf32> to vector<1x64xf32>
    %271 = vector.broadcast %270 : vector<1x64xf32> to vector<10x64xf32>
    %272 = arith.mulf %271, %176 : vector<10x64xf32>
    %273 = arith.addf %268, %272 : vector<10x64xf32>
    %274 = arith.negf %125 : vector<10x64xf32>
    %275 = math.exp %274 : vector<10x64xf32>
    %cst_114 = arith.constant 1.000000e+00 : f32
    %276 = vector.broadcast %cst_114 : f32 to vector<10x64xf32>
    %277 = arith.addf %276, %275 : vector<10x64xf32>
    %278 = arith.divf %276, %277 : vector<10x64xf32>
    %279 = arith.mulf %125, %278 : vector<10x64xf32>
    %280 = arith.mulf %273, %279 : vector<10x64xf32>
    %c0_115 = arith.constant 0 : index
    %c0_116 = arith.constant 0 : index
    %c0_117 = arith.constant 0 : index
    %281 = vector.load %arg27[%c0_115, %c0_116, %c0_117] : memref<2x64x32xbf16, #tpu.memory_space<vmem>>, vector<1x64x32xbf16>
    %282 = vector.shape_cast %281 : vector<1x64x32xbf16> to vector<64x32xbf16>
    %283 = arith.truncf %280 : vector<10x64xf32> to vector<10x64xbf16>
    %cst_118 = arith.constant dense<0.000000e+00> : vector<10x32xf32>
    %284 = tpu.matmul %283, %282, %cst_118 {dimension_numbers = #tpu.dot_dimension_numbers<[1], [0], [0], [1], [0, 0, 1, 1], [], []>} : vector<10x64xbf16>, vector<64x32xbf16>, vector<10x32xf32> -> vector<10x32xf32>
    %c1 = arith.constant 1 : index
    %c0_119 = arith.constant 0 : index
    %285 = vector.load %arg15[%c1, %c0_119] : memref<24x32xf32, #tpu.memory_space<vmem>>, vector<1x32xf32>
    %c1_120 = arith.constant 1 : index
    %c0_121 = arith.constant 0 : index
    %286 = vector.load %arg16[%c1_120, %c0_121] : memref<2x32xf32, #tpu.memory_space<vmem>>, vector<1x32xf32>
    %c1_122 = arith.constant 1 : index
    %c0_123 = arith.constant 0 : index
    %c0_124 = arith.constant 0 : index
    %287 = vector.load %arg9[%c1_122, %c0_123, %c0_124] : memref<2x32x64xbf16, #tpu.memory_space<vmem>>, vector<1x32x64xbf16>
    %288 = vector.shape_cast %287 : vector<1x32x64xbf16> to vector<32x64xbf16>
    %c1_125 = arith.constant 1 : index
    %c0_126 = arith.constant 0 : index
    %c0_127 = arith.constant 0 : index
    %289 = vector.load %arg10[%c1_125, %c0_126, %c0_127] : memref<2x1x64xf32, #tpu.memory_space<vmem>>, vector<1x1x64xf32>
    %290 = vector.shape_cast %289 : vector<1x1x64xf32> to vector<1x64xf32>
    %c1_128 = arith.constant 1 : index
    %c0_129 = arith.constant 0 : index
    %c0_130 = arith.constant 0 : index
    %291 = vector.load %arg11[%c1_128, %c0_129, %c0_130] : memref<2x64x32xbf16, #tpu.memory_space<vmem>>, vector<1x64x32xbf16>
    %292 = vector.shape_cast %291 : vector<1x64x32xbf16> to vector<64x32xbf16>
    %c1_131 = arith.constant 1 : index
    %c0_132 = arith.constant 0 : index
    %c0_133 = arith.constant 0 : index
    %293 = vector.load %arg12[%c1_131, %c0_132, %c0_133] : memref<2x1x32xf32, #tpu.memory_space<vmem>>, vector<1x1x32xf32>
    %294 = vector.shape_cast %293 : vector<1x1x32xf32> to vector<1x32xf32>
    %c1_134 = arith.constant 1 : index
    %c0_135 = arith.constant 0 : index
    %c0_136 = arith.constant 0 : index
    %295 = vector.load %arg13[%c1_134, %c0_135, %c0_136] : memref<2x32x32xbf16, #tpu.memory_space<vmem>>, vector<1x32x32xbf16>
    %296 = vector.shape_cast %295 : vector<1x32x32xbf16> to vector<32x32xbf16>
    %c1_137 = arith.constant 1 : index
    %c0_138 = arith.constant 0 : index
    %c0_139 = arith.constant 0 : index
    %297 = vector.load %arg14[%c1_137, %c0_138, %c0_139] : memref<2x1x32xf32, #tpu.memory_space<vmem>>, vector<1x1x32xf32>
    %298 = vector.shape_cast %297 : vector<1x1x32xf32> to vector<1x32xf32>
    %299 = arith.truncf %284 : vector<10x32xf32> to vector<10x32xbf16>
    %cst_140 = arith.constant dense<0.000000e+00> : vector<10x64xf32>
    %300 = tpu.matmul %299, %288, %cst_140 {dimension_numbers = #tpu.dot_dimension_numbers<[1], [0], [0], [1], [0, 0, 1, 1], [], []>} : vector<10x32xbf16>, vector<32x64xbf16>, vector<10x64xf32> -> vector<10x64xf32>
    %301 = vector.broadcast %290 : vector<1x64xf32> to vector<10x64xf32>
    %302 = arith.addf %300, %301 : vector<10x64xf32>
    %303 = arith.truncf %302 : vector<10x64xf32> to vector<10x64xbf16>
    %cst_141 = arith.constant dense<0.000000e+00> : vector<10x32xf32>
    %304 = tpu.matmul %303, %292, %cst_141 {dimension_numbers = #tpu.dot_dimension_numbers<[1], [0], [0], [1], [0, 0, 1, 1], [], []>} : vector<10x64xbf16>, vector<64x32xbf16>, vector<10x32xf32> -> vector<10x32xf32>
    %305 = vector.broadcast %294 : vector<1x32xf32> to vector<10x32xf32>
    %306 = arith.addf %304, %305 : vector<10x32xf32>
    %307 = arith.negf %306 : vector<10x32xf32>
    %308 = math.exp %307 : vector<10x32xf32>
    %cst_142 = arith.constant 1.000000e+00 : f32
    %309 = vector.broadcast %cst_142 : f32 to vector<10x32xf32>
    %310 = arith.addf %309, %308 : vector<10x32xf32>
    %311 = arith.divf %309, %310 : vector<10x32xf32>
    %312 = arith.mulf %306, %311 : vector<10x32xf32>
    %313 = arith.truncf %284 : vector<10x32xf32> to vector<10x32xbf16>
    %cst_143 = arith.constant dense<0.000000e+00> : vector<10x32xf32>
    %314 = tpu.matmul %313, %296, %cst_143 {dimension_numbers = #tpu.dot_dimension_numbers<[1], [0], [0], [1], [0, 0, 1, 1], [], []>} : vector<10x32xbf16>, vector<32x32xbf16>, vector<10x32xf32> -> vector<10x32xf32>
    %315 = vector.broadcast %298 : vector<1x32xf32> to vector<10x32xf32>
    %316 = arith.addf %314, %315 : vector<10x32xf32>
    %317 = arith.negf %316 : vector<10x32xf32>
    %318 = math.exp %317 : vector<10x32xf32>
    %cst_144 = arith.constant 1.000000e+00 : f32
    %319 = vector.broadcast %cst_144 : f32 to vector<10x32xf32>
    %320 = arith.addf %319, %318 : vector<10x32xf32>
    %321 = arith.divf %319, %320 : vector<10x32xf32>
    %322 = arith.mulf %316, %321 : vector<10x32xf32>
    %323 = vector.broadcast %285 : vector<1x32xf32> to vector<10x32xf32>
    %324 = arith.mulf %312, %323 : vector<10x32xf32>
    %325 = vector.broadcast %286 : vector<1x32xf32> to vector<10x32xf32>
    %326 = arith.mulf %322, %325 : vector<10x32xf32>
    %327 = arith.addf %324, %326 : vector<10x32xf32>
    %328 = vector.broadcast %19 : vector<10x1xf32> to vector<10x32xf32>
    %329 = arith.mulf %328, %327 : vector<10x32xf32>
    %330 = arith.addf %284, %329 : vector<10x32xf32>
    %331 = arith.truncf %330 : vector<10x32xf32> to vector<10x32xbf16>
    %cst_145 = arith.constant dense<0.000000e+00> : vector<10x32xf32>
    %332 = tpu.matmul %331, %296, %cst_145 {dimension_numbers = #tpu.dot_dimension_numbers<[1], [0], [0], [1], [0, 0, 1, 1], [], []>} : vector<10x32xbf16>, vector<32x32xbf16>, vector<10x32xf32> -> vector<10x32xf32>
    %333 = vector.broadcast %298 : vector<1x32xf32> to vector<10x32xf32>
    %334 = arith.addf %332, %333 : vector<10x32xf32>
    %335 = arith.negf %334 : vector<10x32xf32>
    %336 = math.exp %335 : vector<10x32xf32>
    %cst_146 = arith.constant 1.000000e+00 : f32
    %337 = vector.broadcast %cst_146 : f32 to vector<10x32xf32>
    %338 = arith.addf %337, %336 : vector<10x32xf32>
    %339 = arith.divf %337, %338 : vector<10x32xf32>
    %340 = arith.mulf %334, %339 : vector<10x32xf32>
    %cst_147 = arith.constant 0.000000e+00 : f32
    %341 = vector.broadcast %cst_147 : f32 to vector<3x32xf32>
    %342 = vector.extract_strided_slice %340 {offsets = [0, 0], sizes = [7, 32], strides = [1, 1]} : vector<10x32xf32> to vector<7x32xf32>
    %343 = tpu.concatenate %341, %342 in 0 : vector<3x32xf32>, vector<7x32xf32> -> vector<10x32xf32>
    %344 = vector.broadcast %285 : vector<1x32xf32> to vector<10x32xf32>
    %345 = arith.mulf %312, %344 : vector<10x32xf32>
    %346 = vector.broadcast %286 : vector<1x32xf32> to vector<10x32xf32>
    %347 = arith.mulf %343, %346 : vector<10x32xf32>
    %348 = arith.addf %345, %347 : vector<10x32xf32>
    %349 = vector.broadcast %23 : vector<10x1xf32> to vector<10x32xf32>
    %350 = arith.mulf %349, %348 : vector<10x32xf32>
    %351 = arith.addf %330, %350 : vector<10x32xf32>
    %352 = arith.addf %93, %351 : vector<10x32xf32>
    %cst_148 = arith.constant dense<0.000000e+00> : vector<10xf32>
    %353 = vector.multi_reduction <add>, %352, %cst_148 [1] : vector<10x32xf32> to vector<10xf32>
    %354 = vector.shape_cast %353 : vector<10xf32> to vector<10x1xf32>
    %cst_149 = arith.constant 3.200000e+01 : f32
    %355 = vector.broadcast %cst_149 : f32 to vector<10x1xf32>
    %356 = arith.divf %354, %355 : vector<10x1xf32>
    %357 = vector.broadcast %356 : vector<10x1xf32> to vector<10x32xf32>
    %358 = arith.subf %352, %357 : vector<10x32xf32>
    %359 = arith.mulf %358, %358 : vector<10x32xf32>
    %cst_150 = arith.constant dense<0.000000e+00> : vector<10xf32>
    %360 = vector.multi_reduction <add>, %359, %cst_150 [1] : vector<10x32xf32> to vector<10xf32>
    %361 = vector.shape_cast %360 : vector<10xf32> to vector<10x1xf32>
    %cst_151 = arith.constant 3.200000e+01 : f32
    %362 = vector.broadcast %cst_151 : f32 to vector<10x1xf32>
    %363 = arith.divf %361, %362 : vector<10x1xf32>
    %364 = vector.broadcast %356 : vector<10x1xf32> to vector<10x32xf32>
    %365 = arith.subf %352, %364 : vector<10x32xf32>
    %cst_152 = arith.constant 9.99999974E-6 : f32
    %366 = vector.broadcast %cst_152 : f32 to vector<10x1xf32>
    %367 = arith.addf %363, %366 : vector<10x1xf32>
    %368 = math.rsqrt %367 : vector<10x1xf32>
    %369 = vector.broadcast %368 : vector<10x1xf32> to vector<10x32xf32>
    %370 = arith.mulf %365, %369 : vector<10x32xf32>
    %c1_153 = arith.constant 1 : index
    %c0_154 = arith.constant 0 : index
    %c0_155 = arith.constant 0 : index
    %371 = vector.load %arg17[%c1_153, %c0_154, %c0_155] : memref<2x1x32xf32, #tpu.memory_space<vmem>>, vector<1x1x32xf32>
    %372 = vector.shape_cast %371 : vector<1x1x32xf32> to vector<1x32xf32>
    %373 = vector.broadcast %372 : vector<1x32xf32> to vector<10x32xf32>
    %374 = arith.mulf %370, %373 : vector<10x32xf32>
    %c1_156 = arith.constant 1 : index
    %c0_157 = arith.constant 0 : index
    %c0_158 = arith.constant 0 : index
    %375 = vector.load %arg18[%c1_156, %c0_157, %c0_158] : memref<2x1x32xf32, #tpu.memory_space<vmem>>, vector<1x1x32xf32>
    %376 = vector.shape_cast %375 : vector<1x1x32xf32> to vector<1x32xf32>
    %377 = vector.broadcast %376 : vector<1x32xf32> to vector<10x32xf32>
    %378 = arith.addf %374, %377 : vector<10x32xf32>
    %c1_159 = arith.constant 1 : index
    %c0_160 = arith.constant 0 : index
    %c0_161 = arith.constant 0 : index
    %379 = vector.load %arg19[%c1_159, %c0_160, %c0_161] : memref<2x32x128xbf16, #tpu.memory_space<vmem>>, vector<1x32x128xbf16>
    %380 = vector.shape_cast %379 : vector<1x32x128xbf16> to vector<32x128xbf16>
    %381 = arith.truncf %378 : vector<10x32xf32> to vector<10x32xbf16>
    %cst_162 = arith.constant dense<0.000000e+00> : vector<10x128xf32>
    %382 = tpu.matmul %381, %380, %cst_162 {dimension_numbers = #tpu.dot_dimension_numbers<[1], [0], [0], [1], [0, 0, 1, 1], [], []>} : vector<10x32xbf16>, vector<32x128xbf16>, vector<10x128xf32> -> vector<10x128xf32>
    %383 = vector.extract_strided_slice %382 {offsets = [0, 0], sizes = [10, 64], strides = [1, 1]} : vector<10x128xf32> to vector<10x64xf32>
    %384 = vector.extract_strided_slice %382 {offsets = [0, 64], sizes = [10, 64], strides = [1, 1]} : vector<10x128xf32> to vector<10x64xf32>
    %c1_163 = arith.constant 1 : index
    %c0_164 = arith.constant 0 : index
    %c0_165 = arith.constant 0 : index
    %385 = vector.load %arg20[%c1_163, %c0_164, %c0_165] : memref<2x4x64xf32, #tpu.memory_space<vmem>>, vector<1x4x64xf32>
    %386 = vector.shape_cast %385 : vector<1x4x64xf32> to vector<4x64xf32>
    %c1_166 = arith.constant 1 : index
    %c0_167 = arith.constant 0 : index
    %c0_168 = arith.constant 0 : index
    %387 = vector.load %arg21[%c1_166, %c0_167, %c0_168] : memref<2x1x64xf32, #tpu.memory_space<vmem>>, vector<1x1x64xf32>
    %388 = vector.shape_cast %387 : vector<1x1x64xf32> to vector<1x64xf32>
    %cst_169 = arith.constant 0.000000e+00 : f32
    %389 = vector.broadcast %cst_169 : f32 to vector<3x64xf32>
    %390 = tpu.concatenate %389, %383 in 0 : vector<3x64xf32>, vector<10x64xf32> -> vector<13x64xf32>
    %391 = vector.extract_strided_slice %390 {offsets = [0, 0], sizes = [10, 64], strides = [1, 1]} : vector<13x64xf32> to vector<10x64xf32>
    %392 = vector.extract_strided_slice %386 {offsets = [0, 0], sizes = [1, 64], strides = [1, 1]} : vector<4x64xf32> to vector<1x64xf32>
    %393 = vector.broadcast %392 : vector<1x64xf32> to vector<10x64xf32>
    %394 = arith.mulf %391, %393 : vector<10x64xf32>
    %cst_170 = arith.constant 3.000000e+00 : f32
    %395 = vector.broadcast %cst_170 : f32 to vector<10x1xf32>
    %396 = arith.cmpf oge, %15, %395 : vector<10x1xf32>
    %cst_171 = arith.constant 0.000000e+00 : f32
    %397 = vector.shape_cast %396 : vector<10x1xi1> to vector<10x1xi1>
    %398 = vector.broadcast %397 : vector<10x1xi1> to vector<10x64xi1>
    %399 = vector.broadcast %cst_171 : f32 to vector<10x64xf32>
    %400 = arith.select %398, %394, %399 : vector<10x64xi1>, vector<10x64xf32>
    %401 = vector.broadcast %388 : vector<1x64xf32> to vector<10x64xf32>
    %402 = arith.addf %401, %400 : vector<10x64xf32>
    %403 = vector.extract_strided_slice %390 {offsets = [1, 0], sizes = [10, 64], strides = [1, 1]} : vector<13x64xf32> to vector<10x64xf32>
    %404 = vector.extract_strided_slice %386 {offsets = [1, 0], sizes = [1, 64], strides = [1, 1]} : vector<4x64xf32> to vector<1x64xf32>
    %405 = vector.broadcast %404 : vector<1x64xf32> to vector<10x64xf32>
    %406 = arith.mulf %403, %405 : vector<10x64xf32>
    %cst_172 = arith.constant 2.000000e+00 : f32
    %407 = vector.broadcast %cst_172 : f32 to vector<10x1xf32>
    %408 = arith.cmpf oge, %15, %407 : vector<10x1xf32>
    %cst_173 = arith.constant 0.000000e+00 : f32
    %409 = vector.shape_cast %408 : vector<10x1xi1> to vector<10x1xi1>
    %410 = vector.broadcast %409 : vector<10x1xi1> to vector<10x64xi1>
    %411 = vector.broadcast %cst_173 : f32 to vector<10x64xf32>
    %412 = arith.select %410, %406, %411 : vector<10x64xi1>, vector<10x64xf32>
    %413 = arith.addf %402, %412 : vector<10x64xf32>
    %414 = vector.extract_strided_slice %390 {offsets = [2, 0], sizes = [10, 64], strides = [1, 1]} : vector<13x64xf32> to vector<10x64xf32>
    %415 = vector.extract_strided_slice %386 {offsets = [2, 0], sizes = [1, 64], strides = [1, 1]} : vector<4x64xf32> to vector<1x64xf32>
    %416 = vector.broadcast %415 : vector<1x64xf32> to vector<10x64xf32>
    %417 = arith.mulf %414, %416 : vector<10x64xf32>
    %cst_174 = arith.constant 1.000000e+00 : f32
    %418 = vector.broadcast %cst_174 : f32 to vector<10x1xf32>
    %419 = arith.cmpf oge, %15, %418 : vector<10x1xf32>
    %cst_175 = arith.constant 0.000000e+00 : f32
    %420 = vector.shape_cast %419 : vector<10x1xi1> to vector<10x1xi1>
    %421 = vector.broadcast %420 : vector<10x1xi1> to vector<10x64xi1>
    %422 = vector.broadcast %cst_175 : f32 to vector<10x64xf32>
    %423 = arith.select %421, %417, %422 : vector<10x64xi1>, vector<10x64xf32>
    %424 = arith.addf %413, %423 : vector<10x64xf32>
    %425 = vector.extract_strided_slice %390 {offsets = [3, 0], sizes = [10, 64], strides = [1, 1]} : vector<13x64xf32> to vector<10x64xf32>
    %426 = vector.extract_strided_slice %386 {offsets = [3, 0], sizes = [1, 64], strides = [1, 1]} : vector<4x64xf32> to vector<1x64xf32>
    %427 = vector.broadcast %426 : vector<1x64xf32> to vector<10x64xf32>
    %428 = arith.mulf %425, %427 : vector<10x64xf32>
    %429 = arith.addf %424, %428 : vector<10x64xf32>
    %430 = arith.negf %429 : vector<10x64xf32>
    %431 = math.exp %430 : vector<10x64xf32>
    %cst_176 = arith.constant 1.000000e+00 : f32
    %432 = vector.broadcast %cst_176 : f32 to vector<10x64xf32>
    %433 = arith.addf %432, %431 : vector<10x64xf32>
    %434 = arith.divf %432, %433 : vector<10x64xf32>
    %435 = arith.mulf %429, %434 : vector<10x64xf32>
    %c1_177 = arith.constant 1 : index
    %c0_178 = arith.constant 0 : index
    %c0_179 = arith.constant 0 : index
    %436 = vector.load %arg22[%c1_177, %c0_178, %c0_179] : memref<2x64x64xbf16, #tpu.memory_space<vmem>>, vector<1x64x64xbf16>
    %437 = vector.shape_cast %436 : vector<1x64x64xbf16> to vector<64x64xbf16>
    %438 = arith.truncf %435 : vector<10x64xf32> to vector<10x64xbf16>
    %cst_180 = arith.constant dense<0.000000e+00> : vector<10x64xf32>
    %439 = tpu.matmul %438, %437, %cst_180 {dimension_numbers = #tpu.dot_dimension_numbers<[1], [0], [0], [1], [0, 0, 1, 1], [], []>} : vector<10x64xbf16>, vector<64x64xbf16>, vector<10x64xf32> -> vector<10x64xf32>
    %c1_181 = arith.constant 1 : index
    %c0_182 = arith.constant 0 : index
    %c0_183 = arith.constant 0 : index
    %440 = vector.load %arg24[%c1_181, %c0_182, %c0_183] : memref<2x1x64xf32, #tpu.memory_space<vmem>>, vector<1x1x64xf32>
    %441 = vector.shape_cast %440 : vector<1x1x64xf32> to vector<1x64xf32>
    %442 = vector.broadcast %441 : vector<1x64xf32> to vector<10x64xf32>
    %443 = arith.addf %439, %442 : vector<10x64xf32>
    %cst_184 = arith.constant 0.000000e+00 : f32
    %444 = vector.broadcast %cst_184 : f32 to vector<10x64xf32>
    %445 = arith.maximumf %443, %444 : vector<10x64xf32>
    %446 = vector.broadcast %cst_184 : f32 to vector<10x64xf32>
    %447 = arith.subf %443, %446 : vector<10x64xf32>
    %448 = arith.cmpf one, %447, %447 : vector<10x64xf32>
    %449 = vector.broadcast %cst_184 : f32 to vector<10x64xf32>
    %450 = arith.addf %443, %449 : vector<10x64xf32>
    %451 = math.absf %447 : vector<10x64xf32>
    %cst_185 = arith.constant 0.000000e+00 : f32
    %452 = vector.broadcast %cst_185 : f32 to vector<10x64xf32>
    %453 = arith.subf %452, %451 : vector<10x64xf32>
    %454 = math.exp %453 : vector<10x64xf32>
    %455 = math.log1p %454 : vector<10x64xf32>
    %456 = arith.addf %445, %455 : vector<10x64xf32>
    %457 = arith.select %448, %450, %456 : vector<10x64xi1>, vector<10x64xf32>
    %c1_186 = arith.constant 1 : index
    %c0_187 = arith.constant 0 : index
    %c0_188 = arith.constant 0 : index
    %458 = vector.load %arg23[%c1_186, %c0_187, %c0_188] : memref<2x64x16xbf16, #tpu.memory_space<vmem>>, vector<1x64x16xbf16>
    %459 = vector.shape_cast %458 : vector<1x64x16xbf16> to vector<64x16xbf16>
    %460 = arith.truncf %435 : vector<10x64xf32> to vector<10x64xbf16>
    %cst_189 = arith.constant dense<0.000000e+00> : vector<10x16xf32>
    %461 = tpu.matmul %460, %459, %cst_189 {dimension_numbers = #tpu.dot_dimension_numbers<[1], [0], [0], [1], [0, 0, 1, 1], [], []>} : vector<10x64xbf16>, vector<64x16xbf16>, vector<10x16xf32> -> vector<10x16xf32>
    %462 = arith.mulf %457, %435 : vector<10x64xf32>
    %cst_190 = arith.constant dense<0.000000e+00> : vector<80x64xf32>
    %463 = tpu.matmul %24, %457, %cst_190 {dimension_numbers = #tpu.dot_dimension_numbers<[1], [0], [0], [1], [0, 0, 1, 1], [], []>} : vector<80x10xf32>, vector<10x64xf32>, vector<80x64xf32> -> vector<80x64xf32>
    %cst_191 = arith.constant dense<0.000000e+00> : vector<80x64xf32>
    %464 = tpu.matmul %24, %462, %cst_191 {dimension_numbers = #tpu.dot_dimension_numbers<[1], [0], [0], [1], [0, 0, 1, 1], [], []>} : vector<80x10xf32>, vector<10x64xf32>, vector<80x64xf32> -> vector<80x64xf32>
    %cst_192 = arith.constant dense<0.000000e+00> : vector<80x16xf32>
    %465 = tpu.matmul %24, %461, %cst_192 {dimension_numbers = #tpu.dot_dimension_numbers<[1], [0], [0], [1], [0, 0, 1, 1], [], []>} : vector<80x10xf32>, vector<10x16xf32>, vector<80x16xf32> -> vector<80x16xf32>
    %466 = vector.extract_strided_slice %465 {offsets = [0, 0], sizes = [80, 8], strides = [1, 1]} : vector<80x16xf32> to vector<80x8xf32>
    %467 = arith.mulf %466, %25 : vector<80x8xf32>
    %cst_193 = arith.constant dense<0.000000e+00> : vector<80xf32>
    %468 = vector.multi_reduction <add>, %467, %cst_193 [1] : vector<80x8xf32> to vector<80xf32>
    %469 = vector.shape_cast %468 : vector<80xf32> to vector<80x1xf32>
    %470 = vector.extract_strided_slice %465 {offsets = [0, 8], sizes = [80, 8], strides = [1, 1]} : vector<80x16xf32> to vector<80x8xf32>
    %471 = arith.mulf %470, %25 : vector<80x8xf32>
    %cst_194 = arith.constant dense<0.000000e+00> : vector<80xf32>
    %472 = vector.multi_reduction <add>, %471, %cst_194 [1] : vector<80x8xf32> to vector<80xf32>
    %473 = vector.shape_cast %472 : vector<80xf32> to vector<80x1xf32>
    %c1_195 = arith.constant 1 : index
    %c0_196 = arith.constant 0 : index
    %c0_197 = arith.constant 0 : index
    %474 = vector.load %arg25[%c1_195, %c0_196, %c0_197] : memref<2x80x64xf32, #tpu.memory_space<vmem>>, vector<1x80x64xf32>
    %475 = vector.shape_cast %474 : vector<1x80x64xf32> to vector<80x64xf32>
    %476 = arith.mulf %463, %475 : vector<80x64xf32>
    %477 = math.exp %476 : vector<80x64xf32>
    %478 = vector.broadcast %469 : vector<80x1xf32> to vector<80x64xf32>
    %479 = arith.mulf %478, %464 : vector<80x64xf32>
    %480 = vector.extract_strided_slice %479 {offsets = [0, 0], sizes = [8, 64], strides = [1, 1]} : vector<80x64xf32> to vector<8x64xf32>
    %c0_198 = arith.constant 0 : index
    %c0_199 = arith.constant 0 : index
    %481 = vector.load %arg34[%c0_198, %c0_199] : memref<80x64xf32, #tpu.memory_space<vmem>>, vector<8x64xf32>
    tpu.vector_store %arg34[%c0_198, %c0_199], %480 {strides = array<i32>} : memref<80x64xf32, #tpu.memory_space<vmem>>, vector<8x64xf32>,
    %482 = vector.extract_strided_slice %477 {offsets = [8, 0], sizes = [8, 64], strides = [1, 1]} : vector<80x64xf32> to vector<8x64xf32>
    %483 = arith.mulf %482, %480 : vector<8x64xf32>
    %484 = vector.extract_strided_slice %479 {offsets = [8, 0], sizes = [8, 64], strides = [1, 1]} : vector<80x64xf32> to vector<8x64xf32>
    %485 = arith.addf %483, %484 : vector<8x64xf32>
    %c8_200 = arith.constant 8 : index
    %c0_201 = arith.constant 0 : index
    %486 = vector.load %arg34[%c8_200, %c0_201] : memref<80x64xf32, #tpu.memory_space<vmem>>, vector<8x64xf32>
    tpu.vector_store %arg34[%c8_200, %c0_201], %485 {strides = array<i32>} : memref<80x64xf32, #tpu.memory_space<vmem>>, vector<8x64xf32>,
    %487 = vector.extract_strided_slice %477 {offsets = [16, 0], sizes = [8, 64], strides = [1, 1]} : vector<80x64xf32> to vector<8x64xf32>
    %488 = arith.mulf %487, %485 : vector<8x64xf32>
    %489 = vector.extract_strided_slice %479 {offsets = [16, 0], sizes = [8, 64], strides = [1, 1]} : vector<80x64xf32> to vector<8x64xf32>
    %490 = arith.addf %488, %489 : vector<8x64xf32>
    %c16_202 = arith.constant 16 : index
    %c0_203 = arith.constant 0 : index
    %491 = vector.load %arg34[%c16_202, %c0_203] : memref<80x64xf32, #tpu.memory_space<vmem>>, vector<8x64xf32>
    tpu.vector_store %arg34[%c16_202, %c0_203], %490 {strides = array<i32>} : memref<80x64xf32, #tpu.memory_space<vmem>>, vector<8x64xf32>,
    %492 = vector.extract_strided_slice %477 {offsets = [24, 0], sizes = [8, 64], strides = [1, 1]} : vector<80x64xf32> to vector<8x64xf32>
    %493 = arith.mulf %492, %490 : vector<8x64xf32>
    %494 = vector.extract_strided_slice %479 {offsets = [24, 0], sizes = [8, 64], strides = [1, 1]} : vector<80x64xf32> to vector<8x64xf32>
    %495 = arith.addf %493, %494 : vector<8x64xf32>
    %c24_204 = arith.constant 24 : index
    %c0_205 = arith.constant 0 : index
    %496 = vector.load %arg34[%c24_204, %c0_205] : memref<80x64xf32, #tpu.memory_space<vmem>>, vector<8x64xf32>
    tpu.vector_store %arg34[%c24_204, %c0_205], %495 {strides = array<i32>} : memref<80x64xf32, #tpu.memory_space<vmem>>, vector<8x64xf32>,
    %497 = vector.extract_strided_slice %477 {offsets = [32, 0], sizes = [8, 64], strides = [1, 1]} : vector<80x64xf32> to vector<8x64xf32>
    %498 = arith.mulf %497, %495 : vector<8x64xf32>
    %499 = vector.extract_strided_slice %479 {offsets = [32, 0], sizes = [8, 64], strides = [1, 1]} : vector<80x64xf32> to vector<8x64xf32>
    %500 = arith.addf %498, %499 : vector<8x64xf32>
    %c32_206 = arith.constant 32 : index
    %c0_207 = arith.constant 0 : index
    %501 = vector.load %arg34[%c32_206, %c0_207] : memref<80x64xf32, #tpu.memory_space<vmem>>, vector<8x64xf32>
    tpu.vector_store %arg34[%c32_206, %c0_207], %500 {strides = array<i32>} : memref<80x64xf32, #tpu.memory_space<vmem>>, vector<8x64xf32>,
    %502 = vector.extract_strided_slice %479 {offsets = [40, 0], sizes = [8, 64], strides = [1, 1]} : vector<80x64xf32> to vector<8x64xf32>
    %c40_208 = arith.constant 40 : index
    %c0_209 = arith.constant 0 : index
    %503 = vector.load %arg34[%c40_208, %c0_209] : memref<80x64xf32, #tpu.memory_space<vmem>>, vector<8x64xf32>
    tpu.vector_store %arg34[%c40_208, %c0_209], %502 {strides = array<i32>} : memref<80x64xf32, #tpu.memory_space<vmem>>, vector<8x64xf32>,
    %504 = vector.extract_strided_slice %477 {offsets = [48, 0], sizes = [8, 64], strides = [1, 1]} : vector<80x64xf32> to vector<8x64xf32>
    %505 = arith.mulf %504, %502 : vector<8x64xf32>
    %506 = vector.extract_strided_slice %479 {offsets = [48, 0], sizes = [8, 64], strides = [1, 1]} : vector<80x64xf32> to vector<8x64xf32>
    %507 = arith.addf %505, %506 : vector<8x64xf32>
    %c48_210 = arith.constant 48 : index
    %c0_211 = arith.constant 0 : index
    %508 = vector.load %arg34[%c48_210, %c0_211] : memref<80x64xf32, #tpu.memory_space<vmem>>, vector<8x64xf32>
    tpu.vector_store %arg34[%c48_210, %c0_211], %507 {strides = array<i32>} : memref<80x64xf32, #tpu.memory_space<vmem>>, vector<8x64xf32>,
    %509 = vector.extract_strided_slice %477 {offsets = [56, 0], sizes = [8, 64], strides = [1, 1]} : vector<80x64xf32> to vector<8x64xf32>
    %510 = arith.mulf %509, %507 : vector<8x64xf32>
    %511 = vector.extract_strided_slice %479 {offsets = [56, 0], sizes = [8, 64], strides = [1, 1]} : vector<80x64xf32> to vector<8x64xf32>
    %512 = arith.addf %510, %511 : vector<8x64xf32>
    %c56_212 = arith.constant 56 : index
    %c0_213 = arith.constant 0 : index
    %513 = vector.load %arg34[%c56_212, %c0_213] : memref<80x64xf32, #tpu.memory_space<vmem>>, vector<8x64xf32>
    tpu.vector_store %arg34[%c56_212, %c0_213], %512 {strides = array<i32>} : memref<80x64xf32, #tpu.memory_space<vmem>>, vector<8x64xf32>,
    %514 = vector.extract_strided_slice %477 {offsets = [64, 0], sizes = [8, 64], strides = [1, 1]} : vector<80x64xf32> to vector<8x64xf32>
    %515 = arith.mulf %514, %512 : vector<8x64xf32>
    %516 = vector.extract_strided_slice %479 {offsets = [64, 0], sizes = [8, 64], strides = [1, 1]} : vector<80x64xf32> to vector<8x64xf32>
    %517 = arith.addf %515, %516 : vector<8x64xf32>
    %c64_214 = arith.constant 64 : index
    %c0_215 = arith.constant 0 : index
    %518 = vector.load %arg34[%c64_214, %c0_215] : memref<80x64xf32, #tpu.memory_space<vmem>>, vector<8x64xf32>
    tpu.vector_store %arg34[%c64_214, %c0_215], %517 {strides = array<i32>} : memref<80x64xf32, #tpu.memory_space<vmem>>, vector<8x64xf32>,
    %519 = vector.extract_strided_slice %477 {offsets = [72, 0], sizes = [8, 64], strides = [1, 1]} : vector<80x64xf32> to vector<8x64xf32>
    %520 = arith.mulf %519, %517 : vector<8x64xf32>
    %521 = vector.extract_strided_slice %479 {offsets = [72, 0], sizes = [8, 64], strides = [1, 1]} : vector<80x64xf32> to vector<8x64xf32>
    %522 = arith.addf %520, %521 : vector<8x64xf32>
    %c72_216 = arith.constant 72 : index
    %c0_217 = arith.constant 0 : index
    %523 = vector.load %arg34[%c72_216, %c0_217] : memref<80x64xf32, #tpu.memory_space<vmem>>, vector<8x64xf32>
    tpu.vector_store %arg34[%c72_216, %c0_217], %522 {strides = array<i32>} : memref<80x64xf32, #tpu.memory_space<vmem>>, vector<8x64xf32>,
    %c0_218 = arith.constant 0 : index
    %c0_219 = arith.constant 0 : index
    %524 = vector.load %arg34[%c0_218, %c0_219] : memref<80x64xf32, #tpu.memory_space<vmem>>, vector<80x64xf32>
    %525 = vector.broadcast %473 : vector<80x1xf32> to vector<80x64xf32>
    %526 = arith.mulf %525, %524 : vector<80x64xf32>
    %cst_220 = arith.constant dense<0.000000e+00> : vector<10x64xf32>
    %527 = tpu.matmul %26, %526, %cst_220 {dimension_numbers = #tpu.dot_dimension_numbers<[1], [0], [0], [1], [0, 0, 1, 1], [], []>} : vector<10x80xf32>, vector<80x64xf32>, vector<10x64xf32> -> vector<10x64xf32>
    %c1_221 = arith.constant 1 : index
    %c0_222 = arith.constant 0 : index
    %c0_223 = arith.constant 0 : index
    %528 = vector.load %arg26[%c1_221, %c0_222, %c0_223] : memref<2x1x64xf32, #tpu.memory_space<vmem>>, vector<1x1x64xf32>
    %529 = vector.shape_cast %528 : vector<1x1x64xf32> to vector<1x64xf32>
    %530 = vector.broadcast %529 : vector<1x64xf32> to vector<10x64xf32>
    %531 = arith.mulf %530, %435 : vector<10x64xf32>
    %532 = arith.addf %527, %531 : vector<10x64xf32>
    %533 = arith.negf %384 : vector<10x64xf32>
    %534 = math.exp %533 : vector<10x64xf32>
    %cst_224 = arith.constant 1.000000e+00 : f32
    %535 = vector.broadcast %cst_224 : f32 to vector<10x64xf32>
    %536 = arith.addf %535, %534 : vector<10x64xf32>
    %537 = arith.divf %535, %536 : vector<10x64xf32>
    %538 = arith.mulf %384, %537 : vector<10x64xf32>
    %539 = arith.mulf %532, %538 : vector<10x64xf32>
    %c1_225 = arith.constant 1 : index
    %c0_226 = arith.constant 0 : index
    %c0_227 = arith.constant 0 : index
    %540 = vector.load %arg27[%c1_225, %c0_226, %c0_227] : memref<2x64x32xbf16, #tpu.memory_space<vmem>>, vector<1x64x32xbf16>
    %541 = vector.shape_cast %540 : vector<1x64x32xbf16> to vector<64x32xbf16>
    %542 = arith.truncf %539 : vector<10x64xf32> to vector<10x64xbf16>
    %cst_228 = arith.constant dense<0.000000e+00> : vector<10x32xf32>
    %543 = tpu.matmul %542, %541, %cst_228 {dimension_numbers = #tpu.dot_dimension_numbers<[1], [0], [0], [1], [0, 0, 1, 1], [], []>} : vector<10x64xbf16>, vector<64x32xbf16>, vector<10x32xf32> -> vector<10x32xf32>
    %544 = arith.addf %352, %543 : vector<10x32xf32>
    %cst_229 = arith.constant dense<0.000000e+00> : vector<10xf32>
    %545 = vector.multi_reduction <add>, %544, %cst_229 [1] : vector<10x32xf32> to vector<10xf32>
    %546 = vector.shape_cast %545 : vector<10xf32> to vector<10x1xf32>
    %cst_230 = arith.constant 3.200000e+01 : f32
    %547 = vector.broadcast %cst_230 : f32 to vector<10x1xf32>
    %548 = arith.divf %546, %547 : vector<10x1xf32>
    %549 = vector.broadcast %548 : vector<10x1xf32> to vector<10x32xf32>
    %550 = arith.subf %544, %549 : vector<10x32xf32>
    %551 = arith.mulf %550, %550 : vector<10x32xf32>
    %cst_231 = arith.constant dense<0.000000e+00> : vector<10xf32>
    %552 = vector.multi_reduction <add>, %551, %cst_231 [1] : vector<10x32xf32> to vector<10xf32>
    %553 = vector.shape_cast %552 : vector<10xf32> to vector<10x1xf32>
    %cst_232 = arith.constant 3.200000e+01 : f32
    %554 = vector.broadcast %cst_232 : f32 to vector<10x1xf32>
    %555 = arith.divf %553, %554 : vector<10x1xf32>
    %556 = vector.broadcast %548 : vector<10x1xf32> to vector<10x32xf32>
    %557 = arith.subf %544, %556 : vector<10x32xf32>
    %cst_233 = arith.constant 9.99999974E-6 : f32
    %558 = vector.broadcast %cst_233 : f32 to vector<10x1xf32>
    %559 = arith.addf %555, %558 : vector<10x1xf32>
    %560 = math.rsqrt %559 : vector<10x1xf32>
    %561 = vector.broadcast %560 : vector<10x1xf32> to vector<10x32xf32>
    %562 = arith.mulf %557, %561 : vector<10x32xf32>
    %c0_234 = arith.constant 0 : index
    %c0_235 = arith.constant 0 : index
    %563 = vector.load %arg28[%c0_234, %c0_235] : memref<1x32xf32, #tpu.memory_space<vmem>>, vector<1x32xf32>
    %564 = vector.broadcast %563 : vector<1x32xf32> to vector<10x32xf32>
    %565 = arith.mulf %562, %564 : vector<10x32xf32>
    %c0_236 = arith.constant 0 : index
    %c0_237 = arith.constant 0 : index
    %566 = vector.load %arg29[%c0_236, %c0_237] : memref<1x32xf32, #tpu.memory_space<vmem>>, vector<1x32xf32>
    %567 = vector.broadcast %566 : vector<1x32xf32> to vector<10x32xf32>
    %568 = arith.addf %565, %567 : vector<10x32xf32>
    %c0_238 = arith.constant 0 : index
    %c0_239 = arith.constant 0 : index
    %569 = vector.load %arg33[%c0_238, %c0_239] : memref<10x32xf32, #tpu.memory_space<vmem>>, vector<10x32xf32>
    tpu.vector_store %arg33[%c0_238, %c0_239], %568 {strides = array<i32>} : memref<10x32xf32, #tpu.memory_space<vmem>>, vector<10x32xf32>,
    %570 = vector.extract_strided_slice %568 {offsets = [2, 0], sizes = [1, 32], strides = [1, 1]} : vector<10x32xf32> to vector<1x32xf32>
    %571 = vector.extract_strided_slice %568 {offsets = [7, 0], sizes = [1, 32], strides = [1, 1]} : vector<10x32xf32> to vector<1x32xf32>
    %572 = tpu.concatenate %570, %571 in 0 : vector<1x32xf32>, vector<1x32xf32> -> vector<2x32xf32>
    %c0_240 = arith.constant 0 : index
    %c0_241 = arith.constant 0 : index
    %573 = vector.load %arg30[%c0_240, %c0_241] : memref<32x10xbf16, #tpu.memory_space<vmem>>, vector<32x10xbf16>
    %574 = arith.truncf %572 : vector<2x32xf32> to vector<2x32xbf16>
    %cst_242 = arith.constant dense<0.000000e+00> : vector<2x10xf32>
    %575 = tpu.matmul %574, %573, %cst_242 {dimension_numbers = #tpu.dot_dimension_numbers<[1], [0], [0], [1], [0, 0, 1, 1], [], []>} : vector<2x32xbf16>, vector<32x10xbf16>, vector<2x10xf32> -> vector<2x10xf32>
    %c0_243 = arith.constant 0 : index
    %c0_244 = arith.constant 0 : index
    %576 = vector.load %arg31[%c0_243, %c0_244] : memref<1x10xf32, #tpu.memory_space<vmem>>, vector<1x10xf32>
    %577 = vector.broadcast %576 : vector<1x10xf32> to vector<2x10xf32>
    %578 = arith.addf %575, %577 : vector<2x10xf32>
    %c0_245 = arith.constant 0 : index
    %c0_246 = arith.constant 0 : index
    %579 = vector.load %arg32[%c0_245, %c0_246] : memref<2x10xf32, #tpu.memory_space<vmem>>, vector<2x10xf32>
    tpu.vector_store %arg32[%c0_245, %c0_246], %578 {strides = array<i32>} : memref<2x10xf32, #tpu.memory_space<vmem>>, vector<2x10xf32>,
    return
  }
  func.func @transform_0(%arg0: i32) -> (i32, i32) {
    %c0_i32 = arith.constant 0 : i32
    %c0_i32_0 = arith.constant 0 : i32
    %c0_i32_1 = arith.constant 0 : i32
    return %c0_i32, %c0_i32_0 : i32, i32
  }
  func.func @transform_1(%arg0: i32) -> (i32, i32) {
    %c0_i32 = arith.constant 0 : i32
    %c0_i32_0 = arith.constant 0 : i32
    %c0_i32_1 = arith.constant 0 : i32
    return %c0_i32, %c0_i32_0 : i32, i32
  }
  func.func @transform_2(%arg0: i32) -> (i32, i32) {
    %c0_i32 = arith.constant 0 : i32
    %c0_i32_0 = arith.constant 0 : i32
    %c0_i32_1 = arith.constant 0 : i32
    return %c0_i32, %c0_i32_0 : i32, i32
  }
  func.func @transform_3(%arg0: i32) -> (i32, i32) {
    %c0_i32 = arith.constant 0 : i32
    %c0_i32_0 = arith.constant 0 : i32
    %c0_i32_1 = arith.constant 0 : i32
    return %c0_i32, %c0_i32_0 : i32, i32
  }
  func.func @transform_4(%arg0: i32) -> (i32, i32) {
    %c0_i32 = arith.constant 0 : i32
    %c0_i32_0 = arith.constant 0 : i32
    %c0_i32_1 = arith.constant 0 : i32
    return %c0_i32, %c0_i32_0 : i32, i32
  }
  func.func @transform_5(%arg0: i32) -> (i32, i32) {
    %c0_i32 = arith.constant 0 : i32
    %c0_i32_0 = arith.constant 0 : i32
    %c0_i32_1 = arith.constant 0 : i32
    return %c0_i32, %c0_i32_0 : i32, i32
  }
  func.func @transform_6(%arg0: i32) -> (i32, i32) {
    %c0_i32 = arith.constant 0 : i32
    %c0_i32_0 = arith.constant 0 : i32
    %c0_i32_1 = arith.constant 0 : i32
    return %c0_i32, %c0_i32_0 : i32, i32
  }
  func.func @transform_7(%arg0: i32) -> (i32, i32) {
    %c0_i32 = arith.constant 0 : i32
    %c0_i32_0 = arith.constant 0 : i32
    %c0_i32_1 = arith.constant 0 : i32
    return %c0_i32, %c0_i32_0 : i32, i32
  }
  func.func @transform_8(%arg0: i32) -> (i32, i32, i32) {
    %c0_i32 = arith.constant 0 : i32
    %c0_i32_0 = arith.constant 0 : i32
    %c0_i32_1 = arith.constant 0 : i32
    %c0_i32_2 = arith.constant 0 : i32
    return %c0_i32, %c0_i32_0, %c0_i32_1 : i32, i32, i32
  }
  func.func @transform_9(%arg0: i32) -> (i32, i32, i32) {
    %c0_i32 = arith.constant 0 : i32
    %c0_i32_0 = arith.constant 0 : i32
    %c0_i32_1 = arith.constant 0 : i32
    %c0_i32_2 = arith.constant 0 : i32
    return %c0_i32, %c0_i32_0, %c0_i32_1 : i32, i32, i32
  }
  func.func @transform_10(%arg0: i32) -> (i32, i32, i32) {
    %c0_i32 = arith.constant 0 : i32
    %c0_i32_0 = arith.constant 0 : i32
    %c0_i32_1 = arith.constant 0 : i32
    %c0_i32_2 = arith.constant 0 : i32
    return %c0_i32, %c0_i32_0, %c0_i32_1 : i32, i32, i32
  }
  func.func @transform_11(%arg0: i32) -> (i32, i32, i32) {
    %c0_i32 = arith.constant 0 : i32
    %c0_i32_0 = arith.constant 0 : i32
    %c0_i32_1 = arith.constant 0 : i32
    %c0_i32_2 = arith.constant 0 : i32
    return %c0_i32, %c0_i32_0, %c0_i32_1 : i32, i32, i32
  }
  func.func @transform_12(%arg0: i32) -> (i32, i32, i32) {
    %c0_i32 = arith.constant 0 : i32
    %c0_i32_0 = arith.constant 0 : i32
    %c0_i32_1 = arith.constant 0 : i32
    %c0_i32_2 = arith.constant 0 : i32
    return %c0_i32, %c0_i32_0, %c0_i32_1 : i32, i32, i32
  }
  func.func @transform_13(%arg0: i32) -> (i32, i32, i32) {
    %c0_i32 = arith.constant 0 : i32
    %c0_i32_0 = arith.constant 0 : i32
    %c0_i32_1 = arith.constant 0 : i32
    %c0_i32_2 = arith.constant 0 : i32
    return %c0_i32, %c0_i32_0, %c0_i32_1 : i32, i32, i32
  }
  func.func @transform_14(%arg0: i32) -> (i32, i32) {
    %c0_i32 = arith.constant 0 : i32
    %c0_i32_0 = arith.constant 0 : i32
    %c0_i32_1 = arith.constant 0 : i32
    return %c0_i32, %c0_i32_0 : i32, i32
  }
  func.func @transform_15(%arg0: i32) -> (i32, i32) {
    %c0_i32 = arith.constant 0 : i32
    %c0_i32_0 = arith.constant 0 : i32
    %c0_i32_1 = arith.constant 0 : i32
    return %c0_i32, %c0_i32_0 : i32, i32
  }
  func.func @transform_16(%arg0: i32) -> (i32, i32, i32) {
    %c0_i32 = arith.constant 0 : i32
    %c0_i32_0 = arith.constant 0 : i32
    %c0_i32_1 = arith.constant 0 : i32
    %c0_i32_2 = arith.constant 0 : i32
    return %c0_i32, %c0_i32_0, %c0_i32_1 : i32, i32, i32
  }
  func.func @transform_17(%arg0: i32) -> (i32, i32, i32) {
    %c0_i32 = arith.constant 0 : i32
    %c0_i32_0 = arith.constant 0 : i32
    %c0_i32_1 = arith.constant 0 : i32
    %c0_i32_2 = arith.constant 0 : i32
    return %c0_i32, %c0_i32_0, %c0_i32_1 : i32, i32, i32
  }
  func.func @transform_18(%arg0: i32) -> (i32, i32, i32) {
    %c0_i32 = arith.constant 0 : i32
    %c0_i32_0 = arith.constant 0 : i32
    %c0_i32_1 = arith.constant 0 : i32
    %c0_i32_2 = arith.constant 0 : i32
    return %c0_i32, %c0_i32_0, %c0_i32_1 : i32, i32, i32
  }
  func.func @transform_19(%arg0: i32) -> (i32, i32, i32) {
    %c0_i32 = arith.constant 0 : i32
    %c0_i32_0 = arith.constant 0 : i32
    %c0_i32_1 = arith.constant 0 : i32
    %c0_i32_2 = arith.constant 0 : i32
    return %c0_i32, %c0_i32_0, %c0_i32_1 : i32, i32, i32
  }
  func.func @transform_20(%arg0: i32) -> (i32, i32, i32) {
    %c0_i32 = arith.constant 0 : i32
    %c0_i32_0 = arith.constant 0 : i32
    %c0_i32_1 = arith.constant 0 : i32
    %c0_i32_2 = arith.constant 0 : i32
    return %c0_i32, %c0_i32_0, %c0_i32_1 : i32, i32, i32
  }
  func.func @transform_21(%arg0: i32) -> (i32, i32, i32) {
    %c0_i32 = arith.constant 0 : i32
    %c0_i32_0 = arith.constant 0 : i32
    %c0_i32_1 = arith.constant 0 : i32
    %c0_i32_2 = arith.constant 0 : i32
    return %c0_i32, %c0_i32_0, %c0_i32_1 : i32, i32, i32
  }
  func.func @transform_22(%arg0: i32) -> (i32, i32, i32) {
    %c0_i32 = arith.constant 0 : i32
    %c0_i32_0 = arith.constant 0 : i32
    %c0_i32_1 = arith.constant 0 : i32
    %c0_i32_2 = arith.constant 0 : i32
    return %c0_i32, %c0_i32_0, %c0_i32_1 : i32, i32, i32
  }
  func.func @transform_23(%arg0: i32) -> (i32, i32, i32) {
    %c0_i32 = arith.constant 0 : i32
    %c0_i32_0 = arith.constant 0 : i32
    %c0_i32_1 = arith.constant 0 : i32
    %c0_i32_2 = arith.constant 0 : i32
    return %c0_i32, %c0_i32_0, %c0_i32_1 : i32, i32, i32
  }
  func.func @transform_24(%arg0: i32) -> (i32, i32, i32) {
    %c0_i32 = arith.constant 0 : i32
    %c0_i32_0 = arith.constant 0 : i32
    %c0_i32_1 = arith.constant 0 : i32
    %c0_i32_2 = arith.constant 0 : i32
    return %c0_i32, %c0_i32_0, %c0_i32_1 : i32, i32, i32
  }
  func.func @transform_25(%arg0: i32) -> (i32, i32, i32) {
    %c0_i32 = arith.constant 0 : i32
    %c0_i32_0 = arith.constant 0 : i32
    %c0_i32_1 = arith.constant 0 : i32
    %c0_i32_2 = arith.constant 0 : i32
    return %c0_i32, %c0_i32_0, %c0_i32_1 : i32, i32, i32
  }
  func.func @transform_26(%arg0: i32) -> (i32, i32, i32) {
    %c0_i32 = arith.constant 0 : i32
    %c0_i32_0 = arith.constant 0 : i32
    %c0_i32_1 = arith.constant 0 : i32
    %c0_i32_2 = arith.constant 0 : i32
    return %c0_i32, %c0_i32_0, %c0_i32_1 : i32, i32, i32
  }
  func.func @transform_27(%arg0: i32) -> (i32, i32) {
    %c0_i32 = arith.constant 0 : i32
    %c0_i32_0 = arith.constant 0 : i32
    %c0_i32_1 = arith.constant 0 : i32
    return %c0_i32, %c0_i32_0 : i32, i32
  }
  func.func @transform_28(%arg0: i32) -> (i32, i32) {
    %c0_i32 = arith.constant 0 : i32
    %c0_i32_0 = arith.constant 0 : i32
    %c0_i32_1 = arith.constant 0 : i32
    return %c0_i32, %c0_i32_0 : i32, i32
  }
  func.func @transform_29(%arg0: i32) -> (i32, i32) {
    %c0_i32 = arith.constant 0 : i32
    %c0_i32_0 = arith.constant 0 : i32
    %c0_i32_1 = arith.constant 0 : i32
    return %c0_i32, %c0_i32_0 : i32, i32
  }
  func.func @transform_30(%arg0: i32) -> (i32, i32) {
    %c0_i32 = arith.constant 0 : i32
    %c0_i32_0 = arith.constant 0 : i32
    %c0_i32_1 = arith.constant 0 : i32
    return %c0_i32, %c0_i32_0 : i32, i32
  }
  func.func @transform_31(%arg0: i32) -> (i32, i32) {
    %c0_i32 = arith.constant 0 : i32
    %c0_i32_0 = arith.constant 0 : i32
    %c0_i32_1 = arith.constant 0 : i32
    return %c0_i32, %c0_i32_0 : i32, i32
  }
  func.func @transform_32(%arg0: i32) -> (i32, i32) {
    %c0_i32 = arith.constant 0 : i32
    %c0_i32_0 = arith.constant 0 : i32
    %c0_i32_1 = arith.constant 0 : i32
    return %c0_i32, %c0_i32_0 : i32, i32
  }
}

</mosaic_0001>

<llo_original>
// kernel: vision_mamba_forward.2
$region0: #{vision_mamba_forward.2}
  #allocation0 [shape = 'u32[]', space=smem, size = 0x4, offset = 0x4, fixed_abs, tag = 'smem constant byte address 0x4 - core index']
  #allocation1 [shape = 'u32[144,128]{1,0:T(1,128)}', space=vmem, size = 0x12000, scoped, tag = 'internal scratch']
  %s0 = inlined_call_operand.vmem [shape: f32[6,256], index: 0, kind: input, shape index: {}]
  %s1 = inlined_call_operand.vmem [shape: f32[6,256], index: 1, kind: output, shape index: {}]
  %s2 = sld [smem:[#allocation0]]
  $region14: #{vision_mamba_forward.2} parent=0
    _
  %s4 = ssub.s32 1, %s2
  %s5 = scalar_select 0, %s4, %s2
  // Predicated region
  $region2: #{vision_mamba_forward.2} parent=0 // pred_check
    _
  $region3: #{vision_mamba_forward.2} parent=0 // pred_check_branch
    %7 = sbr.rel (0) target = $region5
  $region4: #{vision_mamba_forward.2} parent=0 // pred_region
    _
  $region5: #{vision_mamba_forward.2} parent=0 // pred_fallthru
    _
  %v8 = vld [vmem:[%s0] sm:$0x3f]
  %v9 = vld [vmem:[%s0 + $0x8] sm:$0x3f]
  %vm10 = vcmask 1045504
  %v11 = vsel %vm10, %v8, 0.0
  %v12 = vsel %vm10, %v9, 0.0
  %v13 = vadd.f32 %v11, %v12
  %14 = vadd.xlane.f32.xlu0 %v13
  %v15 = vpop.xlane.xlu0 %14
  %v16 = vrcp.pop 256.0
  %v17 = vmul.f32 %v15, %v16
  %v18 = vsub.f32 %v8, %v17
  %v19 = vsub.f32 %v9, %v17
  %v20 = vmul.f32 %v18, %v18
  %v21 = vmul.f32 %v19, %v19
  %v22 = vsel %vm10, %v20, 0.0
  %v23 = vsel %vm10, %v21, 0.0
  %v24 = vadd.f32 %v22, %v23
  %25 = vadd.xlane.f32.xlu0 %v24
  %v26 = vpop.xlane.xlu0 %25
  %v27 = vrcp.pop 255.0
  %v28 = vmul.f32 %v26, %v27
  %v29 = vadd.f32 %v28, 0.001
  %v30 = vmul.f32 %v29, 4.0
  %v31 = vrcp.pop %v30
  %v32 = vmul.f32 %v20, %v31
  %v33 = vmul.f32 %v21, %v31
  %v34 = vadd.f32 %v32, 0.5
  %v35 = vadd.f32 %v33, 0.5
  %v36 = vxor.u32 %v34, 2147483648
  %v37 = vxor.u32 %v35, 2147483648
  %v38 = vmul.f32 %v36, 1.442695
  %v39 = vpow.pop %v38
  %v40 = vmul.f32 %v37, 1.442695
  %v41 = vpow.pop %v40
  %v42 = vadd.f32 %v39, 1.0
  %v43 = vadd.f32 %v41, 1.0
  %v44 = vrcp.pop %v42
  %v45 = vmul.f32 1.0, %v44
  %v46 = vrcp.pop %v43
  %v47 = vmul.f32 1.0, %v46
  %v48 = vmul.f32 %v8, %v45
  %v49 = vmul.f32 %v9, %v47
  %50 = vst [vmem:[%s1] sm:$0x3f] %v48
  %51 = vst [vmem:[%s1 + $0x8] sm:$0x3f] %v49
  // Predicated region
  $region6: #{vision_mamba_forward.2} parent=0 // pred_check
    _
  $region7: #{vision_mamba_forward.2} parent=0 // pred_check_branch
    %53 = sbr.rel (0) target = $region9
  $region8: #{vision_mamba_forward.2} parent=0 // pred_region
    _
  $region9: #{vision_mamba_forward.2} parent=0 // pred_fallthru
    _
  // Predicated region
  $region10: #{vision_mamba_forward.2} parent=0 // pred_check
    _
  $region11: #{vision_mamba_forward.2} parent=0 // pred_check_branch
    %55 = sbr.rel (0) target = $region13
  $region12: #{vision_mamba_forward.2} parent=0 // pred_region
    _
  $region13: #{vision_mamba_forward.2} parent=0 // pred_fallthru
    _

// kernel: vision_mamba_forward.3
$region0: #{vision_mamba_forward.3}
  #allocation0 [shape = 'u32[]', space=smem, size = 0x4, offset = 0x4, fixed_abs, tag = 'smem constant byte address 0x4 - core index']
  #allocation1 [shape = 'u32[144,128]{1,0:T(1,128)}', space=vmem, size = 0x12000, scoped, tag = 'internal scratch']
  #allocation2 [shape = 'f32[80,64]{1,0:T(8,128)}', space=vmem, size = 0xa000, scoped, tag = 'scratch operand']
  %s0 = inlined_call_operand.smem [shape: u32[33], index: -1, kind: input, shape index: {}]
  %s1 = sld [smem:[%s0]]
  %s2 = scalar_lea.smem %s0, 1
  %s3 = sld [smem:[%s2]]
  %s4 = scalar_lea.smem %s0, 2
  %s5 = sld [smem:[%s4]]
  %s6 = scalar_lea.smem %s0, 3
  %s7 = sld [smem:[%s6]]
  %s8 = scalar_lea.smem %s0, 4
  %s9 = sld [smem:[%s8]]
  %s10 = scalar_lea.smem %s0, 5
  %s11 = sld [smem:[%s10]]
  %s12 = scalar_lea.smem %s0, 6
  %s13 = sld [smem:[%s12]]
  %s14 = scalar_lea.smem %s0, 7
  %s15 = sld [smem:[%s14]]
  %s16 = scalar_lea.smem %s0, 8
  %s17 = sld [smem:[%s16]]
  %s18 = scalar_lea.smem %s0, 9
  %s19 = sld [smem:[%s18]]
  %s20 = scalar_lea.smem %s0, 10
  %s21 = sld [smem:[%s20]]
  %s22 = scalar_lea.smem %s0, 11
  %s23 = sld [smem:[%s22]]
  %s24 = scalar_lea.smem %s0, 12
  %s25 = sld [smem:[%s24]]
  %s26 = scalar_lea.smem %s0, 13
  %s27 = sld [smem:[%s26]]
  %s28 = scalar_lea.smem %s0, 14
  %s29 = sld [smem:[%s28]]
  %s30 = scalar_lea.smem %s0, 15
  %s31 = sld [smem:[%s30]]
  %s32 = scalar_lea.smem %s0, 16
  %s33 = sld [smem:[%s32]]
  %s34 = scalar_lea.smem %s0, 17
  %s35 = sld [smem:[%s34]]
  %s36 = scalar_lea.smem %s0, 18
  %s37 = sld [smem:[%s36]]
  %s38 = scalar_lea.smem %s0, 19
  %s39 = sld [smem:[%s38]]
  %s40 = scalar_lea.smem %s0, 20
  %s41 = sld [smem:[%s40]]
  %s42 = scalar_lea.smem %s0, 21
  %s43 = sld [smem:[%s42]]
  %s44 = scalar_lea.smem %s0, 22
  %s45 = sld [smem:[%s44]]
  %s46 = scalar_lea.smem %s0, 23
  %s47 = sld [smem:[%s46]]
  %s48 = scalar_lea.smem %s0, 24
  %s49 = sld [smem:[%s48]]
  %s50 = scalar_lea.smem %s0, 25
  %s51 = sld [smem:[%s50]]
  %s52 = scalar_lea.smem %s0, 26
  %s53 = sld [smem:[%s52]]
  %s54 = scalar_lea.smem %s0, 27
  %s55 = sld [smem:[%s54]]
  %s56 = scalar_lea.smem %s0, 28
  %s57 = sld [smem:[%s56]]
  %s58 = scalar_lea.smem %s0, 29
  %s59 = sld [smem:[%s58]]
  %s60 = scalar_lea.smem %s0, 30
  %s61 = sld [smem:[%s60]]
  %s62 = scalar_lea.smem %s0, 31
  %s63 = sld [smem:[%s62]]
  %s64 = scalar_lea.smem %s0, 32
  %s65 = sld [smem:[%s64]]
  %66 = xla_tuple %s63, %s65
  %s67 = sld [smem:[#allocation0]]
  $region142: #{vision_mamba_forward.3} parent=0
    _
  %s69 = ssub.s32 1, %s67
  %s70 = scalar_select 0, %s69, %s67
  $region1: #{vision_mamba_forward.3} parent=0
    #allocation3 [shape = 'u8[1024]{0}', space=vmem, size = 0x400, scoped, tag = 'output window, operand 0, single buffered']
    #allocation4 [shape = 's32[1]{0}', space=sflag, size = 0x4, scoped, tag = 'scoped memory for vision_mamba_forward.3']
    %71 = vsyncpa [#allocation4], 0
    // Predicated region
    $region2: #{vision_mamba_forward.3} parent=1 // pred_check
      _
    $region3: #{vision_mamba_forward.3} parent=1 // pred_check_branch
      %73 = sbr.rel (0) target = $region5
    $region4: #{vision_mamba_forward.3} parent=1 // pred_region
      _
    $region5: #{vision_mamba_forward.3} parent=1 // pred_fallthru
      _
    // Predicated region
    $region6: #{vision_mamba_forward.3} parent=1 // pred_check
      _
    $region7: #{vision_mamba_forward.3} parent=1 // pred_check_branch
      %75 = sbr.rel (0) target = $region9
    $region8: #{vision_mamba_forward.3} parent=1 // pred_region
      _
    $region9: #{vision_mamba_forward.3} parent=1 // pred_fallthru
      _
    // Predicated region
    $region10: #{vision_mamba_forward.3} parent=1 // pred_check
      _
    $region11: #{vision_mamba_forward.3} parent=1 // pred_check_branch
      %77 = sbr.rel (0) target = $region13
    $region12: #{vision_mamba_forward.3} parent=1 // pred_region
      _
    $region13: #{vision_mamba_forward.3} parent=1 // pred_fallthru
      _
    // Predicated region
    $region14: #{vision_mamba_forward.3} parent=1 // pred_check
      _
    $region15: #{vision_mamba_forward.3} parent=1 // pred_check_branch
      %79 = sbr.rel (0) target = $region17
    $region16: #{vision_mamba_forward.3} parent=1 // pred_region
      _
    $region17: #{vision_mamba_forward.3} parent=1 // pred_fallthru
      _
    // Predicated region
    $region18: #{vision_mamba_forward.3} parent=1 // pred_check
      _
    $region19: #{vision_mamba_forward.3} parent=1 // pred_check_branch
      %81 = sbr.rel (0) target = $region21
    $region20: #{vision_mamba_forward.3} parent=1 // pred_region
      _
    $region21: #{vision_mamba_forward.3} parent=1 // pred_fallthru
      _
    // Predicated region
    $region22: #{vision_mamba_forward.3} parent=1 // pred_check
      _
    $region23: #{vision_mamba_forward.3} parent=1 // pred_check_branch
      %83 = sbr.rel (0) target = $region25
    $region24: #{vision_mamba_forward.3} parent=1 // pred_region
      _
    $region25: #{vision_mamba_forward.3} parent=1 // pred_fallthru
      _
    // Predicated region
    $region26: #{vision_mamba_forward.3} parent=1 // pred_check
      _
    $region27: #{vision_mamba_forward.3} parent=1 // pred_check_branch
      %85 = sbr.rel (0) target = $region29
    $region28: #{vision_mamba_forward.3} parent=1 // pred_region
      _
    $region29: #{vision_mamba_forward.3} parent=1 // pred_fallthru
      _
    // Predicated region
    $region30: #{vision_mamba_forward.3} parent=1 // pred_check
      _
    $region31: #{vision_mamba_forward.3} parent=1 // pred_check_branch
      %87 = sbr.rel (0) target = $region33
    $region32: #{vision_mamba_forward.3} parent=1 // pred_region
      _
    $region33: #{vision_mamba_forward.3} parent=1 // pred_fallthru
      _
    // Predicated region
    $region34: #{vision_mamba_forward.3} parent=1 // pred_check
      _
    $region35: #{vision_mamba_forward.3} parent=1 // pred_check_branch
      %89 = sbr.rel (0) target = $region37
    $region36: #{vision_mamba_forward.3} parent=1 // pred_region
      _
    $region37: #{vision_mamba_forward.3} parent=1 // pred_fallthru
      _
    // Predicated region
    $region38: #{vision_mamba_forward.3} parent=1 // pred_check
      _
    $region39: #{vision_mamba_forward.3} parent=1 // pred_check_branch
      %91 = sbr.rel (0) target = $region41
    $region40: #{vision_mamba_forward.3} parent=1 // pred_region
      _
    $region41: #{vision_mamba_forward.3} parent=1 // pred_fallthru
      _
    // Predicated region
    $region42: #{vision_mamba_forward.3} parent=1 // pred_check
      _
    $region43: #{vision_mamba_forward.3} parent=1 // pred_check_branch
      %93 = sbr.rel (0) target = $region45
    $region44: #{vision_mamba_forward.3} parent=1 // pred_region
      _
    $region45: #{vision_mamba_forward.3} parent=1 // pred_fallthru
      _
    // Predicated region
    $region46: #{vision_mamba_forward.3} parent=1 // pred_check
      _
    $region47: #{vision_mamba_forward.3} parent=1 // pred_check_branch
      %95 = sbr.rel (0) target = $region49
    $region48: #{vision_mamba_forward.3} parent=1 // pred_region
      _
    $region49: #{vision_mamba_forward.3} parent=1 // pred_fallthru
      _
    // Predicated region
    $region50: #{vision_mamba_forward.3} parent=1 // pred_check
      _
    $region51: #{vision_mamba_forward.3} parent=1 // pred_check_branch
      %97 = sbr.rel (0) target = $region53
    $region52: #{vision_mamba_forward.3} parent=1 // pred_region
      _
    $region53: #{vision_mamba_forward.3} parent=1 // pred_fallthru
      _
    // Predicated region
    $region54: #{vision_mamba_forward.3} parent=1 // pred_check
      _
    $region55: #{vision_mamba_forward.3} parent=1 // pred_check_branch
      %99 = sbr.rel (0) target = $region57
    $region56: #{vision_mamba_forward.3} parent=1 // pred_region
      _
    $region57: #{vision_mamba_forward.3} parent=1 // pred_fallthru
      _
    // Predicated region
    $region58: #{vision_mamba_forward.3} parent=1 // pred_check
      _
    $region59: #{vision_mamba_forward.3} parent=1 // pred_check_branch
      %101 = sbr.rel (0) target = $region61
    $region60: #{vision_mamba_forward.3} parent=1 // pred_region
      _
    $region61: #{vision_mamba_forward.3} parent=1 // pred_fallthru
      _
    // Predicated region
    $region62: #{vision_mamba_forward.3} parent=1 // pred_check
      _
    $region63: #{vision_mamba_forward.3} parent=1 // pred_check_branch
      %103 = sbr.rel (0) target = $region65
    $region64: #{vision_mamba_forward.3} parent=1 // pred_region
      _
    $region65: #{vision_mamba_forward.3} parent=1 // pred_fallthru
      _
    // Predicated region
    $region66: #{vision_mamba_forward.3} parent=1 // pred_check
      _
    $region67: #{vision_mamba_forward.3} parent=1 // pred_check_branch
      %105 = sbr.rel (0) target = $region69
    $region68: #{vision_mamba_forward.3} parent=1 // pred_region
      _
    $region69: #{vision_mamba_forward.3} parent=1 // pred_fallthru
      _
    // Predicated region
    $region70: #{vision_mamba_forward.3} parent=1 // pred_check
      _
    $region71: #{vision_mamba_forward.3} parent=1 // pred_check_branch
      %107 = sbr.rel (0) target = $region73
    $region72: #{vision_mamba_forward.3} parent=1 // pred_region
      _
    $region73: #{vision_mamba_forward.3} parent=1 // pred_fallthru
      _
    // Predicated region
    $region74: #{vision_mamba_forward.3} parent=1 // pred_check
      _
    $region75: #{vision_mamba_forward.3} parent=1 // pred_check_branch
      %109 = sbr.rel (0) target = $region77
    $region76: #{vision_mamba_forward.3} parent=1 // pred_region
      _
    $region77: #{vision_mamba_forward.3} parent=1 // pred_fallthru
      _
    // Predicated region
    $region78: #{vision_mamba_forward.3} parent=1 // pred_check
      _
    $region79: #{vision_mamba_forward.3} parent=1 // pred_check_branch
      %111 = sbr.rel (0) target = $region81
    $region80: #{vision_mamba_forward.3} parent=1 // pred_region
      _
    $region81: #{vision_mamba_forward.3} parent=1 // pred_fallthru
      _
    // Predicated region
    $region82: #{vision_mamba_forward.3} parent=1 // pred_check
      _
    $region83: #{vision_mamba_forward.3} parent=1 // pred_check_branch
      %113 = sbr.rel (0) target = $region85
    $region84: #{vision_mamba_forward.3} parent=1 // pred_region
      _
    $region85: #{vision_mamba_forward.3} parent=1 // pred_fallthru
      _
    // Predicated region
    $region86: #{vision_mamba_forward.3} parent=1 // pred_check
      _
    $region87: #{vision_mamba_forward.3} parent=1 // pred_check_branch
      %115 = sbr.rel (0) target = $region89
    $region88: #{vision_mamba_forward.3} parent=1 // pred_region
      _
    $region89: #{vision_mamba_forward.3} parent=1 // pred_fallthru
      _
    // Predicated region
    $region90: #{vision_mamba_forward.3} parent=1 // pred_check
      _
    $region91: #{vision_mamba_forward.3} parent=1 // pred_check_branch
      %117 = sbr.rel (0) target = $region93
    $region92: #{vision_mamba_forward.3} parent=1 // pred_region
      _
    $region93: #{vision_mamba_forward.3} parent=1 // pred_fallthru
      _
    // Predicated region
    $region94: #{vision_mamba_forward.3} parent=1 // pred_check
      _
    $region95: #{vision_mamba_forward.3} parent=1 // pred_check_branch
      %119 = sbr.rel (0) target = $region97
    $region96: #{vision_mamba_forward.3} parent=1 // pred_region
      _
    $region97: #{vision_mamba_forward.3} parent=1 // pred_fallthru
      _
    // Predicated region
    $region98: #{vision_mamba_forward.3} parent=1 // pred_check
      _
    $region99: #{vision_mamba_forward.3} parent=1 // pred_check_branch
      %121 = sbr.rel (0) target = $region101
    $region100: #{vision_mamba_forward.3} parent=1 // pred_region
      _
    $region101: #{vision_mamba_forward.3} parent=1 // pred_fallthru
      _
    // Predicated region
    $region102: #{vision_mamba_forward.3} parent=1 // pred_check
      _
    $region103: #{vision_mamba_forward.3} parent=1 // pred_check_branch
      %123 = sbr.rel (0) target = $region105
    $region104: #{vision_mamba_forward.3} parent=1 // pred_region
      _
    $region105: #{vision_mamba_forward.3} parent=1 // pred_fallthru
      _
    // Predicated region
    $region106: #{vision_mamba_forward.3} parent=1 // pred_check
      _
    $region107: #{vision_mamba_forward.3} parent=1 // pred_check_branch
      %125 = sbr.rel (0) target = $region109
    $region108: #{vision_mamba_forward.3} parent=1 // pred_region
      _
    $region109: #{vision_mamba_forward.3} parent=1 // pred_fallthru
      _
    // Predicated region
    $region110: #{vision_mamba_forward.3} parent=1 // pred_check
      _
    $region111: #{vision_mamba_forward.3} parent=1 // pred_check_branch
      %127 = sbr.rel (0) target = $region113
    $region112: #{vision_mamba_forward.3} parent=1 // pred_region
      _
    $region113: #{vision_mamba_forward.3} parent=1 // pred_fallthru
      _
    // Predicated region
    $region114: #{vision_mamba_forward.3} parent=1 // pred_check
      _
    $region115: #{vision_mamba_forward.3} parent=1 // pred_check_branch
      %129 = sbr.rel (0) target = $region117
    $region116: #{vision_mamba_forward.3} parent=1 // pred_region
      _
    $region117: #{vision_mamba_forward.3} parent=1 // pred_fallthru
      _
    // Predicated region
    $region118: #{vision_mamba_forward.3} parent=1 // pred_check
      _
    $region119: #{vision_mamba_forward.3} parent=1 // pred_check_branch
      %131 = sbr.rel (0) target = $region121
    $region120: #{vision_mamba_forward.3} parent=1 // pred_region
      _
    $region121: #{vision_mamba_forward.3} parent=1 // pred_fallthru
      _
    // Predicated region
    $region122: #{vision_mamba_forward.3} parent=1 // pred_check
      _
    $region123: #{vision_mamba_forward.3} parent=1 // pred_check_branch
      %133 = sbr.rel (0) target = $region125
    $region124: #{vision_mamba_forward.3} parent=1 // pred_region
      _
    $region125: #{vision_mamba_forward.3} parent=1 // pred_fallthru
      _
    %v135 = vld [vmem:[%s1] sm:$0xff]
    %v136 = vld [vmem:[%s1 + $0x8] sm:$0xff]
    %v137 = vld [vmem:[%s11] sm:$0xf]
    %v138 = vld [vmem:[%s11 + $0x4] sm:$0xf]
    %v139 = vld [vmem:[%s11 + $0x8] sm:$0xf]
    %v140 = vld [vmem:[%s11 + $0xc] sm:$0xf]
    %v141 = vld [vmem:[%s11 + $0x10] sm:$0xf]
    %v142 = vld [vmem:[%s11 + $0x14] sm:$0xf]
    %v143 = vld [vmem:[%s11 + $0x18] sm:$0xf]
    %v144 = vld [vmem:[%s11 + $0x1c] sm:$0xf]
    %v145 = vld [vmem:[%s11 + $0x20] sm:$0xf]
    %v146 = vld [vmem:[%s11 + $0x24] sm:$0xf]
    %v147 = vld [vmem:[%s11 + $0x28] sm:$0xf]
    %v148 = vld [vmem:[%s11 + $0x2c] sm:$0xf]
    %v149 = vld [vmem:[%s11 + $0x30] sm:$0xf]
    %v150 = vld [vmem:[%s11 + $0x34] sm:$0xf]
    %v151 = vld [vmem:[%s11 + $0x38] sm:$0xf]
    %v152 = vld [vmem:[%s11 + $0x3c] sm:$0xf]
    %v153 = vld [vmem:[%s11 + $0x40] sm:$0xf]
    %v154 = vld [vmem:[%s11 + $0x44] sm:$0xf]
    %v155 = vld [vmem:[%s11 + $0x48] sm:$0xf]
    %v156 = vld [vmem:[%s11 + $0x4c] sm:$0xf]
    %v157 = vld [vmem:[%s11 + $0x50] sm:$0xf]
    %v158 = vld [vmem:[%s11 + $0x54] sm:$0xf]
    %v159 = vld [vmem:[%s11 + $0x58] sm:$0xf]
    %v160 = vld [vmem:[%s11 + $0x5c] sm:$0xf]
    %v161 = vpack.c.bf16 %v135, %v135
    %v162 = vpack.c.bf16 %v136, %v136
    %v163 = vld [vmem:[%s13] sm:$0x1]
    %v165 = vlaneseq
    %v166 = vshrl.u32 %v165, 7
    %v167 = vsub.s32 0, %v166
    %v168 = vrot.slane %v163, %v167
    %v194 = vunpack.c.l.b16 %v137
    %v195 = vunpack.c.l.b16 %v138
    %v196 = vunpack.c.l.b16 %v139
    %v197 = vunpack.c.l.b16 %v140
    %v198 = vunpack.c.l.b16 %v141
    %v199 = vunpack.c.l.b16 %v142
    %v200 = vunpack.c.l.b16 %v143
    %v201 = vunpack.c.l.b16 %v144
    %v202 = vunpack.c.l.b16 %v145
    %v203 = vunpack.c.l.b16 %v146
    %v204 = vunpack.c.l.b16 %v147
    %v205 = vunpack.c.l.b16 %v148
    %v206 = vunpack.c.l.b16 %v149
    %v207 = vunpack.c.l.b16 %v150
    %v208 = vunpack.c.l.b16 %v151
    %v209 = vunpack.c.l.b16 %v152
    %v210 = vunpack.c.l.b16 %v153
    %v211 = vunpack.c.l.b16 %v154
    %v212 = vunpack.c.l.b16 %v155
    %v213 = vunpack.c.l.b16 %v156
    %v214 = vunpack.c.l.b16 %v157
    %v215 = vunpack.c.l.b16 %v158
    %v216 = vunpack.c.l.b16 %v159
    %v217 = vunpack.c.l.b16 %v160
    %v218 = vpack.c.b16 %v195, %v194
    %v219 = vpack.c.b16 %v197, %v196
    %v220 = vpack.c.b16 %v199, %v198
    %v221 = vpack.c.b16 %v201, %v200
    %v222 = vpack.c.b16 %v203, %v202
    %v223 = vpack.c.b16 %v205, %v204
    %v224 = vpack.c.b16 %v207, %v206
    %v225 = vpack.c.b16 %v209, %v208
    %v226 = vpack.c.b16 %v211, %v210
    %v227 = vpack.c.b16 %v213, %v212
    %v228 = vpack.c.b16 %v215, %v214
    %v229 = vpack.c.b16 %v217, %v216
    %vm242 = vcmask 523264
    %v244 = vsel %vm242, %v162, 0
    %246 = vmatprep.subr.bf16.mxu0 0
    %247 = vmatpush1.bf16.msra.mxu0 %v225
    %248 = vmatprep.subr.bf16.mxu0 0
    %249 = vmatpush1.bf16.msra.mxu0 %v224
    %250 = vmatprep.subr.bf16.mxu0 0
    %251 = vmatpush1.bf16.msra.mxu0 %v223
    %252 = vmatprep.subr.bf16.mxu0 0
    %253 = vmatpush1.bf16.msra.mxu0 %v222
    %254 = vmatprep.subr.bf16.mxu0 0
    %255 = vmatpush1.bf16.msra.mxu0 %v221
    %256 = vmatprep.subr.bf16.mxu0 0
    %257 = vmatpush1.bf16.msra.mxu0 %v220
    %258 = vmatprep.subr.bf16.mxu0 0
    %259 = vmatpush1.bf16.msra.mxu0 %v219
    %260 = vmatprep.subr.bf16.mxu0 0
    %261 = vmatpush1.bf16.msra.mxu0 %v218
    %262 = vmatprep.subr.bf16.mxu0 0
    %263 = vmatpush2.bf16.msra.mxu0 0
    %264 = vmatprep.subr.bf16.mxu0 0
    %265 = vmatpush2.bf16.msra.mxu0 0
    %266 = vmatprep.subr.bf16.mxu0 0
    %267 = vmatpush2.bf16.msra.mxu0 0
    %268 = vmatprep.subr.bf16.mxu0 0
    %269 = vmatpush2.bf16.msra.mxu0 0
    %270 = vmatprep.subr.bf16.mxu0 0
    %271 = vmatpush2.bf16.msra.mxu0 %v229
    %272 = vmatprep.subr.bf16.mxu0 0
    %273 = vmatpush2.bf16.msra.mxu0 %v228
    %274 = vmatprep.subr.bf16.mxu0 0
    %275 = vmatpush2.bf16.msra.mxu0 %v227
    %276 = vmatprep.subr.bf16.mxu0 0
    %277 = vmatpush2.bf16.msra.mxu0 %v226
    %278 = vmatprep.mubr.bf16.mxu0 %v244
    %279 = vmatmul.mubr.bf16.gmra.mxu0 %v161
    %v280 = vpop.f32.mrf.mxu0
    %v281 = vadd.f32 %v168, %v280
    %v282 = vpop.f32.mrf.mxu0
    %v283 = vpop.f32.mrf.mxu0
    %v284 = vpop.f32.mrf.mxu0
    %285 = vdwg.mxu0
    %v286 = vld [vmem:[%s15] sm:$0x1]
    %v288 = vlaneseq
    %v289 = vshrl.u32 %v288, 7
    %v290 = vsub.s32 0, %v289
    %v291 = vrot.slane %v286, %v290
    %v294 = vrot.slane %v281, 7
    %v296 = vrot.slane %v281, 6
    %vm298 = vcmask 1041408
    %v299 = vsel %vm298, %v281, %v291
    %vm300 = vcmask 1042432
    %v301 = vsel %vm300, %v299, %v294
    %vm302 = vcmask 1044480
    %v303 = vsel %vm302, %v301, %v294
    %vm304 = vcmask 1046528
    %v305 = vsel %vm304, %v303, %v291
    %v306 = vld [vmem:[%s3] sm:$0xff]
    %v307 = vld [vmem:[%s3 + $0x8] sm:$0x3]
    %vm308 = vcmp.lt.f32.partialorder %v306, 2.0
    %vm309 = vcmp.lt.f32.partialorder %v307, 2.0
    %v310 = vsel %vm308, 1, 0
    %v311 = vsel %vm309, 1, 0
    %v312 = vcvt.s32.f32 %v310
    %v313 = vcvt.s32.f32 %v311
    %vm314 = vcmp.gt.f32.partialorder %v306, 2.0
    %vm315 = vcmp.gt.f32.partialorder %v307, 2.0
    %v316 = vsel %vm314, 1, 0
    %v317 = vsel %vm315, 1, 0
    %v318 = vcvt.s32.f32 %v316
    %v319 = vcvt.s32.f32 %v317
    %v320 = vld [vmem:[%s5] sm:$0xff]
    %v321 = vld [vmem:[%s5 + $0x8] sm:$0xff]
    %v322 = vld [vmem:[%s5 + $0x10] sm:$0xff]
    %v323 = vld [vmem:[%s5 + $0x18] sm:$0xff]
    %v324 = vld [vmem:[%s5 + $0x20] sm:$0xff]
    %v325 = vld [vmem:[%s5 + $0x28] sm:$0xff]
    %v326 = vld [vmem:[%s5 + $0x30] sm:$0xff]
    %v327 = vld [vmem:[%s5 + $0x38] sm:$0xff]
    %v328 = vld [vmem:[%s5 + $0x40] sm:$0xff]
    %v329 = vld [vmem:[%s5 + $0x48] sm:$0xff]
    %v330 = vld [vmem:[%s7] sm:$0xff]
    %v331 = vld [vmem:[%s7 + $0x8] sm:$0xff]
    %v332 = vld [vmem:[%s7 + $0x10] sm:$0xff]
    %v333 = vld [vmem:[%s7 + $0x18] sm:$0xff]
    %v334 = vld [vmem:[%s7 + $0x20] sm:$0xff]
    %v335 = vld [vmem:[%s7 + $0x28] sm:$0xff]
    %v336 = vld [vmem:[%s7 + $0x30] sm:$0xff]
    %v337 = vld [vmem:[%s7 + $0x38] sm:$0xff]
    %v338 = vld [vmem:[%s7 + $0x40] sm:$0xff]
    %v339 = vld [vmem:[%s7 + $0x48] sm:$0xff]
    %v340 = vld [vmem:[%s9] sm:$0xff]
    %v341 = vld [vmem:[%s9 + $0x8] sm:$0x3]
    %v342 = vld [vmem:[%s29] sm:$0x1]
    %v343 = vld [vmem:[%s31] sm:$0x1]
    %v344 = vld [vmem:[%s17] sm:$0xf]
    %v345 = vld [vmem:[%s17 + $0x4] sm:$0xf]
    %v346 = vld [vmem:[%s17 + $0x8] sm:$0xf]
    %v347 = vld [vmem:[%s17 + $0xc] sm:$0xf]
    %v348 = vld [vmem:[%s19] sm:$0x1]
    %v349 = vld [vmem:[%s21] sm:$0xf]
    %v350 = vld [vmem:[%s21 + $0x4] sm:$0xf]
    %v351 = vld [vmem:[%s21 + $0x8] sm:$0xf]
    %v352 = vld [vmem:[%s21 + $0xc] sm:$0xf]
    %v353 = vld [vmem:[%s21 + $0x10] sm:$0xf]
    %v354 = vld [vmem:[%s21 + $0x14] sm:$0xf]
    %v355 = vld [vmem:[%s21 + $0x18] sm:$0xf]
    %v356 = vld [vmem:[%s21 + $0x1c] sm:$0xf]
    %v357 = vld [vmem:[%s23] sm:$0x1]
    %v358 = vld [vmem:[%s25] sm:$0xf]
    %v359 = vld [vmem:[%s25 + $0x4] sm:$0xf]
    %v360 = vld [vmem:[%s25 + $0x8] sm:$0xf]
    %v361 = vld [vmem:[%s25 + $0xc] sm:$0xf]
    %v362 = vld [vmem:[%s27] sm:$0x1]
    %v363 = vpack.c.bf16 %v296, %v305
    %v365 = vlaneseq
    %v366 = vshrl.u32 %v365, 7
    %v367 = vsub.s32 0, %v366
    %v368 = vrot.slane %v348, %v367
    %v374 = vunpack.c.l.b16 %v344
    %v375 = vunpack.c.l.b16 %v345
    %v376 = vunpack.c.l.b16 %v346
    %v377 = vunpack.c.l.b16 %v347
    %v378 = vpack.c.b16 %v375, %v374
    %v379 = vpack.c.b16 %v377, %v376
    %vm382 = vcmask 261120
    %v384 = vsel %vm382, %v363, 0
    %386 = vmatprep.subr.bf16.mxu0 0
    %387 = vmatpush1.bf16.msra.mxu0 0
    %388 = vmatprep.subr.bf16.mxu0 0
    %389 = vmatpush1.bf16.msra.mxu0 0
    %390 = vmatprep.subr.bf16.mxu0 0
    %391 = vmatpush1.bf16.msra.mxu0 0
    %392 = vmatprep.subr.bf16.mxu0 0
    %393 = vmatpush1.bf16.msra.mxu0 0
    %394 = vmatprep.subr.bf16.mxu0 0
    %395 = vmatpush1.bf16.msra.mxu0 0
    %396 = vmatprep.subr.bf16.mxu0 0
    %397 = vmatpush1.bf16.msra.mxu0 0
    %398 = vmatprep.subr.bf16.mxu0 0
    %399 = vmatpush1.bf16.msra.mxu0 %v379
    %400 = vmatprep.subr.bf16.mxu0 0
    %401 = vmatpush1.bf16.msra.mxu0 %v378
    %402 = vmatprep.subr.bf16.mxu0 0
    %403 = vmatpush2.bf16.msra.mxu0 0
    %404 = vmatprep.subr.bf16.mxu0 0
    %405 = vmatpush2.bf16.msra.mxu0 0
    %406 = vmatprep.subr.bf16.mxu0 0
    %407 = vmatpush2.bf16.msra.mxu0 0
    %408 = vmatprep.subr.bf16.mxu0 0
    %409 = vmatpush2.bf16.msra.mxu0 0
    %410 = vmatprep.subr.bf16.mxu0 0
    %411 = vmatpush2.bf16.msra.mxu0 0
    %412 = vmatprep.subr.bf16.mxu0 0
    %413 = vmatpush2.bf16.msra.mxu0 0
    %414 = vmatprep.subr.bf16.mxu0 0
    %415 = vmatpush2.bf16.msra.mxu0 0
    %416 = vmatprep.subr.bf16.mxu0 0
    %417 = vmatpush2.bf16.msra.mxu0 0
    %418 = vmatprep.mubr.bf16.mxu0 0
    %419 = vmatmul.mubr.bf16.gmra.mxu0 %v384
    %v420 = vpop.f32.mrf.mxu0
    %v421 = vadd.f32 %v368, %v420
    %v422 = vpop.f32.mrf.mxu0
    %v423 = vpop.f32.mrf.mxu0
    %v424 = vadd.f32 %v368, %v423
    %v425 = vpop.f32.mrf.mxu0
    %426 = vdwg.mxu0
    %v427 = vpack.c.bf16 %v424, %v421
    %v429 = vlaneseq
    %v430 = vshrl.u32 %v429, 7
    %v431 = vsub.s32 0, %v430
    %v432 = vrot.slane %v357, %v431
    %v442 = vunpack.c.l.b16 %v349
    %v443 = vunpack.c.l.b16 %v350
    %v444 = vunpack.c.l.b16 %v351
    %v445 = vunpack.c.l.b16 %v352
    %v446 = vunpack.c.l.b16 %v353
    %v447 = vunpack.c.l.b16 %v354
    %v448 = vunpack.c.l.b16 %v355
    %v449 = vunpack.c.l.b16 %v356
    %v450 = vpack.c.b16 %v443, %v442
    %v451 = vpack.c.b16 %v445, %v444
    %v452 = vpack.c.b16 %v447, %v446
    %v453 = vpack.c.b16 %v449, %v448
    %v459 = vsel %vm242, %v427, 0
    %461 = vmatprep.subr.bf16.mxu0 0
    %462 = vmatpush1.bf16.msra.mxu0 0
    %463 = vmatprep.subr.bf16.mxu0 0
    %464 = vmatpush1.bf16.msra.mxu0 0
    %465 = vmatprep.subr.bf16.mxu0 0
    %466 = vmatpush1.bf16.msra.mxu0 0
    %467 = vmatprep.subr.bf16.mxu0 0
    %468 = vmatpush1.bf16.msra.mxu0 0
    %469 = vmatprep.subr.bf16.mxu0 0
    %470 = vmatpush1.bf16.msra.mxu0 %v453
    %471 = vmatprep.subr.bf16.mxu0 0
    %472 = vmatpush1.bf16.msra.mxu0 %v452
    %473 = vmatprep.subr.bf16.mxu0 0
    %474 = vmatpush1.bf16.msra.mxu0 %v451
    %475 = vmatprep.subr.bf16.mxu0 0
    %476 = vmatpush1.bf16.msra.mxu0 %v450
    %477 = vmatprep.subr.bf16.mxu0 0
    %478 = vmatpush2.bf16.msra.mxu0 0
    %479 = vmatprep.subr.bf16.mxu0 0
    %480 = vmatpush2.bf16.msra.mxu0 0
    %481 = vmatprep.subr.bf16.mxu0 0
    %482 = vmatpush2.bf16.msra.mxu0 0
    %483 = vmatprep.subr.bf16.mxu0 0
    %484 = vmatpush2.bf16.msra.mxu0 0
    %485 = vmatprep.subr.bf16.mxu0 0
    %486 = vmatpush2.bf16.msra.mxu0 0
    %487 = vmatprep.subr.bf16.mxu0 0
    %488 = vmatpush2.bf16.msra.mxu0 0
    %489 = vmatprep.subr.bf16.mxu0 0
    %490 = vmatpush2.bf16.msra.mxu0 0
    %491 = vmatprep.subr.bf16.mxu0 0
    %492 = vmatpush2.bf16.msra.mxu0 0
    %493 = vmatprep.mubr.bf16.mxu0 0
    %494 = vmatmul.mubr.bf16.gmra.mxu0 %v459
    %v495 = vpop.f32.mrf.mxu0
    %v496 = vadd.f32 %v432, %v495
    %v497 = vpop.f32.mrf.mxu0
    %v498 = vpop.f32.mrf.mxu0
    %v499 = vadd.f32 %v432, %v498
    %v500 = vpop.f32.mrf.mxu0
    %501 = vdwg.mxu0
    %v502 = vxor.u32 %v496, 2147483648
    %v503 = vxor.u32 %v499, 2147483648
    %v504 = vmul.f32 %v502, 1.442695
    %v505 = vpow.pop %v504
    %v506 = vmul.f32 %v503, 1.442695
    %v507 = vpow.pop %v506
    %v508 = vadd.f32 %v505, 1.0
    %v509 = vadd.f32 %v507, 1.0
    %v510 = vrcp.pop %v508
    %v511 = vmul.f32 1.0, %v510
    %v512 = vrcp.pop %v509
    %v513 = vmul.f32 1.0, %v512
    %v514 = vmul.f32 %v496, %v511
    %v515 = vmul.f32 %v499, %v513
    %v517 = vlaneseq
    %v518 = vshrl.u32 %v517, 7
    %v519 = vsub.s32 0, %v518
    %v520 = vrot.slane %v362, %v519
    %v526 = vunpack.c.l.b16 %v358
    %v527 = vunpack.c.l.b16 %v359
    %v528 = vunpack.c.l.b16 %v360
    %v529 = vunpack.c.l.b16 %v361
    %v530 = vpack.c.b16 %v527, %v526
    %v531 = vpack.c.b16 %v529, %v528
    %534 = vmatprep.subr.bf16.mxu0 0
    %535 = vmatpush1.bf16.msra.mxu0 0
    %536 = vmatprep.subr.bf16.mxu0 0
    %537 = vmatpush1.bf16.msra.mxu0 0
    %538 = vmatprep.subr.bf16.mxu0 0
    %539 = vmatpush1.bf16.msra.mxu0 0
    %540 = vmatprep.subr.bf16.mxu0 0
    %541 = vmatpush1.bf16.msra.mxu0 0
    %542 = vmatprep.subr.bf16.mxu0 0
    %543 = vmatpush1.bf16.msra.mxu0 0
    %544 = vmatprep.subr.bf16.mxu0 0
    %545 = vmatpush1.bf16.msra.mxu0 0
    %546 = vmatprep.subr.bf16.mxu0 0
    %547 = vmatpush1.bf16.msra.mxu0 %v531
    %548 = vmatprep.subr.bf16.mxu0 0
    %549 = vmatpush1.bf16.msra.mxu0 %v530
    %550 = vmatprep.subr.bf16.mxu0 0
    %551 = vmatpush2.bf16.msra.mxu0 0
    %552 = vmatprep.subr.bf16.mxu0 0
    %553 = vmatpush2.bf16.msra.mxu0 0
    %554 = vmatprep.subr.bf16.mxu0 0
    %555 = vmatpush2.bf16.msra.mxu0 0
    %556 = vmatprep.subr.bf16.mxu0 0
    %557 = vmatpush2.bf16.msra.mxu0 0
    %558 = vmatprep.subr.bf16.mxu0 0
    %559 = vmatpush2.bf16.msra.mxu0 0
    %560 = vmatprep.subr.bf16.mxu0 0
    %561 = vmatpush2.bf16.msra.mxu0 0
    %562 = vmatprep.subr.bf16.mxu0 0
    %563 = vmatpush2.bf16.msra.mxu0 0
    %564 = vmatprep.subr.bf16.mxu0 0
    %565 = vmatpush2.bf16.msra.mxu0 0
    %566 = vmatprep.mubr.bf16.mxu0 0
    %567 = vmatmul.mubr.bf16.gmra.mxu0 %v384
    %v568 = vpop.f32.mrf.mxu0
    %v569 = vadd.f32 %v520, %v568
    %v570 = vpop.f32.mrf.mxu0
    %v571 = vpop.f32.mrf.mxu0
    %v572 = vadd.f32 %v520, %v571
    %v573 = vpop.f32.mrf.mxu0
    %574 = vdwg.mxu0
    %v575 = vxor.u32 %v569, 2147483648
    %v576 = vxor.u32 %v572, 2147483648
    %v577 = vmul.f32 %v575, 1.442695
    %v578 = vpow.pop %v577
    %v579 = vmul.f32 %v576, 1.442695
    %v580 = vpow.pop %v579
    %v581 = vadd.f32 %v578, 1.0
    %v582 = vadd.f32 %v580, 1.0
    %v583 = vrcp.pop %v581
    %v584 = vmul.f32 1.0, %v583
    %v585 = vrcp.pop %v582
    %v586 = vmul.f32 1.0, %v585
    %v587 = vmul.f32 %v569, %v584
    %v588 = vmul.f32 %v572, %v586
    %v589 = vlaneseq
    %v590 = vshrl.u32 %v589, 7
    %v591 = vsub.s32 0, %v590
    %v592 = vrot.slane %v342, %v591
    %v593 = vmul.f32 %v514, %v592
    %v594 = vmul.f32 %v515, %v592
    %v595 = vlaneseq
    %v596 = vshrl.u32 %v595, 7
    %v597 = vsub.s32 0, %v596
    %v598 = vrot.slane %v343, %v597
    %v599 = vmul.f32 %v587, %v598
    %v600 = vmul.f32 %v588, %v598
    %v601 = vadd.f32 %v593, %v599
    %v602 = vadd.f32 %v594, %v600
    %604 = vset.pattern.permute.xlu0 0
    %605 = vperm.xlu0 %604, %v312
    %v606 = vpop.permute.xlu0 %605
    %609 = vset.pattern.permute.xlu0 0
    %610 = vperm.xlu0 %609, %v313
    %v611 = vpop.permute.xlu0 %610
    %v613 = vmul.f32 %v606, %v601
    %v614 = vmul.f32 %v611, %v602
    %v615 = vadd.f32 %v305, %v613
    %v616 = vadd.f32 %v296, %v614
    %v617 = vpack.c.bf16 %v616, %v615
    %v619 = vsel %vm382, %v617, 0
    %621 = vmatprep.subr.bf16.mxu0 0
    %622 = vmatpush1.bf16.msra.mxu0 0
    %623 = vmatprep.subr.bf16.mxu0 0
    %624 = vmatpush1.bf16.msra.mxu0 0
    %625 = vmatprep.subr.bf16.mxu0 0
    %626 = vmatpush1.bf16.msra.mxu0 0
    %627 = vmatprep.subr.bf16.mxu0 0
    %628 = vmatpush1.bf16.msra.mxu0 0
    %629 = vmatprep.subr.bf16.mxu0 0
    %630 = vmatpush1.bf16.msra.mxu0 0
    %631 = vmatprep.subr.bf16.mxu0 0
    %632 = vmatpush1.bf16.msra.mxu0 0
    %633 = vmatprep.subr.bf16.mxu0 0
    %634 = vmatpush1.bf16.msra.mxu0 %v531
    %635 = vmatprep.subr.bf16.mxu0 0
    %636 = vmatpush1.bf16.msra.mxu0 %v530
    %637 = vmatprep.subr.bf16.mxu0 0
    %638 = vmatpush2.bf16.msra.mxu0 0
    %639 = vmatprep.subr.bf16.mxu0 0
    %640 = vmatpush2.bf16.msra.mxu0 0
    %641 = vmatprep.subr.bf16.mxu0 0
    %642 = vmatpush2.bf16.msra.mxu0 0
    %643 = vmatprep.subr.bf16.mxu0 0
    %644 = vmatpush2.bf16.msra.mxu0 0
    %645 = vmatprep.subr.bf16.mxu0 0
    %646 = vmatpush2.bf16.msra.mxu0 0
    %647 = vmatprep.subr.bf16.mxu0 0
    %648 = vmatpush2.bf16.msra.mxu0 0
    %649 = vmatprep.subr.bf16.mxu0 0
    %650 = vmatpush2.bf16.msra.mxu0 0
    %651 = vmatprep.subr.bf16.mxu0 0
    %652 = vmatpush2.bf16.msra.mxu0 0
    %653 = vmatprep.mubr.bf16.mxu0 0
    %654 = vmatmul.mubr.bf16.gmra.mxu0 %v619
    %v655 = vpop.f32.mrf.mxu0
    %v656 = vadd.f32 %v520, %v655
    %v657 = vpop.f32.mrf.mxu0
    %v658 = vpop.f32.mrf.mxu0
    %v659 = vpop.f32.mrf.mxu0
    %660 = vdwg.mxu0
    %v661 = vxor.u32 %v656, 2147483648
    %v662 = vmul.f32 %v661, 1.442695
    %v663 = vpow.pop %v662
    %v664 = vadd.f32 %v663, 1.0
    %v665 = vrcp.pop %v664
    %v666 = vmul.f32 1.0, %v665
    %v667 = vmul.f32 %v656, %v666
    %v669 = vrot.slane %v667, 5
    %v671 = vsel %vm300, 0.0, %v669
    %v672 = vmul.f32 %v671, %v598
    %v673 = vmul.f32 %v669, %v598
    %v674 = vadd.f32 %v593, %v672
    %v675 = vadd.f32 %v594, %v673
    %677 = vset.pattern.permute.xlu0 0
    %678 = vperm.xlu0 %677, %v318
    %v679 = vpop.permute.xlu0 %678
    %682 = vset.pattern.permute.xlu0 0
    %683 = vperm.xlu0 %682, %v319
    %v684 = vpop.permute.xlu0 %683
    %v686 = vmul.f32 %v679, %v674
    %v687 = vmul.f32 %v684, %v675
    %v688 = vadd.f32 %v615, %v686
    %v689 = vadd.f32 %v616, %v687
    %v690 = vsel %vm382, %v688, 0.0
    %691 = vadd.xlane.f32.xlu0 %v690
    %v692 = vpop.xlane.xlu0 %691
    %vm693 = vcmask 254976
    %v694 = vsel %vm693, %v689, 0.0
    %695 = vadd.xlane.f32.xlu0 %v694
    %v696 = vpop.xlane.xlu0 %695
    %v697 = vrcp.pop 32.0
    %v698 = vmul.f32 %v692, %v697
    %v699 = vmul.f32 %v696, %v697
    %v700 = vsub.f32 %v688, %v698
    %v701 = vsub.f32 %v689, %v699
    %v702 = vmul.f32 %v700, %v700
    %v703 = vmul.f32 %v701, %v701
    %v704 = vsel %vm382, %v702, 0.0
    %705 = vadd.xlane.f32.xlu0 %v704
    %v706 = vpop.xlane.xlu0 %705
    %v707 = vsel %vm693, %v703, 0.0
    %708 = vadd.xlane.f32.xlu0 %v707
    %v709 = vpop.xlane.xlu0 %708
    %v710 = vmul.f32 %v706, %v697
    %v711 = vmul.f32 %v709, %v697
    %v712 = vadd.f32 %v710, 1e-05
    %v713 = vadd.f32 %v711, 1e-05
    %v714 = vrsqrt.pop %v712
    %v715 = vrsqrt.pop %v713
    %v716 = vmul.f32 %v700, %v714
    %v717 = vmul.f32 %v701, %v715
    %v718 = vld [vmem:[%s33] sm:$0x1]
    %v720 = vlaneseq
    %v721 = vshrl.u32 %v720, 7
    %v722 = vsub.s32 0, %v721
    %v723 = vrot.slane %v718, %v722
    %v725 = vmul.f32 %v716, %v723
    %v726 = vmul.f32 %v717, %v723
    %v727 = vld [vmem:[%s35] sm:$0x1]
    %v729 = vlaneseq
    %v730 = vshrl.u32 %v729, 7
    %v731 = vsub.s32 0, %v730
    %v732 = vrot.slane %v727, %v731
    %v734 = vadd.f32 %v725, %v732
    %v735 = vadd.f32 %v726, %v732
    %v736 = vld [vmem:[%s37] sm:$0xf]
    %v737 = vld [vmem:[%s37 + $0x4] sm:$0xf]
    %v738 = vld [vmem:[%s37 + $0x8] sm:$0xf]
    %v739 = vld [vmem:[%s37 + $0xc] sm:$0xf]
    %v740 = vpack.c.bf16 %v735, %v734
    %v745 = vunpack.c.l.b16 %v736
    %v746 = vunpack.c.l.b16 %v737
    %v747 = vunpack.c.l.b16 %v738
    %v748 = vunpack.c.l.b16 %v739
    %v749 = vpack.c.b16 %v746, %v745
    %v750 = vpack.c.b16 %v748, %v747
    %v754 = vsel %vm382, %v740, 0
    %756 = vmatprep.subr.bf16.mxu0 0
    %757 = vmatpush1.bf16.msra.mxu0 0
    %758 = vmatprep.subr.bf16.mxu0 0
    %759 = vmatpush1.bf16.msra.mxu0 0
    %760 = vmatprep.subr.bf16.mxu0 0
    %761 = vmatpush1.bf16.msra.mxu0 0
    %762 = vmatprep.subr.bf16.mxu0 0
    %763 = vmatpush1.bf16.msra.mxu0 0
    %764 = vmatprep.subr.bf16.mxu0 0
    %765 = vmatpush1.bf16.msra.mxu0 0
    %766 = vmatprep.subr.bf16.mxu0 0
    %767 = vmatpush1.bf16.msra.mxu0 0
    %768 = vmatprep.subr.bf16.mxu0 0
    %769 = vmatpush1.bf16.msra.mxu0 %v750
    %770 = vmatprep.subr.bf16.mxu0 0
    %771 = vmatpush1.bf16.msra.mxu0 %v749
    %772 = vmatprep.subr.bf16.mxu0 0
    %773 = vmatpush2.bf16.msra.mxu0 0
    %774 = vmatprep.subr.bf16.mxu0 0
    %775 = vmatpush2.bf16.msra.mxu0 0
    %776 = vmatprep.subr.bf16.mxu0 0
    %777 = vmatpush2.bf16.msra.mxu0 0
    %778 = vmatprep.subr.bf16.mxu0 0
    %779 = vmatpush2.bf16.msra.mxu0 0
    %780 = vmatprep.subr.bf16.mxu0 0
    %781 = vmatpush2.bf16.msra.mxu0 0
    %782 = vmatprep.subr.bf16.mxu0 0
    %783 = vmatpush2.bf16.msra.mxu0 0
    %784 = vmatprep.subr.bf16.mxu0 0
    %785 = vmatpush2.bf16.msra.mxu0 0
    %786 = vmatprep.subr.bf16.mxu0 0
    %787 = vmatpush2.bf16.msra.mxu0 0
    %788 = vmatprep.mubr.bf16.mxu0 0
    %789 = vmatmul.mubr.bf16.gmra.mxu0 %v754
    %v790 = vpop.f32.mrf.mxu0
    %v791 = vadd.f32 0.0, %v790
    %v792 = vpop.f32.mrf.mxu0
    %v793 = vpop.f32.mrf.mxu0
    %v794 = vadd.f32 0.0, %v793
    %v795 = vpop.f32.mrf.mxu0
    %796 = vdwg.mxu0
    %v797 = vld [vmem:[%s39] sm:$0xf]
    %v798 = vld [vmem:[%s41] sm:$0x1]
    %v801 = vrot.slane %v791, 5
    %v802 = vrot.slane %v794, 5
    %v803 = vsel %vm300, %v801, %v802
    %v806 = vsel %vm300, 0.0, %v801
    %v807 = vlaneseq
    %v808 = vshrl.u32 %v807, 7
    %v809 = vsub.s32 0, %v808
    %v810 = vrot.slane %v797, %v809
    %v811 = vmul.f32 %v806, %v810
    %v812 = vmul.f32 %v803, %v810
    %vm813 = vcmp.ge.f32.partialorder %v306, 3.0
    %vm814 = vcmp.ge.f32.partialorder %v307, 3.0
    %v815 = vsel %vm813, 1, 0
    %v816 = vsel %vm814, 1, 0
    %817 = vset.pattern.permute.xlu0 0
    %818 = vperm.xlu0 %817, %v815
    %v819 = vpop.permute.xlu0 %818
    %820 = vset.pattern.permute.xlu0 0
    %821 = vperm.xlu0 %820, %v816
    %v822 = vpop.permute.xlu0 %821
    %vm823 = vcmp.eq.s32.totalorder %v819, 1
    %vm824 = vcmp.eq.s32.totalorder %v822, 1
    %v825 = vsel %vm823, %v811, 0.0
    %v826 = vsel %vm824, %v812, 0.0
    %v828 = vlaneseq
    %v829 = vshrl.u32 %v828, 7
    %v830 = vsub.s32 0, %v829
    %v831 = vrot.slane %v798, %v830
    %v833 = vadd.f32 %v831, %v825
    %v834 = vadd.f32 %v831, %v826
    %v835 = vlaneseq
    %v836 = vshrl.u32 %v835, 7
    %v837 = vsub.s32 1, %v836
    %v838 = vrot.slane %v797, %v837
    %v839 = vmul.f32 %v806, %v838
    %v840 = vmul.f32 %v803, %v838
    %vm841 = vcmp.ge.f32.partialorder %v306, 2.0
    %vm842 = vcmp.ge.f32.partialorder %v307, 2.0
    %v843 = vsel %vm841, 1, 0
    %v844 = vsel %vm842, 1, 0
    %845 = vset.pattern.permute.xlu0 0
    %846 = vperm.xlu0 %845, %v843
    %v847 = vpop.permute.xlu0 %846
    %848 = vset.pattern.permute.xlu0 0
    %849 = vperm.xlu0 %848, %v844
    %v850 = vpop.permute.xlu0 %849
    %vm851 = vcmp.eq.s32.totalorder %v847, 1
    %vm852 = vcmp.eq.s32.totalorder %v850, 1
    %v855 = vrot.slane %v839, 1
    %v856 = vrot.slane %v840, 1
    %v857 = vsel %vm304, %v855, %v856
    %v860 = vsel %vm851, %v857, 0.0
    %v861 = vsel %vm852, %v856, 0.0
    %v862 = vadd.f32 %v833, %v860
    %v863 = vadd.f32 %v834, %v861
    %v864 = vlaneseq
    %v865 = vshrl.u32 %v864, 7
    %v866 = vsub.s32 2, %v865
    %v867 = vrot.slane %v797, %v866
    %v868 = vmul.f32 %v806, %v867
    %v869 = vmul.f32 %v803, %v867
    %vm870 = vcmp.ge.f32.partialorder %v306, 1.0
    %vm871 = vcmp.ge.f32.partialorder %v307, 1.0
    %v872 = vsel %vm870, 1, 0
    %v873 = vsel %vm871, 1, 0
    %874 = vset.pattern.permute.xlu0 0
    %875 = vperm.xlu0 %874, %v872
    %v876 = vpop.permute.xlu0 %875
    %877 = vset.pattern.permute.xlu0 0
    %878 = vperm.xlu0 %877, %v873
    %v879 = vpop.permute.xlu0 %878
    %vm880 = vcmp.eq.s32.totalorder %v876, 1
    %vm881 = vcmp.eq.s32.totalorder %v879, 1
    %vm884 = vcmask 1045504
    %v885 = vrot.slane %v868, 2
    %v886 = vrot.slane %v869, 2
    %v887 = vsel %vm884, %v885, %v886
    %v890 = vsel %vm880, %v887, 0.0
    %v891 = vsel %vm881, %v886, 0.0
    %v892 = vadd.f32 %v862, %v890
    %v893 = vadd.f32 %v863, %v891
    %v894 = vlaneseq
    %v895 = vshrl.u32 %v894, 7
    %v896 = vsub.s32 3, %v895
    %v897 = vrot.slane %v797, %v896
    %v898 = vmul.f32 %v806, %v897
    %v899 = vmul.f32 %v803, %v897
    %v902 = vrot.slane %v898, 3
    %v903 = vrot.slane %v899, 3
    %v904 = vsel %vm302, %v902, %v903
    %v907 = vadd.f32 %v892, %v904
    %v908 = vadd.f32 %v893, %v903
    %v909 = vxor.u32 %v907, 2147483648
    %v910 = vxor.u32 %v908, 2147483648
    %v911 = vmul.f32 %v909, 1.442695
    %v912 = vpow.pop %v911
    %v913 = vmul.f32 %v910, 1.442695
    %v914 = vpow.pop %v913
    %v915 = vadd.f32 %v912, 1.0
    %v916 = vadd.f32 %v914, 1.0
    %v917 = vrcp.pop %v915
    %v918 = vmul.f32 1.0, %v917
    %v919 = vrcp.pop %v916
    %v920 = vmul.f32 1.0, %v919
    %v921 = vmul.f32 %v907, %v918
    %v922 = vmul.f32 %v908, %v920
    %v923 = vld [vmem:[%s43] sm:$0xf]
    %v924 = vld [vmem:[%s43 + $0x4] sm:$0xf]
    %v925 = vld [vmem:[%s43 + $0x8] sm:$0xf]
    %v926 = vld [vmem:[%s43 + $0xc] sm:$0xf]
    %v927 = vld [vmem:[%s43 + $0x10] sm:$0xf]
    %v928 = vld [vmem:[%s43 + $0x14] sm:$0xf]
    %v929 = vld [vmem:[%s43 + $0x18] sm:$0xf]
    %v930 = vld [vmem:[%s43 + $0x1c] sm:$0xf]
    %v931 = vpack.c.bf16 %v922, %v921
    %v932 = vld [vmem:[%s47] sm:$0x1]
    %v934 = vlaneseq
    %v935 = vshrl.u32 %v934, 7
    %v936 = vsub.s32 0, %v935
    %v937 = vrot.slane %v932, %v936
    %v947 = vunpack.c.l.b16 %v923
    %v948 = vunpack.c.l.b16 %v924
    %v949 = vunpack.c.l.b16 %v925
    %v950 = vunpack.c.l.b16 %v926
    %v951 = vunpack.c.l.b16 %v927
    %v952 = vunpack.c.l.b16 %v928
    %v953 = vunpack.c.l.b16 %v929
    %v954 = vunpack.c.l.b16 %v930
    %v955 = vpack.c.b16 %v948, %v947
    %v956 = vpack.c.b16 %v950, %v949
    %v957 = vpack.c.b16 %v952, %v951
    %v958 = vpack.c.b16 %v954, %v953
    %v964 = vsel %vm242, %v931, 0
    %966 = vmatprep.subr.bf16.mxu0 0
    %967 = vmatpush1.bf16.msra.mxu0 0
    %968 = vmatprep.subr.bf16.mxu0 0
    %969 = vmatpush1.bf16.msra.mxu0 0
    %970 = vmatprep.subr.bf16.mxu0 0
    %971 = vmatpush1.bf16.msra.mxu0 0
    %972 = vmatprep.subr.bf16.mxu0 0
    %973 = vmatpush1.bf16.msra.mxu0 0
    %974 = vmatprep.subr.bf16.mxu0 0
    %975 = vmatpush1.bf16.msra.mxu0 %v958
    %976 = vmatprep.subr.bf16.mxu0 0
    %977 = vmatpush1.bf16.msra.mxu0 %v957
    %978 = vmatprep.subr.bf16.mxu0 0
    %979 = vmatpush1.bf16.msra.mxu0 %v956
    %980 = vmatprep.subr.bf16.mxu0 0
    %981 = vmatpush1.bf16.msra.mxu0 %v955
    %982 = vmatprep.subr.bf16.mxu0 0
    %983 = vmatpush2.bf16.msra.mxu0 0
    %984 = vmatprep.subr.bf16.mxu0 0
    %985 = vmatpush2.bf16.msra.mxu0 0
    %986 = vmatprep.subr.bf16.mxu0 0
    %987 = vmatpush2.bf16.msra.mxu0 0
    %988 = vmatprep.subr.bf16.mxu0 0
    %989 = vmatpush2.bf16.msra.mxu0 0
    %990 = vmatprep.subr.bf16.mxu0 0
    %991 = vmatpush2.bf16.msra.mxu0 0
    %992 = vmatprep.subr.bf16.mxu0 0
    %993 = vmatpush2.bf16.msra.mxu0 0
    %994 = vmatprep.subr.bf16.mxu0 0
    %995 = vmatpush2.bf16.msra.mxu0 0
    %996 = vmatprep.subr.bf16.mxu0 0
    %997 = vmatpush2.bf16.msra.mxu0 0
    %998 = vmatprep.mubr.bf16.mxu0 0
    %999 = vmatmul.mubr.bf16.gmra.mxu0 %v964
    %v1000 = vpop.f32.mrf.mxu0
    %v1001 = vadd.f32 %v937, %v1000
    %v1002 = vpop.f32.mrf.mxu0
    %v1003 = vpop.f32.mrf.mxu0
    %v1004 = vadd.f32 %v937, %v1003
    %v1005 = vpop.f32.mrf.mxu0
    %1006 = vdwg.mxu0
    %v1007 = vmax.f32 %v1001, 0.0
    %v1008 = vmax.f32 %v1004, 0.0
    %vm1009 = vcmp.ne.f32.partialorder %v1001, %v1001
    %vm1010 = vcmp.ne.f32.partialorder %v1004, %v1004
    %v1011 = vadd.f32 %v1001, 0.0
    %v1012 = vadd.f32 %v1004, 0.0
    %v1013 = vand.u32 2147483647, %v1001
    %v1014 = vand.u32 2147483647, %v1004
    %v1015 = vsub.f32 0.0, %v1013
    %v1016 = vsub.f32 0.0, %v1014
    %v1017 = vmul.f32 %v1015, 1.442695
    %v1018 = vpow.pop %v1017
    %v1019 = vmul.f32 %v1016, 1.442695
    %v1020 = vpow.pop %v1019
    %v1021 = vadd.f32 %v1018, 1.0
    %v1022 = vlog2.pop %v1021
    %v1023 = vmul.f32 %v1022, 0.6931472
    %v1024 = vmul.f32 -0.5, %v1018
    %v1025 = vadd.f32 %v1024, 1.0
    %v1026 = vmul.f32 %v1025, %v1018
    %v1027 = vand.u32 2147483647, %v1018
    %vm1028 = vcmp.lt.f32.partialorder %v1027, 0.0004427343
    %v1029 = vsel %vm1028, %v1026, %v1023
    %v1030 = vadd.f32 %v1020, 1.0
    %v1031 = vlog2.pop %v1030
    %v1032 = vmul.f32 %v1031, 0.6931472
    %v1033 = vmul.f32 -0.5, %v1020
    %v1034 = vadd.f32 %v1033, 1.0
    %v1035 = vmul.f32 %v1034, %v1020
    %v1036 = vand.u32 2147483647, %v1020
    %vm1037 = vcmp.lt.f32.partialorder %v1036, 0.0004427343
    %v1038 = vsel %vm1037, %v1035, %v1032
    %v1039 = vadd.f32 %v1007, %v1029
    %v1040 = vadd.f32 %v1008, %v1038
    %v1041 = vsel %vm1009, %v1011, %v1039
    %v1042 = vsel %vm1010, %v1012, %v1040
    %v1043 = vld [vmem:[%s45] sm:$0xf]
    %v1044 = vld [vmem:[%s45 + $0x4] sm:$0xf]
    %v1045 = vld [vmem:[%s45 + $0x8] sm:$0xf]
    %v1046 = vld [vmem:[%s45 + $0xc] sm:$0xf]
    %v1047 = vld [vmem:[%s45 + $0x10] sm:$0xf]
    %v1048 = vld [vmem:[%s45 + $0x14] sm:$0xf]
    %v1049 = vld [vmem:[%s45 + $0x18] sm:$0xf]
    %v1050 = vld [vmem:[%s45 + $0x1c] sm:$0xf]
    %v1059 = vunpack.c.l.b16 %v1043
    %v1060 = vunpack.c.l.b16 %v1044
    %v1061 = vunpack.c.l.b16 %v1045
    %v1062 = vunpack.c.l.b16 %v1046
    %v1063 = vunpack.c.l.b16 %v1047
    %v1064 = vunpack.c.l.b16 %v1048
    %v1065 = vunpack.c.l.b16 %v1049
    %v1066 = vunpack.c.l.b16 %v1050
    %v1067 = vpack.c.b16 %v1060, %v1059
    %v1068 = vpack.c.b16 %v1062, %v1061
    %v1069 = vpack.c.b16 %v1064, %v1063
    %v1070 = vpack.c.b16 %v1066, %v1065
    %1075 = vmatprep.subr.bf16.mxu0 0
    %1076 = vmatpush1.bf16.msra.mxu0 0
    %1077 = vmatprep.subr.bf16.mxu0 0
    %1078 = vmatpush1.bf16.msra.mxu0 0
    %1079 = vmatprep.subr.bf16.mxu0 0
    %1080 = vmatpush1.bf16.msra.mxu0 0
    %1081 = vmatprep.subr.bf16.mxu0 0
    %1082 = vmatpush1.bf16.msra.mxu0 0
    %1083 = vmatprep.subr.bf16.mxu0 0
    %1084 = vmatpush1.bf16.msra.mxu0 %v1070
    %1085 = vmatprep.subr.bf16.mxu0 0
    %1086 = vmatpush1.bf16.msra.mxu0 %v1069
    %1087 = vmatprep.subr.bf16.mxu0 0
    %1088 = vmatpush1.bf16.msra.mxu0 %v1068
    %1089 = vmatprep.subr.bf16.mxu0 0
    %1090 = vmatpush1.bf16.msra.mxu0 %v1067
    %1091 = vmatprep.subr.bf16.mxu0 0
    %1092 = vmatpush2.bf16.msra.mxu0 0
    %1093 = vmatprep.subr.bf16.mxu0 0
    %1094 = vmatpush2.bf16.msra.mxu0 0
    %1095 = vmatprep.subr.bf16.mxu0 0
    %1096 = vmatpush2.bf16.msra.mxu0 0
    %1097 = vmatprep.subr.bf16.mxu0 0
    %1098 = vmatpush2.bf16.msra.mxu0 0
    %1099 = vmatprep.subr.bf16.mxu0 0
    %1100 = vmatpush2.bf16.msra.mxu0 0
    %1101 = vmatprep.subr.bf16.mxu0 0
    %1102 = vmatpush2.bf16.msra.mxu0 0
    %1103 = vmatprep.subr.bf16.mxu0 0
    %1104 = vmatpush2.bf16.msra.mxu0 0
    %1105 = vmatprep.subr.bf16.mxu0 0
    %1106 = vmatpush2.bf16.msra.mxu0 0
    %1107 = vmatprep.mubr.bf16.mxu0 0
    %1108 = vmatmul.mubr.bf16.gmra.mxu0 %v964
    %v1109 = vpop.f32.mrf.mxu0
    %v1110 = vadd.f32 0.0, %v1109
    %v1111 = vpop.f32.mrf.mxu0
    %v1112 = vpop.f32.mrf.mxu0
    %v1113 = vadd.f32 0.0, %v1112
    %v1114 = vpop.f32.mrf.mxu0
    %1115 = vdwg.mxu0
    %v1116 = vmul.f32 %v1041, %v921
    %v1117 = vmul.f32 %v1042, %v922
    %vm1118 = vcmask 80896
    %v1120 = vsel %vm1118, %v320, 0
    %v1123 = vsel %vm1118, %v321, 0
    %v1126 = vsel %vm1118, %v322, 0
    %v1129 = vsel %vm1118, %v323, 0
    %v1132 = vsel %vm1118, %v324, 0
    %v1135 = vsel %vm1118, %v325, 0
    %v1138 = vsel %vm1118, %v326, 0
    %v1141 = vsel %vm1118, %v327, 0
    %v1144 = vsel %vm1118, %v328, 0
    %v1147 = vsel %vm1118, %v329, 0
    %v1150 = vsel %vm298, %v1042, 0
    %1152 = vmatprep.subr.mxu0 0.0
    %1153 = vmatpush1.msra.mxu0 0.0
    %1154 = vmatprep.subr.mxu0 0.0
    %1155 = vmatpush1.msra.mxu0 0.0
    %1156 = vmatprep.subr.mxu0 0.0
    %1157 = vmatpush1.msra.mxu0 0.0
    %1158 = vmatprep.subr.mxu0 0.0
    %1159 = vmatpush1.msra.mxu0 0.0
    %1160 = vmatprep.subr.mxu0 0.0
    %1161 = vmatpush1.msra.mxu0 0.0
    %1162 = vmatprep.subr.mxu0 0.0
    %1163 = vmatpush1.msra.mxu0 0.0
    %1164 = vmatprep.subr.mxu0 0.0
    %1165 = vmatpush1.msra.mxu0 0.0
    %1166 = vmatprep.subr.mxu0 0.0
    %1167 = vmatpush1.msra.mxu0 0.0
    %1168 = vmatprep.subr.mxu0 0.0
    %1169 = vmatpush1.msra.mxu0 0.0
    %1170 = vmatprep.subr.mxu0 0.0
    %1171 = vmatpush1.msra.mxu0 0.0
    %1172 = vmatprep.subr.mxu0 0.0
    %1173 = vmatpush1.msra.mxu0 0.0
    %1174 = vmatprep.subr.mxu0 0.0
    %1175 = vmatpush1.msra.mxu0 0.0
    %1176 = vmatprep.subr.mxu0 0.0
    %1177 = vmatpush1.msra.mxu0 0.0
    %1178 = vmatprep.subr.mxu0 0.0
    %1179 = vmatpush1.msra.mxu0 0.0
    %1180 = vmatprep.subr.mxu0 0.0
    %1181 = vmatpush1.msra.mxu0 %v1150
    %1182 = vmatprep.subr.mxu0 0.0
    %1183 = vmatpush1.msra.mxu0 %v1041
    %1184 = vmatprep.subr.mxu0 0.0
    %1185 = vmatpush2.msra.mxu0 0.0
    %1186 = vmatprep.subr.mxu0 0.0
    %1187 = vmatpush2.msra.mxu0 0.0
    %1188 = vmatprep.subr.mxu0 0.0
    %1189 = vmatpush2.msra.mxu0 0.0
    %1190 = vmatprep.subr.mxu0 0.0
    %1191 = vmatpush2.msra.mxu0 0.0
    %1192 = vmatprep.subr.mxu0 0.0
    %1193 = vmatpush2.msra.mxu0 0.0
    %1194 = vmatprep.subr.mxu0 0.0
    %1195 = vmatpush2.msra.mxu0 0.0
    %1196 = vmatprep.subr.mxu0 0.0
    %1197 = vmatpush2.msra.mxu0 0.0
    %1198 = vmatprep.subr.mxu0 0.0
    %1199 = vmatpush2.msra.mxu0 0.0
    %1200 = vmatprep.subr.mxu0 0.0
    %1201 = vmatpush2.msra.mxu0 0.0
    %1202 = vmatprep.subr.mxu0 0.0
    %1203 = vmatpush2.msra.mxu0 0.0
    %1204 = vmatprep.subr.mxu0 0.0
    %1205 = vmatpush2.msra.mxu0 0.0
    %1206 = vmatprep.subr.mxu0 0.0
    %1207 = vmatpush2.msra.mxu0 0.0
    %1208 = vmatprep.subr.mxu0 0.0
    %1209 = vmatpush2.msra.mxu0 0.0
    %1210 = vmatprep.subr.mxu0 0.0
    %1211 = vmatpush2.msra.mxu0 0.0
    %1212 = vmatprep.subr.mxu0 0.0
    %1213 = vmatpush2.msra.mxu0 0.0
    %1214 = vmatprep.subr.mxu0 0.0
    %1215 = vmatpush2.msra.mxu0 0.0
    %1216 = vmatprep.mubr.f32.mxu0 0.0
    %1217 = vmatmul.mubr.f32.gmra.mxu0 %v1120
    %v1218 = vpop.f32.mrf.mxu0
    %v1219 = vpop.f32.mrf.mxu0
    %1220 = vmatprep.mubr.f32.mxu0 0.0
    %1221 = vmatmul.mubr.f32.gmra.mxu0 %v1123
    %v1222 = vpop.f32.mrf.mxu0
    %v1223 = vadd.f32 0.0, %v1222
    %v1224 = vpop.f32.mrf.mxu0
    %1225 = vmatprep.mubr.f32.mxu0 0.0
    %1226 = vmatmul.mubr.f32.gmra.mxu0 %v1126
    %v1227 = vpop.f32.mrf.mxu0
    %v1228 = vadd.f32 0.0, %v1227
    %v1229 = vpop.f32.mrf.mxu0
    %1230 = vmatprep.mubr.f32.mxu0 0.0
    %1231 = vmatmul.mubr.f32.gmra.mxu0 %v1129
    %v1232 = vpop.f32.mrf.mxu0
    %v1233 = vadd.f32 0.0, %v1232
    %v1234 = vpop.f32.mrf.mxu0
    %1235 = vmatprep.mubr.f32.mxu0 0.0
    %1236 = vmatmul.mubr.f32.gmra.mxu0 %v1132
    %v1237 = vpop.f32.mrf.mxu0
    %v1238 = vadd.f32 0.0, %v1237
    %v1239 = vpop.f32.mrf.mxu0
    %1240 = vmatprep.mubr.f32.mxu0 0.0
    %1241 = vmatmul.mubr.f32.gmra.mxu0 %v1135
    %v1242 = vpop.f32.mrf.mxu0
    %v1243 = vpop.f32.mrf.mxu0
    %1244 = vmatprep.mubr.f32.mxu0 0.0
    %1245 = vmatmul.mubr.f32.gmra.mxu0 %v1138
    %v1246 = vpop.f32.mrf.mxu0
    %v1247 = vadd.f32 0.0, %v1246
    %v1248 = vpop.f32.mrf.mxu0
    %1249 = vmatprep.mubr.f32.mxu0 0.0
    %1250 = vmatmul.mubr.f32.gmra.mxu0 %v1141
    %v1251 = vpop.f32.mrf.mxu0
    %v1252 = vadd.f32 0.0, %v1251
    %v1253 = vpop.f32.mrf.mxu0
    %1254 = vmatprep.mubr.f32.mxu0 0.0
    %1255 = vmatmul.mubr.f32.gmra.mxu0 %v1144
    %v1256 = vpop.f32.mrf.mxu0
    %v1257 = vadd.f32 0.0, %v1256
    %v1258 = vpop.f32.mrf.mxu0
    %1259 = vmatprep.mubr.f32.mxu0 0.0
    %1260 = vmatmul.mubr.f32.gmra.mxu0 %v1147
    %v1261 = vpop.f32.mrf.mxu0
    %v1262 = vadd.f32 0.0, %v1261
    %v1263 = vpop.f32.mrf.mxu0
    %1264 = vdwg.mxu0
    %v1266 = vsel %vm298, %v1117, 0
    %1268 = vmatprep.subr.mxu0 0.0
    %1269 = vmatpush1.msra.mxu0 0.0
    %1270 = vmatprep.subr.mxu0 0.0
    %1271 = vmatpush1.msra.mxu0 0.0
    %1272 = vmatprep.subr.mxu0 0.0
    %1273 = vmatpush1.msra.mxu0 0.0
    %1274 = vmatprep.subr.mxu0 0.0
    %1275 = vmatpush1.msra.mxu0 0.0
    %1276 = vmatprep.subr.mxu0 0.0
    %1277 = vmatpush1.msra.mxu0 0.0
    %1278 = vmatprep.subr.mxu0 0.0
    %1279 = vmatpush1.msra.mxu0 0.0
    %1280 = vmatprep.subr.mxu0 0.0
    %1281 = vmatpush1.msra.mxu0 0.0
    %1282 = vmatprep.subr.mxu0 0.0
    %1283 = vmatpush1.msra.mxu0 0.0
    %1284 = vmatprep.subr.mxu0 0.0
    %1285 = vmatpush1.msra.mxu0 0.0
    %1286 = vmatprep.subr.mxu0 0.0
    %1287 = vmatpush1.msra.mxu0 0.0
    %1288 = vmatprep.subr.mxu0 0.0
    %1289 = vmatpush1.msra.mxu0 0.0
    %1290 = vmatprep.subr.mxu0 0.0
    %1291 = vmatpush1.msra.mxu0 0.0
    %1292 = vmatprep.subr.mxu0 0.0
    %1293 = vmatpush1.msra.mxu0 0.0
    %1294 = vmatprep.subr.mxu0 0.0
    %1295 = vmatpush1.msra.mxu0 0.0
    %1296 = vmatprep.subr.mxu0 0.0
    %1297 = vmatpush1.msra.mxu0 %v1266
    %1298 = vmatprep.subr.mxu0 0.0
    %1299 = vmatpush1.msra.mxu0 %v1116
    %1300 = vmatprep.subr.mxu0 0.0
    %1301 = vmatpush2.msra.mxu0 0.0
    %1302 = vmatprep.subr.mxu0 0.0
    %1303 = vmatpush2.msra.mxu0 0.0
    %1304 = vmatprep.subr.mxu0 0.0
    %1305 = vmatpush2.msra.mxu0 0.0
    %1306 = vmatprep.subr.mxu0 0.0
    %1307 = vmatpush2.msra.mxu0 0.0
    %1308 = vmatprep.subr.mxu0 0.0
    %1309 = vmatpush2.msra.mxu0 0.0
    %1310 = vmatprep.subr.mxu0 0.0
    %1311 = vmatpush2.msra.mxu0 0.0
    %1312 = vmatprep.subr.mxu0 0.0
    %1313 = vmatpush2.msra.mxu0 0.0
    %1314 = vmatprep.subr.mxu0 0.0
    %1315 = vmatpush2.msra.mxu0 0.0
    %1316 = vmatprep.subr.mxu0 0.0
    %1317 = vmatpush2.msra.mxu0 0.0
    %1318 = vmatprep.subr.mxu0 0.0
    %1319 = vmatpush2.msra.mxu0 0.0
    %1320 = vmatprep.subr.mxu0 0.0
    %1321 = vmatpush2.msra.mxu0 0.0
    %1322 = vmatprep.subr.mxu0 0.0
    %1323 = vmatpush2.msra.mxu0 0.0
    %1324 = vmatprep.subr.mxu0 0.0
    %1325 = vmatpush2.msra.mxu0 0.0
    %1326 = vmatprep.subr.mxu0 0.0
    %1327 = vmatpush2.msra.mxu0 0.0
    %1328 = vmatprep.subr.mxu0 0.0
    %1329 = vmatpush2.msra.mxu0 0.0
    %1330 = vmatprep.subr.mxu0 0.0
    %1331 = vmatpush2.msra.mxu0 0.0
    %1332 = vmatprep.mubr.f32.mxu0 0.0
    %1333 = vmatmul.mubr.f32.gmra.mxu0 %v1120
    %v1334 = vpop.f32.mrf.mxu0
    %v1335 = vadd.f32 0.0, %v1334
    %v1336 = vpop.f32.mrf.mxu0
    %1337 = vmatprep.mubr.f32.mxu0 0.0
    %1338 = vmatmul.mubr.f32.gmra.mxu0 %v1123
    %v1339 = vpop.f32.mrf.mxu0
    %v1340 = vadd.f32 0.0, %v1339
    %v1341 = vpop.f32.mrf.mxu0
    %1342 = vmatprep.mubr.f32.mxu0 0.0
    %1343 = vmatmul.mubr.f32.gmra.mxu0 %v1126
    %v1344 = vpop.f32.mrf.mxu0
    %v1345 = vadd.f32 0.0, %v1344
    %v1346 = vpop.f32.mrf.mxu0
    %1347 = vmatprep.mubr.f32.mxu0 0.0
    %1348 = vmatmul.mubr.f32.gmra.mxu0 %v1129
    %v1349 = vpop.f32.mrf.mxu0
    %v1350 = vadd.f32 0.0, %v1349
    %v1351 = vpop.f32.mrf.mxu0
    %1352 = vmatprep.mubr.f32.mxu0 0.0
    %1353 = vmatmul.mubr.f32.gmra.mxu0 %v1132
    %v1354 = vpop.f32.mrf.mxu0
    %v1355 = vadd.f32 0.0, %v1354
    %v1356 = vpop.f32.mrf.mxu0
    %1357 = vmatprep.mubr.f32.mxu0 0.0
    %1358 = vmatmul.mubr.f32.gmra.mxu0 %v1135
    %v1359 = vpop.f32.mrf.mxu0
    %v1360 = vadd.f32 0.0, %v1359
    %v1361 = vpop.f32.mrf.mxu0
    %1362 = vmatprep.mubr.f32.mxu0 0.0
    %1363 = vmatmul.mubr.f32.gmra.mxu0 %v1138
    %v1364 = vpop.f32.mrf.mxu0
    %v1365 = vadd.f32 0.0, %v1364
    %v1366 = vpop.f32.mrf.mxu0
    %1367 = vmatprep.mubr.f32.mxu0 0.0
    %1368 = vmatmul.mubr.f32.gmra.mxu0 %v1141
    %v1369 = vpop.f32.mrf.mxu0
    %v1370 = vadd.f32 0.0, %v1369
    %v1371 = vpop.f32.mrf.mxu0
    %1372 = vmatprep.mubr.f32.mxu0 0.0
    %1373 = vmatmul.mubr.f32.gmra.mxu0 %v1144
    %v1374 = vpop.f32.mrf.mxu0
    %v1375 = vadd.f32 0.0, %v1374
    %v1376 = vpop.f32.mrf.mxu0
    %1377 = vmatprep.mubr.f32.mxu0 0.0
    %1378 = vmatmul.mubr.f32.gmra.mxu0 %v1147
    %v1379 = vpop.f32.mrf.mxu0
    %v1380 = vadd.f32 0.0, %v1379
    %v1381 = vpop.f32.mrf.mxu0
    %1382 = vdwg.mxu0
    %v1384 = vsel %vm298, %v1113, 0
    %1386 = vmatprep.subr.mxu0 0.0
    %1387 = vmatpush1.msra.mxu0 0.0
    %1388 = vmatprep.subr.mxu0 0.0
    %1389 = vmatpush1.msra.mxu0 0.0
    %1390 = vmatprep.subr.mxu0 0.0
    %1391 = vmatpush1.msra.mxu0 0.0
    %1392 = vmatprep.subr.mxu0 0.0
    %1393 = vmatpush1.msra.mxu0 0.0
    %1394 = vmatprep.subr.mxu0 0.0
    %1395 = vmatpush1.msra.mxu0 0.0
    %1396 = vmatprep.subr.mxu0 0.0
    %1397 = vmatpush1.msra.mxu0 0.0
    %1398 = vmatprep.subr.mxu0 0.0
    %1399 = vmatpush1.msra.mxu0 0.0
    %1400 = vmatprep.subr.mxu0 0.0
    %1401 = vmatpush1.msra.mxu0 0.0
    %1402 = vmatprep.subr.mxu0 0.0
    %1403 = vmatpush1.msra.mxu0 0.0
    %1404 = vmatprep.subr.mxu0 0.0
    %1405 = vmatpush1.msra.mxu0 0.0
    %1406 = vmatprep.subr.mxu0 0.0
    %1407 = vmatpush1.msra.mxu0 0.0
    %1408 = vmatprep.subr.mxu0 0.0
    %1409 = vmatpush1.msra.mxu0 0.0
    %1410 = vmatprep.subr.mxu0 0.0
    %1411 = vmatpush1.msra.mxu0 0.0
    %1412 = vmatprep.subr.mxu0 0.0
    %1413 = vmatpush1.msra.mxu0 0.0
    %1414 = vmatprep.subr.mxu0 0.0
    %1415 = vmatpush1.msra.mxu0 %v1384
    %1416 = vmatprep.subr.mxu0 0.0
    %1417 = vmatpush1.msra.mxu0 %v1110
    %1418 = vmatprep.subr.mxu0 0.0
    %1419 = vmatpush2.msra.mxu0 0.0
    %1420 = vmatprep.subr.mxu0 0.0
    %1421 = vmatpush2.msra.mxu0 0.0
    %1422 = vmatprep.subr.mxu0 0.0
    %1423 = vmatpush2.msra.mxu0 0.0
    %1424 = vmatprep.subr.mxu0 0.0
    %1425 = vmatpush2.msra.mxu0 0.0
    %1426 = vmatprep.subr.mxu0 0.0
    %1427 = vmatpush2.msra.mxu0 0.0
    %1428 = vmatprep.subr.mxu0 0.0
    %1429 = vmatpush2.msra.mxu0 0.0
    %1430 = vmatprep.subr.mxu0 0.0
    %1431 = vmatpush2.msra.mxu0 0.0
    %1432 = vmatprep.subr.mxu0 0.0
    %1433 = vmatpush2.msra.mxu0 0.0
    %1434 = vmatprep.subr.mxu0 0.0
    %1435 = vmatpush2.msra.mxu0 0.0
    %1436 = vmatprep.subr.mxu0 0.0
    %1437 = vmatpush2.msra.mxu0 0.0
    %1438 = vmatprep.subr.mxu0 0.0
    %1439 = vmatpush2.msra.mxu0 0.0
    %1440 = vmatprep.subr.mxu0 0.0
    %1441 = vmatpush2.msra.mxu0 0.0
    %1442 = vmatprep.subr.mxu0 0.0
    %1443 = vmatpush2.msra.mxu0 0.0
    %1444 = vmatprep.subr.mxu0 0.0
    %1445 = vmatpush2.msra.mxu0 0.0
    %1446 = vmatprep.subr.mxu0 0.0
    %1447 = vmatpush2.msra.mxu0 0.0
    %1448 = vmatprep.subr.mxu0 0.0
    %1449 = vmatpush2.msra.mxu0 0.0
    %1450 = vmatprep.mubr.f32.mxu0 0.0
    %1451 = vmatmul.mubr.f32.gmra.mxu0 %v1120
    %v1452 = vpop.f32.mrf.mxu0
    %v1453 = vadd.f32 0.0, %v1452
    %v1454 = vpop.f32.mrf.mxu0
    %1455 = vmatprep.mubr.f32.mxu0 0.0
    %1456 = vmatmul.mubr.f32.gmra.mxu0 %v1123
    %v1457 = vpop.f32.mrf.mxu0
    %v1458 = vadd.f32 0.0, %v1457
    %v1459 = vpop.f32.mrf.mxu0
    %1460 = vmatprep.mubr.f32.mxu0 0.0
    %1461 = vmatmul.mubr.f32.gmra.mxu0 %v1126
    %v1462 = vpop.f32.mrf.mxu0
    %v1463 = vadd.f32 0.0, %v1462
    %v1464 = vpop.f32.mrf.mxu0
    %1465 = vmatprep.mubr.f32.mxu0 0.0
    %1466 = vmatmul.mubr.f32.gmra.mxu0 %v1129
    %v1467 = vpop.f32.mrf.mxu0
    %v1468 = vadd.f32 0.0, %v1467
    %v1469 = vpop.f32.mrf.mxu0
    %1470 = vmatprep.mubr.f32.mxu0 0.0
    %1471 = vmatmul.mubr.f32.gmra.mxu0 %v1132
    %v1472 = vpop.f32.mrf.mxu0
    %v1473 = vadd.f32 0.0, %v1472
    %v1474 = vpop.f32.mrf.mxu0
    %1475 = vmatprep.mubr.f32.mxu0 0.0
    %1476 = vmatmul.mubr.f32.gmra.mxu0 %v1135
    %v1477 = vpop.f32.mrf.mxu0
    %v1478 = vadd.f32 0.0, %v1477
    %v1479 = vpop.f32.mrf.mxu0
    %1480 = vmatprep.mubr.f32.mxu0 0.0
    %1481 = vmatmul.mubr.f32.gmra.mxu0 %v1138
    %v1482 = vpop.f32.mrf.mxu0
    %v1483 = vadd.f32 0.0, %v1482
    %v1484 = vpop.f32.mrf.mxu0
    %1485 = vmatprep.mubr.f32.mxu0 0.0
    %1486 = vmatmul.mubr.f32.gmra.mxu0 %v1141
    %v1487 = vpop.f32.mrf.mxu0
    %v1488 = vadd.f32 0.0, %v1487
    %v1489 = vpop.f32.mrf.mxu0
    %1490 = vmatprep.mubr.f32.mxu0 0.0
    %1491 = vmatmul.mubr.f32.gmra.mxu0 %v1144
    %v1492 = vpop.f32.mrf.mxu0
    %v1493 = vadd.f32 0.0, %v1492
    %v1494 = vpop.f32.mrf.mxu0
    %1495 = vmatprep.mubr.f32.mxu0 0.0
    %1496 = vmatmul.mubr.f32.gmra.mxu0 %v1147
    %v1497 = vpop.f32.mrf.mxu0
    %v1498 = vadd.f32 0.0, %v1497
    %v1499 = vpop.f32.mrf.mxu0
    %1500 = vdwg.mxu0
    %v1501 = vmul.f32 %v1453, %v330
    %v1502 = vmul.f32 %v1458, %v331
    %v1503 = vmul.f32 %v1463, %v332
    %v1504 = vmul.f32 %v1468, %v333
    %v1505 = vmul.f32 %v1473, %v334
    %v1506 = vmul.f32 %v1478, %v335
    %v1507 = vmul.f32 %v1483, %v336
    %v1508 = vmul.f32 %v1488, %v337
    %v1509 = vmul.f32 %v1493, %v338
    %v1510 = vmul.f32 %v1498, %v339
    %vm1511 = vcmask 64512
    %v1512 = vsel %vm1511, %v1501, 0.0
    %1513 = vadd.xlane.f32.xlu0 %v1512
    %v1514 = vpop.xlane.xlu0 %1513
    %v1515 = vsel %vm1511, %v1502, 0.0
    %1516 = vadd.xlane.f32.xlu0 %v1515
    %v1517 = vpop.xlane.xlu0 %1516
    %v1518 = vsel %vm1511, %v1503, 0.0
    %1519 = vadd.xlane.f32.xlu0 %v1518
    %v1520 = vpop.xlane.xlu0 %1519
    %v1521 = vsel %vm1511, %v1504, 0.0
    %1522 = vadd.xlane.f32.xlu0 %v1521
    %v1523 = vpop.xlane.xlu0 %1522
    %v1524 = vsel %vm1511, %v1505, 0.0
    %1525 = vadd.xlane.f32.xlu0 %v1524
    %v1526 = vpop.xlane.xlu0 %1525
    %v1527 = vsel %vm1511, %v1506, 0.0
    %1528 = vadd.xlane.f32.xlu0 %v1527
    %v1529 = vpop.xlane.xlu0 %1528
    %v1530 = vsel %vm1511, %v1507, 0.0
    %1531 = vadd.xlane.f32.xlu0 %v1530
    %v1532 = vpop.xlane.xlu0 %1531
    %v1533 = vsel %vm1511, %v1508, 0.0
    %1534 = vadd.xlane.f32.xlu0 %v1533
    %v1535 = vpop.xlane.xlu0 %1534
    %v1536 = vsel %vm1511, %v1509, 0.0
    %1537 = vadd.xlane.f32.xlu0 %v1536
    %v1538 = vpop.xlane.xlu0 %1537
    %v1539 = vsel %vm1511, %v1510, 0.0
    %1540 = vadd.xlane.f32.xlu0 %v1539
    %v1541 = vpop.xlane.xlu0 %1540
    %1552 = vrot.lane.b32.xlu0 %v330, 8
    %v1553 = vpop.permute.xlu0 %1552
    %1554 = vrot.lane.b32.xlu0 %v331, 8
    %v1555 = vpop.permute.xlu0 %1554
    %1556 = vrot.lane.b32.xlu0 %v332, 8
    %v1557 = vpop.permute.xlu0 %1556
    %1558 = vrot.lane.b32.xlu0 %v333, 8
    %v1559 = vpop.permute.xlu0 %1558
    %1560 = vrot.lane.b32.xlu0 %v334, 8
    %v1561 = vpop.permute.xlu0 %1560
    %1562 = vrot.lane.b32.xlu0 %v335, 8
    %v1563 = vpop.permute.xlu0 %1562
    %1564 = vrot.lane.b32.xlu0 %v336, 8
    %v1565 = vpop.permute.xlu0 %1564
    %1566 = vrot.lane.b32.xlu0 %v337, 8
    %v1567 = vpop.permute.xlu0 %1566
    %1568 = vrot.lane.b32.xlu0 %v338, 8
    %v1569 = vpop.permute.xlu0 %1568
    %1570 = vrot.lane.b32.xlu0 %v339, 8
    %v1571 = vpop.permute.xlu0 %1570
    %v1582 = vmul.f32 %v1453, %v1553
    %v1583 = vmul.f32 %v1458, %v1555
    %v1584 = vmul.f32 %v1463, %v1557
    %v1585 = vmul.f32 %v1468, %v1559
    %v1586 = vmul.f32 %v1473, %v1561
    %v1587 = vmul.f32 %v1478, %v1563
    %v1588 = vmul.f32 %v1483, %v1565
    %v1589 = vmul.f32 %v1488, %v1567
    %v1590 = vmul.f32 %v1493, %v1569
    %v1591 = vmul.f32 %v1498, %v1571
    %1602 = vrot.lane.b32.xlu0 %v1582, 120
    %v1603 = vpop.permute.xlu0 %1602
    %1604 = vrot.lane.b32.xlu0 %v1583, 120
    %v1605 = vpop.permute.xlu0 %1604
    %1606 = vrot.lane.b32.xlu0 %v1584, 120
    %v1607 = vpop.permute.xlu0 %1606
    %1608 = vrot.lane.b32.xlu0 %v1585, 120
    %v1609 = vpop.permute.xlu0 %1608
    %1610 = vrot.lane.b32.xlu0 %v1586, 120
    %v1611 = vpop.permute.xlu0 %1610
    %1612 = vrot.lane.b32.xlu0 %v1587, 120
    %v1613 = vpop.permute.xlu0 %1612
    %1614 = vrot.lane.b32.xlu0 %v1588, 120
    %v1615 = vpop.permute.xlu0 %1614
    %1616 = vrot.lane.b32.xlu0 %v1589, 120
    %v1617 = vpop.permute.xlu0 %1616
    %1618 = vrot.lane.b32.xlu0 %v1590, 120
    %v1619 = vpop.permute.xlu0 %1618
    %1620 = vrot.lane.b32.xlu0 %v1591, 120
    %v1621 = vpop.permute.xlu0 %1620
    %v1632 = vsel %vm1511, %v1603, 0.0
    %1633 = vadd.xlane.f32.xlu0 %v1632
    %v1634 = vpop.xlane.xlu0 %1633
    %v1635 = vsel %vm1511, %v1605, 0.0
    %1636 = vadd.xlane.f32.xlu0 %v1635
    %v1637 = vpop.xlane.xlu0 %1636
    %v1638 = vsel %vm1511, %v1607, 0.0
    %1639 = vadd.xlane.f32.xlu0 %v1638
    %v1640 = vpop.xlane.xlu0 %1639
    %v1641 = vsel %vm1511, %v1609, 0.0
    %1642 = vadd.xlane.f32.xlu0 %v1641
    %v1643 = vpop.xlane.xlu0 %1642
    %v1644 = vsel %vm1511, %v1611, 0.0
    %1645 = vadd.xlane.f32.xlu0 %v1644
    %v1646 = vpop.xlane.xlu0 %1645
    %v1647 = vsel %vm1511, %v1613, 0.0
    %1648 = vadd.xlane.f32.xlu0 %v1647
    %v1649 = vpop.xlane.xlu0 %1648
    %v1650 = vsel %vm1511, %v1615, 0.0
    %1651 = vadd.xlane.f32.xlu0 %v1650
    %v1652 = vpop.xlane.xlu0 %1651
    %v1653 = vsel %vm1511, %v1617, 0.0
    %1654 = vadd.xlane.f32.xlu0 %v1653
    %v1655 = vpop.xlane.xlu0 %1654
    %v1656 = vsel %vm1511, %v1619, 0.0
    %1657 = vadd.xlane.f32.xlu0 %v1656
    %v1658 = vpop.xlane.xlu0 %1657
    %v1659 = vsel %vm1511, %v1621, 0.0
    %1660 = vadd.xlane.f32.xlu0 %v1659
    %v1661 = vpop.xlane.xlu0 %1660
    %v1662 = vld [vmem:[%s49 + $0x8] sm:$0xff]
    %v1663 = vld [vmem:[%s49 + $0x10] sm:$0xff]
    %v1664 = vld [vmem:[%s49 + $0x18] sm:$0xff]
    %v1665 = vld [vmem:[%s49 + $0x20] sm:$0xff]
    %v1666 = vld [vmem:[%s49 + $0x30] sm:$0xff]
    %v1667 = vld [vmem:[%s49 + $0x38] sm:$0xff]
    %v1668 = vld [vmem:[%s49 + $0x40] sm:$0xff]
    %v1669 = vld [vmem:[%s49 + $0x48] sm:$0xff]
    %v1670 = vmul.f32 %v1223, %v1662
    %v1671 = vmul.f32 %v1228, %v1663
    %v1672 = vmul.f32 %v1233, %v1664
    %v1673 = vmul.f32 %v1238, %v1665
    %v1674 = vmul.f32 %v1247, %v1666
    %v1675 = vmul.f32 %v1252, %v1667
    %v1676 = vmul.f32 %v1257, %v1668
    %v1677 = vmul.f32 %v1262, %v1669
    %v1678 = vmul.f32 %v1670, 1.442695
    %v1679 = vpow.pop %v1678
    %v1680 = vmul.f32 %v1671, 1.442695
    %v1681 = vpow.pop %v1680
    %v1682 = vmul.f32 %v1672, 1.442695
    %v1683 = vpow.pop %v1682
    %v1684 = vmul.f32 %v1673, 1.442695
    %v1685 = vpow.pop %v1684
    %v1686 = vmul.f32 %v1674, 1.442695
    %v1687 = vpow.pop %v1686
    %v1688 = vmul.f32 %v1675, 1.442695
    %v1689 = vpow.pop %v1688
    %v1690 = vmul.f32 %v1676, 1.442695
    %v1691 = vpow.pop %v1690
    %v1692 = vmul.f32 %v1677, 1.442695
    %v1693 = vpow.pop %v1692
    %v1694 = vmul.f32 %v1514, %v1335
    %v1695 = vmul.f32 %v1517, %v1340
    %v1696 = vmul.f32 %v1520, %v1345
    %v1697 = vmul.f32 %v1523, %v1350
    %v1698 = vmul.f32 %v1526, %v1355
    %v1699 = vmul.f32 %v1529, %v1360
    %v1700 = vmul.f32 %v1532, %v1365
    %v1701 = vmul.f32 %v1535, %v1370
    %v1702 = vmul.f32 %v1538, %v1375
    %v1703 = vmul.f32 %v1541, %v1380
    %1704 = vst.msk [vmem:[#allocation2] sm:$0xff] %vm242, %v1694
    %v1705 = vmul.f32 %v1679, %v1694
    %v1706 = vadd.f32 %v1705, %v1695
    %1707 = vst.msk [vmem:[#allocation2 + $0x8] sm:$0xff] %vm242, %v1706
    %v1708 = vmul.f32 %v1681, %v1706
    %v1709 = vadd.f32 %v1708, %v1696
    %1710 = vst.msk [vmem:[#allocation2 + $0x10] sm:$0xff] %vm242, %v1709
    %v1711 = vmul.f32 %v1683, %v1709
    %v1712 = vadd.f32 %v1711, %v1697
    %1713 = vst.msk [vmem:[#allocation2 + $0x18] sm:$0xff] %vm242, %v1712
    %v1714 = vmul.f32 %v1685, %v1712
    %v1715 = vadd.f32 %v1714, %v1698
    %1716 = vst.msk [vmem:[#allocation2 + $0x20] sm:$0xff] %vm242, %v1715
    %1717 = vst.msk [vmem:[#allocation2 + $0x28] sm:$0xff] %vm242, %v1699
    %v1718 = vmul.f32 %v1687, %v1699
    %v1719 = vadd.f32 %v1718, %v1700
    %1720 = vst.msk [vmem:[#allocation2 + $0x30] sm:$0xff] %vm242, %v1719
    %v1721 = vmul.f32 %v1689, %v1719
    %v1722 = vadd.f32 %v1721, %v1701
    %1723 = vst.msk [vmem:[#allocation2 + $0x38] sm:$0xff] %vm242, %v1722
    %v1724 = vmul.f32 %v1691, %v1722
    %v1725 = vadd.f32 %v1724, %v1702
    %1726 = vst.msk [vmem:[#allocation2 + $0x40] sm:$0xff] %vm242, %v1725
    %v1727 = vmul.f32 %v1693, %v1725
    %v1728 = vadd.f32 %v1727, %v1703
    %1729 = vst.msk [vmem:[#allocation2 + $0x48] sm:$0xff] %vm242, %v1728
    %v1730 = vld [vmem:[#allocation2] sm:$0xff]
    %v1731 = vld [vmem:[#allocation2 + $0x8] sm:$0xff]
    %v1732 = vld [vmem:[#allocation2 + $0x10] sm:$0xff]
    %v1733 = vld [vmem:[#allocation2 + $0x18] sm:$0xff]
    %v1734 = vld [vmem:[#allocation2 + $0x20] sm:$0xff]
    %v1735 = vld [vmem:[#allocation2 + $0x28] sm:$0xff]
    %v1736 = vld [vmem:[#allocation2 + $0x30] sm:$0xff]
    %v1737 = vld [vmem:[#allocation2 + $0x38] sm:$0xff]
    %v1738 = vld [vmem:[#allocation2 + $0x40] sm:$0xff]
    %v1739 = vld [vmem:[#allocation2 + $0x48] sm:$0xff]
    %v1740 = vmul.f32 %v1634, %v1730
    %v1741 = vmul.f32 %v1637, %v1731
    %v1742 = vmul.f32 %v1640, %v1732
    %v1743 = vmul.f32 %v1643, %v1733
    %v1744 = vmul.f32 %v1646, %v1734
    %v1745 = vmul.f32 %v1649, %v1735
    %v1746 = vmul.f32 %v1652, %v1736
    %v1747 = vmul.f32 %v1655, %v1737
    %v1748 = vmul.f32 %v1658, %v1738
    %v1749 = vmul.f32 %v1661, %v1739
    %v1750 = vld [vmem:[%s51] sm:$0x1]
    %v1752 = vlaneseq
    %v1753 = vshrl.u32 %v1752, 7
    %v1754 = vsub.s32 0, %v1753
    %v1755 = vrot.slane %v1750, %v1754
    %v1757 = vmul.f32 %v1755, %v921
    %v1758 = vmul.f32 %v1755, %v922
    %vm1759 = vcmask 654336
    %v1761 = vsel %vm1759, %v340, 0
    %v1764 = vsel %vm1759, %v341, 0
    %1766 = vmatprep.subr.mxu0 0.0
    %1767 = vmatpush1.msra.mxu0 0.0
    %1768 = vmatprep.subr.mxu0 0.0
    %1769 = vmatpush1.msra.mxu0 0.0
    %1770 = vmatprep.subr.mxu0 0.0
    %1771 = vmatpush1.msra.mxu0 0.0
    %1772 = vmatprep.subr.mxu0 0.0
    %1773 = vmatpush1.msra.mxu0 0.0
    %1774 = vmatprep.subr.mxu0 0.0
    %1775 = vmatpush1.msra.mxu0 0.0
    %1776 = vmatprep.subr.mxu0 0.0
    %1777 = vmatpush1.msra.mxu0 0.0
    %1778 = vmatprep.subr.mxu0 0.0
    %1779 = vmatpush1.msra.mxu0 %v1749
    %1780 = vmatprep.subr.mxu0 0.0
    %1781 = vmatpush1.msra.mxu0 %v1748
    %1782 = vmatprep.subr.mxu0 0.0
    %1783 = vmatpush1.msra.mxu0 %v1747
    %1784 = vmatprep.subr.mxu0 0.0
    %1785 = vmatpush1.msra.mxu0 %v1746
    %1786 = vmatprep.subr.mxu0 0.0
    %1787 = vmatpush1.msra.mxu0 %v1745
    %1788 = vmatprep.subr.mxu0 0.0
    %1789 = vmatpush1.msra.mxu0 %v1744
    %1790 = vmatprep.subr.mxu0 0.0
    %1791 = vmatpush1.msra.mxu0 %v1743
    %1792 = vmatprep.subr.mxu0 0.0
    %1793 = vmatpush1.msra.mxu0 %v1742
    %1794 = vmatprep.subr.mxu0 0.0
    %1795 = vmatpush1.msra.mxu0 %v1741
    %1796 = vmatprep.subr.mxu0 0.0
    %1797 = vmatpush1.msra.mxu0 %v1740
    %1798 = vmatprep.subr.mxu0 0.0
    %1799 = vmatpush2.msra.mxu0 0.0
    %1800 = vmatprep.subr.mxu0 0.0
    %1801 = vmatpush2.msra.mxu0 0.0
    %1802 = vmatprep.subr.mxu0 0.0
    %1803 = vmatpush2.msra.mxu0 0.0
    %1804 = vmatprep.subr.mxu0 0.0
    %1805 = vmatpush2.msra.mxu0 0.0
    %1806 = vmatprep.subr.mxu0 0.0
    %1807 = vmatpush2.msra.mxu0 0.0
    %1808 = vmatprep.subr.mxu0 0.0
    %1809 = vmatpush2.msra.mxu0 0.0
    %1810 = vmatprep.subr.mxu0 0.0
    %1811 = vmatpush2.msra.mxu0 0.0
    %1812 = vmatprep.subr.mxu0 0.0
    %1813 = vmatpush2.msra.mxu0 0.0
    %1814 = vmatprep.subr.mxu0 0.0
    %1815 = vmatpush2.msra.mxu0 0.0
    %1816 = vmatprep.subr.mxu0 0.0
    %1817 = vmatpush2.msra.mxu0 0.0
    %1818 = vmatprep.subr.mxu0 0.0
    %1819 = vmatpush2.msra.mxu0 0.0
    %1820 = vmatprep.subr.mxu0 0.0
    %1821 = vmatpush2.msra.mxu0 0.0
    %1822 = vmatprep.subr.mxu0 0.0
    %1823 = vmatpush2.msra.mxu0 0.0
    %1824 = vmatprep.subr.mxu0 0.0
    %1825 = vmatpush2.msra.mxu0 0.0
    %1826 = vmatprep.subr.mxu0 0.0
    %1827 = vmatpush2.msra.mxu0 0.0
    %1828 = vmatprep.subr.mxu0 0.0
    %1829 = vmatpush2.msra.mxu0 0.0
    %1830 = vmatprep.mubr.f32.mxu0 0.0
    %1831 = vmatmul.mubr.f32.gmra.mxu0 %v1761
    %v1832 = vpop.f32.mrf.mxu0
    %v1833 = vadd.f32 %v1757, %v1832
    %v1834 = vpop.f32.mrf.mxu0
    %1835 = vmatprep.mubr.f32.mxu0 0.0
    %1836 = vmatmul.mubr.f32.gmra.mxu0 %v1764
    %v1837 = vpop.f32.mrf.mxu0
    %v1838 = vadd.f32 %v1758, %v1837
    %v1839 = vpop.f32.mrf.mxu0
    %1840 = vdwg.mxu0
    %v1841 = vxor.u32 %v791, 2147483648
    %v1842 = vxor.u32 %v794, 2147483648
    %v1843 = vmul.f32 %v1841, 1.442695
    %v1844 = vpow.pop %v1843
    %v1845 = vmul.f32 %v1842, 1.442695
    %v1846 = vpow.pop %v1845
    %v1847 = vadd.f32 %v1844, 1.0
    %v1848 = vadd.f32 %v1846, 1.0
    %v1849 = vrcp.pop %v1847
    %v1850 = vmul.f32 1.0, %v1849
    %v1851 = vrcp.pop %v1848
    %v1852 = vmul.f32 1.0, %v1851
    %v1853 = vmul.f32 %v791, %v1850
    %v1854 = vmul.f32 %v794, %v1852
    %1857 = vrot.lane.b32.xlu0 %v1853, 64
    %v1858 = vpop.permute.xlu0 %1857
    %1859 = vrot.lane.b32.xlu0 %v1854, 64
    %v1860 = vpop.permute.xlu0 %1859
    %v1863 = vmul.f32 %v1833, %v1858
    %v1864 = vmul.f32 %v1838, %v1860
    %v1865 = vld [vmem:[%s53] sm:$0xf]
    %v1866 = vld [vmem:[%s53 + $0x4] sm:$0xf]
    %v1867 = vld [vmem:[%s53 + $0x8] sm:$0xf]
    %v1868 = vld [vmem:[%s53 + $0xc] sm:$0xf]
    %v1869 = vld [vmem:[%s53 + $0x10] sm:$0xf]
    %v1870 = vld [vmem:[%s53 + $0x14] sm:$0xf]
    %v1871 = vld [vmem:[%s53 + $0x18] sm:$0xf]
    %v1872 = vld [vmem:[%s53 + $0x1c] sm:$0xf]
    %v1873 = vpack.c.bf16 %v1864, %v1863
    %v1882 = vunpack.c.l.b16 %v1865
    %v1883 = vunpack.c.l.b16 %v1866
    %v1884 = vunpack.c.l.b16 %v1867
    %v1885 = vunpack.c.l.b16 %v1868
    %v1886 = vunpack.c.l.b16 %v1869
    %v1887 = vunpack.c.l.b16 %v1870
    %v1888 = vunpack.c.l.b16 %v1871
    %v1889 = vunpack.c.l.b16 %v1872
    %v1890 = vpack.c.b16 %v1883, %v1882
    %v1891 = vpack.c.b16 %v1885, %v1884
    %v1892 = vpack.c.b16 %v1887, %v1886
    %v1893 = vpack.c.b16 %v1889, %v1888
    %v1899 = vsel %vm242, %v1873, 0
    %1901 = vmatprep.subr.bf16.mxu0 0
    %1902 = vmatpush1.bf16.msra.mxu0 0
    %1903 = vmatprep.subr.bf16.mxu0 0
    %1904 = vmatpush1.bf16.msra.mxu0 0
    %1905 = vmatprep.subr.bf16.mxu0 0
    %1906 = vmatpush1.bf16.msra.mxu0 0
    %1907 = vmatprep.subr.bf16.mxu0 0
    %1908 = vmatpush1.bf16.msra.mxu0 0
    %1909 = vmatprep.subr.bf16.mxu0 0
    %1910 = vmatpush1.bf16.msra.mxu0 %v1893
    %1911 = vmatprep.subr.bf16.mxu0 0
    %1912 = vmatpush1.bf16.msra.mxu0 %v1892
    %1913 = vmatprep.subr.bf16.mxu0 0
    %1914 = vmatpush1.bf16.msra.mxu0 %v1891
    %1915 = vmatprep.subr.bf16.mxu0 0
    %1916 = vmatpush1.bf16.msra.mxu0 %v1890
    %1917 = vmatprep.subr.bf16.mxu0 0
    %1918 = vmatpush2.bf16.msra.mxu0 0
    %1919 = vmatprep.subr.bf16.mxu0 0
    %1920 = vmatpush2.bf16.msra.mxu0 0
    %1921 = vmatprep.subr.bf16.mxu0 0
    %1922 = vmatpush2.bf16.msra.mxu0 0
    %1923 = vmatprep.subr.bf16.mxu0 0
    %1924 = vmatpush2.bf16.msra.mxu0 0
    %1925 = vmatprep.subr.bf16.mxu0 0
    %1926 = vmatpush2.bf16.msra.mxu0 0
    %1927 = vmatprep.subr.bf16.mxu0 0
    %1928 = vmatpush2.bf16.msra.mxu0 0
    %1929 = vmatprep.subr.bf16.mxu0 0
    %1930 = vmatpush2.bf16.msra.mxu0 0
    %1931 = vmatprep.subr.bf16.mxu0 0
    %1932 = vmatpush2.bf16.msra.mxu0 0
    %1933 = vmatprep.mubr.bf16.mxu0 0
    %1934 = vmatmul.mubr.bf16.gmra.mxu0 %v1899
    %v1935 = vpop.f32.mrf.mxu0
    %v1936 = vadd.f32 0.0, %v1935
    %v1937 = vpop.f32.mrf.mxu0
    %v1938 = vpop.f32.mrf.mxu0
    %v1939 = vadd.f32 0.0, %v1938
    %v1940 = vpop.f32.mrf.mxu0
    %1941 = vdwg.mxu0
    %v1942 = vld [vmem:[%s29 + $0x1] sm:$0x1]
    %v1943 = vld [vmem:[%s31 + $0x1] sm:$0x1]
    %s1944 = scalar_lea.vmem %s17, 16
    %v1945 = vld [vmem:[%s1944] sm:$0xf]
    %v1946 = vld [vmem:[%s1944 + $0x4] sm:$0xf]
    %v1947 = vld [vmem:[%s1944 + $0x8] sm:$0xf]
    %v1948 = vld [vmem:[%s1944 + $0xc] sm:$0xf]
    %s1949 = scalar_lea.vmem %s19, 1
    %v1950 = vld [vmem:[%s1949] sm:$0x1]
    %s1951 = scalar_lea.vmem %s21, 32
    %v1952 = vld [vmem:[%s1951] sm:$0xf]
    %v1953 = vld [vmem:[%s1951 + $0x4] sm:$0xf]
    %v1954 = vld [vmem:[%s1951 + $0x8] sm:$0xf]
    %v1955 = vld [vmem:[%s1951 + $0xc] sm:$0xf]
    %v1956 = vld [vmem:[%s1951 + $0x10] sm:$0xf]
    %v1957 = vld [vmem:[%s1951 + $0x14] sm:$0xf]
    %v1958 = vld [vmem:[%s1951 + $0x18] sm:$0xf]
    %v1959 = vld [vmem:[%s1951 + $0x1c] sm:$0xf]
    %s1960 = scalar_lea.vmem %s23, 1
    %v1961 = vld [vmem:[%s1960] sm:$0x1]
    %s1962 = scalar_lea.vmem %s25, 16
    %v1963 = vld [vmem:[%s1962] sm:$0xf]
    %v1964 = vld [vmem:[%s1962 + $0x4] sm:$0xf]
    %v1965 = vld [vmem:[%s1962 + $0x8] sm:$0xf]
    %v1966 = vld [vmem:[%s1962 + $0xc] sm:$0xf]
    %s1967 = scalar_lea.vmem %s27, 1
    %v1968 = vld [vmem:[%s1967] sm:$0x1]
    %v1969 = vpack.c.bf16 %v1939, %v1936
    %v1971 = vlaneseq
    %v1972 = vshrl.u32 %v1971, 7
    %v1973 = vsub.s32 0, %v1972
    %v1974 = vrot.slane %v1950, %v1973
    %v1980 = vunpack.c.l.b16 %v1945
    %v1981 = vunpack.c.l.b16 %v1946
    %v1982 = vunpack.c.l.b16 %v1947
    %v1983 = vunpack.c.l.b16 %v1948
    %v1984 = vpack.c.b16 %v1981, %v1980
    %v1985 = vpack.c.b16 %v1983, %v1982
    %v1989 = vsel %vm382, %v1969, 0
    %1991 = vmatprep.subr.bf16.mxu0 0
    %1992 = vmatpush1.bf16.msra.mxu0 0
    %1993 = vmatprep.subr.bf16.mxu0 0
    %1994 = vmatpush1.bf16.msra.mxu0 0
    %1995 = vmatprep.subr.bf16.mxu0 0
    %1996 = vmatpush1.bf16.msra.mxu0 0
    %1997 = vmatprep.subr.bf16.mxu0 0
    %1998 = vmatpush1.bf16.msra.mxu0 0
    %1999 = vmatprep.subr.bf16.mxu0 0
    %2000 = vmatpush1.bf16.msra.mxu0 0
    %2001 = vmatprep.subr.bf16.mxu0 0
    %2002 = vmatpush1.bf16.msra.mxu0 0
    %2003 = vmatprep.subr.bf16.mxu0 0
    %2004 = vmatpush1.bf16.msra.mxu0 %v1985
    %2005 = vmatprep.subr.bf16.mxu0 0
    %2006 = vmatpush1.bf16.msra.mxu0 %v1984
    %2007 = vmatprep.subr.bf16.mxu0 0
    %2008 = vmatpush2.bf16.msra.mxu0 0
    %2009 = vmatprep.subr.bf16.mxu0 0
    %2010 = vmatpush2.bf16.msra.mxu0 0
    %2011 = vmatprep.subr.bf16.mxu0 0
    %2012 = vmatpush2.bf16.msra.mxu0 0
    %2013 = vmatprep.subr.bf16.mxu0 0
    %2014 = vmatpush2.bf16.msra.mxu0 0
    %2015 = vmatprep.subr.bf16.mxu0 0
    %2016 = vmatpush2.bf16.msra.mxu0 0
    %2017 = vmatprep.subr.bf16.mxu0 0
    %2018 = vmatpush2.bf16.msra.mxu0 0
    %2019 = vmatprep.subr.bf16.mxu0 0
    %2020 = vmatpush2.bf16.msra.mxu0 0
    %2021 = vmatprep.subr.bf16.mxu0 0
    %2022 = vmatpush2.bf16.msra.mxu0 0
    %2023 = vmatprep.mubr.bf16.mxu0 0
    %2024 = vmatmul.mubr.bf16.gmra.mxu0 %v1989
    %v2025 = vpop.f32.mrf.mxu0
    %v2026 = vadd.f32 %v1974, %v2025
    %v2027 = vpop.f32.mrf.mxu0
    %v2028 = vpop.f32.mrf.mxu0
    %v2029 = vadd.f32 %v1974, %v2028
    %v2030 = vpop.f32.mrf.mxu0
    %2031 = vdwg.mxu0
    %v2032 = vpack.c.bf16 %v2029, %v2026
    %v2034 = vlaneseq
    %v2035 = vshrl.u32 %v2034, 7
    %v2036 = vsub.s32 0, %v2035
    %v2037 = vrot.slane %v1961, %v2036
    %v2047 = vunpack.c.l.b16 %v1952
    %v2048 = vunpack.c.l.b16 %v1953
    %v2049 = vunpack.c.l.b16 %v1954
    %v2050 = vunpack.c.l.b16 %v1955
    %v2051 = vunpack.c.l.b16 %v1956
    %v2052 = vunpack.c.l.b16 %v1957
    %v2053 = vunpack.c.l.b16 %v1958
    %v2054 = vunpack.c.l.b16 %v1959
    %v2055 = vpack.c.b16 %v2048, %v2047
    %v2056 = vpack.c.b16 %v2050, %v2049
    %v2057 = vpack.c.b16 %v2052, %v2051
    %v2058 = vpack.c.b16 %v2054, %v2053
    %v2064 = vsel %vm242, %v2032, 0
    %2066 = vmatprep.subr.bf16.mxu0 0
    %2067 = vmatpush1.bf16.msra.mxu0 0
    %2068 = vmatprep.subr.bf16.mxu0 0
    %2069 = vmatpush1.bf16.msra.mxu0 0
    %2070 = vmatprep.subr.bf16.mxu0 0
    %2071 = vmatpush1.bf16.msra.mxu0 0
    %2072 = vmatprep.subr.bf16.mxu0 0
    %2073 = vmatpush1.bf16.msra.mxu0 0
    %2074 = vmatprep.subr.bf16.mxu0 0
    %2075 = vmatpush1.bf16.msra.mxu0 %v2058
    %2076 = vmatprep.subr.bf16.mxu0 0
    %2077 = vmatpush1.bf16.msra.mxu0 %v2057
    %2078 = vmatprep.subr.bf16.mxu0 0
    %2079 = vmatpush1.bf16.msra.mxu0 %v2056
    %2080 = vmatprep.subr.bf16.mxu0 0
    %2081 = vmatpush1.bf16.msra.mxu0 %v2055
    %2082 = vmatprep.subr.bf16.mxu0 0
    %2083 = vmatpush2.bf16.msra.mxu0 0
    %2084 = vmatprep.subr.bf16.mxu0 0
    %2085 = vmatpush2.bf16.msra.mxu0 0
    %2086 = vmatprep.subr.bf16.mxu0 0
    %2087 = vmatpush2.bf16.msra.mxu0 0
    %2088 = vmatprep.subr.bf16.mxu0 0
    %2089 = vmatpush2.bf16.msra.mxu0 0
    %2090 = vmatprep.subr.bf16.mxu0 0
    %2091 = vmatpush2.bf16.msra.mxu0 0
    %2092 = vmatprep.subr.bf16.mxu0 0
    %2093 = vmatpush2.bf16.msra.mxu0 0
    %2094 = vmatprep.subr.bf16.mxu0 0
    %2095 = vmatpush2.bf16.msra.mxu0 0
    %2096 = vmatprep.subr.bf16.mxu0 0
    %2097 = vmatpush2.bf16.msra.mxu0 0
    %2098 = vmatprep.mubr.bf16.mxu0 0
    %2099 = vmatmul.mubr.bf16.gmra.mxu0 %v2064
    %v2100 = vpop.f32.mrf.mxu0
    %v2101 = vadd.f32 %v2037, %v2100
    %v2102 = vpop.f32.mrf.mxu0
    %v2103 = vpop.f32.mrf.mxu0
    %v2104 = vadd.f32 %v2037, %v2103
    %v2105 = vpop.f32.mrf.mxu0
    %2106 = vdwg.mxu0
    %v2107 = vxor.u32 %v2101, 2147483648
    %v2108 = vxor.u32 %v2104, 2147483648
    %v2109 = vmul.f32 %v2107, 1.442695
    %v2110 = vpow.pop %v2109
    %v2111 = vmul.f32 %v2108, 1.442695
    %v2112 = vpow.pop %v2111
    %v2113 = vadd.f32 %v2110, 1.0
    %v2114 = vadd.f32 %v2112, 1.0
    %v2115 = vrcp.pop %v2113
    %v2116 = vmul.f32 1.0, %v2115
    %v2117 = vrcp.pop %v2114
    %v2118 = vmul.f32 1.0, %v2117
    %v2119 = vmul.f32 %v2101, %v2116
    %v2120 = vmul.f32 %v2104, %v2118
    %v2122 = vlaneseq
    %v2123 = vshrl.u32 %v2122, 7
    %v2124 = vsub.s32 0, %v2123
    %v2125 = vrot.slane %v1968, %v2124
    %v2131 = vunpack.c.l.b16 %v1963
    %v2132 = vunpack.c.l.b16 %v1964
    %v2133 = vunpack.c.l.b16 %v1965
    %v2134 = vunpack.c.l.b16 %v1966
    %v2135 = vpack.c.b16 %v2132, %v2131
    %v2136 = vpack.c.b16 %v2134, %v2133
    %2139 = vmatprep.subr.bf16.mxu0 0
    %2140 = vmatpush1.bf16.msra.mxu0 0
    %2141 = vmatprep.subr.bf16.mxu0 0
    %2142 = vmatpush1.bf16.msra.mxu0 0
    %2143 = vmatprep.subr.bf16.mxu0 0
    %2144 = vmatpush1.bf16.msra.mxu0 0
    %2145 = vmatprep.subr.bf16.mxu0 0
    %2146 = vmatpush1.bf16.msra.mxu0 0
    %2147 = vmatprep.subr.bf16.mxu0 0
    %2148 = vmatpush1.bf16.msra.mxu0 0
    %2149 = vmatprep.subr.bf16.mxu0 0
    %2150 = vmatpush1.bf16.msra.mxu0 0
    %2151 = vmatprep.subr.bf16.mxu0 0
    %2152 = vmatpush1.bf16.msra.mxu0 %v2136
    %2153 = vmatprep.subr.bf16.mxu0 0
    %2154 = vmatpush1.bf16.msra.mxu0 %v2135
    %2155 = vmatprep.subr.bf16.mxu0 0
    %2156 = vmatpush2.bf16.msra.mxu0 0
    %2157 = vmatprep.subr.bf16.mxu0 0
    %2158 = vmatpush2.bf16.msra.mxu0 0
    %2159 = vmatprep.subr.bf16.mxu0 0
    %2160 = vmatpush2.bf16.msra.mxu0 0
    %2161 = vmatprep.subr.bf16.mxu0 0
    %2162 = vmatpush2.bf16.msra.mxu0 0
    %2163 = vmatprep.subr.bf16.mxu0 0
    %2164 = vmatpush2.bf16.msra.mxu0 0
    %2165 = vmatprep.subr.bf16.mxu0 0
    %2166 = vmatpush2.bf16.msra.mxu0 0
    %2167 = vmatprep.subr.bf16.mxu0 0
    %2168 = vmatpush2.bf16.msra.mxu0 0
    %2169 = vmatprep.subr.bf16.mxu0 0
    %2170 = vmatpush2.bf16.msra.mxu0 0
    %2171 = vmatprep.mubr.bf16.mxu0 0
    %2172 = vmatmul.mubr.bf16.gmra.mxu0 %v1989
    %v2173 = vpop.f32.mrf.mxu0
    %v2174 = vadd.f32 %v2125, %v2173
    %v2175 = vpop.f32.mrf.mxu0
    %v2176 = vpop.f32.mrf.mxu0
    %v2177 = vadd.f32 %v2125, %v2176
    %v2178 = vpop.f32.mrf.mxu0
    %2179 = vdwg.mxu0
    %v2180 = vxor.u32 %v2174, 2147483648
    %v2181 = vxor.u32 %v2177, 2147483648
    %v2182 = vmul.f32 %v2180, 1.442695
    %v2183 = vpow.pop %v2182
    %v2184 = vmul.f32 %v2181, 1.442695
    %v2185 = vpow.pop %v2184
    %v2186 = vadd.f32 %v2183, 1.0
    %v2187 = vadd.f32 %v2185, 1.0
    %v2188 = vrcp.pop %v2186
    %v2189 = vmul.f32 1.0, %v2188
    %v2190 = vrcp.pop %v2187
    %v2191 = vmul.f32 1.0, %v2190
    %v2192 = vmul.f32 %v2174, %v2189
    %v2193 = vmul.f32 %v2177, %v2191
    %v2194 = vlaneseq
    %v2195 = vshrl.u32 %v2194, 7
    %v2196 = vsub.s32 0, %v2195
    %v2197 = vrot.slane %v1942, %v2196
    %v2198 = vmul.f32 %v2119, %v2197
    %v2199 = vmul.f32 %v2120, %v2197
    %v2200 = vlaneseq
    %v2201 = vshrl.u32 %v2200, 7
    %v2202 = vsub.s32 0, %v2201
    %v2203 = vrot.slane %v1943, %v2202
    %v2204 = vmul.f32 %v2192, %v2203
    %v2205 = vmul.f32 %v2193, %v2203
    %v2206 = vadd.f32 %v2198, %v2204
    %v2207 = vadd.f32 %v2199, %v2205
    %v2208 = vmul.f32 %v606, %v2206
    %v2209 = vmul.f32 %v611, %v2207
    %v2210 = vadd.f32 %v1936, %v2208
    %v2211 = vadd.f32 %v1939, %v2209
    %v2212 = vpack.c.bf16 %v2211, %v2210
    %v2214 = vsel %vm382, %v2212, 0
    %2216 = vmatprep.subr.bf16.mxu0 0
    %2217 = vmatpush1.bf16.msra.mxu0 0
    %2218 = vmatprep.subr.bf16.mxu0 0
    %2219 = vmatpush1.bf16.msra.mxu0 0
    %2220 = vmatprep.subr.bf16.mxu0 0
    %2221 = vmatpush1.bf16.msra.mxu0 0
    %2222 = vmatprep.subr.bf16.mxu0 0
    %2223 = vmatpush1.bf16.msra.mxu0 0
    %2224 = vmatprep.subr.bf16.mxu0 0
    %2225 = vmatpush1.bf16.msra.mxu0 0
    %2226 = vmatprep.subr.bf16.mxu0 0
    %2227 = vmatpush1.bf16.msra.mxu0 0
    %2228 = vmatprep.subr.bf16.mxu0 0
    %2229 = vmatpush1.bf16.msra.mxu0 %v2136
    %2230 = vmatprep.subr.bf16.mxu0 0
    %2231 = vmatpush1.bf16.msra.mxu0 %v2135
    %2232 = vmatprep.subr.bf16.mxu0 0
    %2233 = vmatpush2.bf16.msra.mxu0 0
    %2234 = vmatprep.subr.bf16.mxu0 0
    %2235 = vmatpush2.bf16.msra.mxu0 0
    %2236 = vmatprep.subr.bf16.mxu0 0
    %2237 = vmatpush2.bf16.msra.mxu0 0
    %2238 = vmatprep.subr.bf16.mxu0 0
    %2239 = vmatpush2.bf16.msra.mxu0 0
    %2240 = vmatprep.subr.bf16.mxu0 0
    %2241 = vmatpush2.bf16.msra.mxu0 0
    %2242 = vmatprep.subr.bf16.mxu0 0
    %2243 = vmatpush2.bf16.msra.mxu0 0
    %2244 = vmatprep.subr.bf16.mxu0 0
    %2245 = vmatpush2.bf16.msra.mxu0 0
    %2246 = vmatprep.subr.bf16.mxu0 0
    %2247 = vmatpush2.bf16.msra.mxu0 0
    %2248 = vmatprep.mubr.bf16.mxu0 0
    %2249 = vmatmul.mubr.bf16.gmra.mxu0 %v2214
    %v2250 = vpop.f32.mrf.mxu0
    %v2251 = vadd.f32 %v2125, %v2250
    %v2252 = vpop.f32.mrf.mxu0
    %v2253 = vpop.f32.mrf.mxu0
    %v2254 = vpop.f32.mrf.mxu0
    %2255 = vdwg.mxu0
    %v2256 = vxor.u32 %v2251, 2147483648
    %v2257 = vmul.f32 %v2256, 1.442695
    %v2258 = vpow.pop %v2257
    %v2259 = vadd.f32 %v2258, 1.0
    %v2260 = vrcp.pop %v2259
    %v2261 = vmul.f32 1.0, %v2260
    %v2262 = vmul.f32 %v2251, %v2261
    %v2264 = vrot.slane %v2262, 5
    %v2266 = vsel %vm300, 0.0, %v2264
    %v2267 = vmul.f32 %v2266, %v2203
    %v2268 = vmul.f32 %v2264, %v2203
    %v2269 = vadd.f32 %v2198, %v2267
    %v2270 = vadd.f32 %v2199, %v2268
    %v2271 = vmul.f32 %v679, %v2269
    %v2272 = vmul.f32 %v684, %v2270
    %v2273 = vadd.f32 %v2210, %v2271
    %v2274 = vadd.f32 %v2211, %v2272
    %v2275 = vadd.f32 %v688, %v2273
    %v2276 = vadd.f32 %v689, %v2274
    %v2277 = vsel %vm382, %v2275, 0.0
    %2278 = vadd.xlane.f32.xlu0 %v2277
    %v2279 = vpop.xlane.xlu0 %2278
    %v2280 = vsel %vm693, %v2276, 0.0
    %2281 = vadd.xlane.f32.xlu0 %v2280
    %v2282 = vpop.xlane.xlu0 %2281
    %v2283 = vmul.f32 %v2279, %v697
    %v2284 = vmul.f32 %v2282, %v697
    %v2285 = vsub.f32 %v2275, %v2283
    %v2286 = vsub.f32 %v2276, %v2284
    %v2287 = vmul.f32 %v2285, %v2285
    %v2288 = vmul.f32 %v2286, %v2286
    %v2289 = vsel %vm382, %v2287, 0.0
    %2290 = vadd.xlane.f32.xlu0 %v2289
    %v2291 = vpop.xlane.xlu0 %2290
    %v2292 = vsel %vm693, %v2288, 0.0
    %2293 = vadd.xlane.f32.xlu0 %v2292
    %v2294 = vpop.xlane.xlu0 %2293
    %v2295 = vmul.f32 %v2291, %v697
    %v2296 = vmul.f32 %v2294, %v697
    %v2297 = vadd.f32 %v2295, 1e-05
    %v2298 = vadd.f32 %v2296, 1e-05
    %v2299 = vrsqrt.pop %v2297
    %v2300 = vrsqrt.pop %v2298
    %v2301 = vmul.f32 %v2285, %v2299
    %v2302 = vmul.f32 %v2286, %v2300
    %s2303 = scalar_lea.vmem %s33, 1
    %v2304 = vld [vmem:[%s2303] sm:$0x1]
    %v2306 = vlaneseq
    %v2307 = vshrl.u32 %v2306, 7
    %v2308 = vsub.s32 0, %v2307
    %v2309 = vrot.slane %v2304, %v2308
    %v2311 = vmul.f32 %v2301, %v2309
    %v2312 = vmul.f32 %v2302, %v2309
    %s2313 = scalar_lea.vmem %s35, 1
    %v2314 = vld [vmem:[%s2313] sm:$0x1]
    %v2316 = vlaneseq
    %v2317 = vshrl.u32 %v2316, 7
    %v2318 = vsub.s32 0, %v2317
    %v2319 = vrot.slane %v2314, %v2318
    %v2321 = vadd.f32 %v2311, %v2319
    %v2322 = vadd.f32 %v2312, %v2319
    %s2323 = scalar_lea.vmem %s37, 16
    %v2324 = vld [vmem:[%s2323] sm:$0xf]
    %v2325 = vld [vmem:[%s2323 + $0x4] sm:$0xf]
    %v2326 = vld [vmem:[%s2323 + $0x8] sm:$0xf]
    %v2327 = vld [vmem:[%s2323 + $0xc] sm:$0xf]
    %v2328 = vpack.c.bf16 %v2322, %v2321
    %v2333 = vunpack.c.l.b16 %v2324
    %v2334 = vunpack.c.l.b16 %v2325
    %v2335 = vunpack.c.l.b16 %v2326
    %v2336 = vunpack.c.l.b16 %v2327
    %v2337 = vpack.c.b16 %v2334, %v2333
    %v2338 = vpack.c.b16 %v2336, %v2335
    %v2342 = vsel %vm382, %v2328, 0
    %2344 = vmatprep.subr.bf16.mxu0 0
    %2345 = vmatpush1.bf16.msra.mxu0 0
    %2346 = vmatprep.subr.bf16.mxu0 0
    %2347 = vmatpush1.bf16.msra.mxu0 0
    %2348 = vmatprep.subr.bf16.mxu0 0
    %2349 = vmatpush1.bf16.msra.mxu0 0
    %2350 = vmatprep.subr.bf16.mxu0 0
    %2351 = vmatpush1.bf16.msra.mxu0 0
    %2352 = vmatprep.subr.bf16.mxu0 0
    %2353 = vmatpush1.bf16.msra.mxu0 0
    %2354 = vmatprep.subr.bf16.mxu0 0
    %2355 = vmatpush1.bf16.msra.mxu0 0
    %2356 = vmatprep.subr.bf16.mxu0 0
    %2357 = vmatpush1.bf16.msra.mxu0 %v2338
    %2358 = vmatprep.subr.bf16.mxu0 0
    %2359 = vmatpush1.bf16.msra.mxu0 %v2337
    %2360 = vmatprep.subr.bf16.mxu0 0
    %2361 = vmatpush2.bf16.msra.mxu0 0
    %2362 = vmatprep.subr.bf16.mxu0 0
    %2363 = vmatpush2.bf16.msra.mxu0 0
    %2364 = vmatprep.subr.bf16.mxu0 0
    %2365 = vmatpush2.bf16.msra.mxu0 0
    %2366 = vmatprep.subr.bf16.mxu0 0
    %2367 = vmatpush2.bf16.msra.mxu0 0
    %2368 = vmatprep.subr.bf16.mxu0 0
    %2369 = vmatpush2.bf16.msra.mxu0 0
    %2370 = vmatprep.subr.bf16.mxu0 0
    %2371 = vmatpush2.bf16.msra.mxu0 0
    %2372 = vmatprep.subr.bf16.mxu0 0
    %2373 = vmatpush2.bf16.msra.mxu0 0
    %2374 = vmatprep.subr.bf16.mxu0 0
    %2375 = vmatpush2.bf16.msra.mxu0 0
    %2376 = vmatprep.mubr.bf16.mxu0 0
    %2377 = vmatmul.mubr.bf16.gmra.mxu0 %v2342
    %v2378 = vpop.f32.mrf.mxu0
    %v2379 = vadd.f32 0.0, %v2378
    %v2380 = vpop.f32.mrf.mxu0
    %v2381 = vpop.f32.mrf.mxu0
    %v2382 = vadd.f32 0.0, %v2381
    %v2383 = vpop.f32.mrf.mxu0
    %2384 = vdwg.mxu0
    %s2385 = scalar_lea.vmem %s39, 4
    %v2386 = vld [vmem:[%s2385] sm:$0xf]
    %s2387 = scalar_lea.vmem %s41, 1
    %v2388 = vld [vmem:[%s2387] sm:$0x1]
    %v2391 = vrot.slane %v2379, 5
    %v2392 = vrot.slane %v2382, 5
    %v2393 = vsel %vm300, %v2391, %v2392
    %v2396 = vsel %vm300, 0.0, %v2391
    %v2397 = vlaneseq
    %v2398 = vshrl.u32 %v2397, 7
    %v2399 = vsub.s32 0, %v2398
    %v2400 = vrot.slane %v2386, %v2399
    %v2401 = vmul.f32 %v2396, %v2400
    %v2402 = vmul.f32 %v2393, %v2400
    %v2403 = vsel %vm823, %v2401, 0.0
    %v2404 = vsel %vm824, %v2402, 0.0
    %v2406 = vlaneseq
    %v2407 = vshrl.u32 %v2406, 7
    %v2408 = vsub.s32 0, %v2407
    %v2409 = vrot.slane %v2388, %v2408
    %v2411 = vadd.f32 %v2409, %v2403
    %v2412 = vadd.f32 %v2409, %v2404
    %v2413 = vlaneseq
    %v2414 = vshrl.u32 %v2413, 7
    %v2415 = vsub.s32 1, %v2414
    %v2416 = vrot.slane %v2386, %v2415
    %v2417 = vmul.f32 %v2396, %v2416
    %v2418 = vmul.f32 %v2393, %v2416
    %v2421 = vrot.slane %v2417, 1
    %v2422 = vrot.slane %v2418, 1
    %v2423 = vsel %vm304, %v2421, %v2422
    %v2426 = vsel %vm851, %v2423, 0.0
    %v2427 = vsel %vm852, %v2422, 0.0
    %v2428 = vadd.f32 %v2411, %v2426
    %v2429 = vadd.f32 %v2412, %v2427
    %v2430 = vlaneseq
    %v2431 = vshrl.u32 %v2430, 7
    %v2432 = vsub.s32 2, %v2431
    %v2433 = vrot.slane %v2386, %v2432
    %v2434 = vmul.f32 %v2396, %v2433
    %v2435 = vmul.f32 %v2393, %v2433
    %v2438 = vrot.slane %v2434, 2
    %v2439 = vrot.slane %v2435, 2
    %v2440 = vsel %vm884, %v2438, %v2439
    %v2443 = vsel %vm880, %v2440, 0.0
    %v2444 = vsel %vm881, %v2439, 0.0
    %v2445 = vadd.f32 %v2428, %v2443
    %v2446 = vadd.f32 %v2429, %v2444
    %v2447 = vlaneseq
    %v2448 = vshrl.u32 %v2447, 7
    %v2449 = vsub.s32 3, %v2448
    %v2450 = vrot.slane %v2386, %v2449
    %v2451 = vmul.f32 %v2396, %v2450
    %v2452 = vmul.f32 %v2393, %v2450
    %v2455 = vrot.slane %v2451, 3
    %v2456 = vrot.slane %v2452, 3
    %v2457 = vsel %vm302, %v2455, %v2456
    %v2460 = vadd.f32 %v2445, %v2457
    %v2461 = vadd.f32 %v2446, %v2456
    %v2462 = vxor.u32 %v2460, 2147483648
    %v2463 = vxor.u32 %v2461, 2147483648
    %v2464 = vmul.f32 %v2462, 1.442695
    %v2465 = vpow.pop %v2464
    %v2466 = vmul.f32 %v2463, 1.442695
    %v2467 = vpow.pop %v2466
    %v2468 = vadd.f32 %v2465, 1.0
    %v2469 = vadd.f32 %v2467, 1.0
    %v2470 = vrcp.pop %v2468
    %v2471 = vmul.f32 1.0, %v2470
    %v2472 = vrcp.pop %v2469
    %v2473 = vmul.f32 1.0, %v2472
    %v2474 = vmul.f32 %v2460, %v2471
    %v2475 = vmul.f32 %v2461, %v2473
    %s2476 = scalar_lea.vmem %s43, 32
    %v2477 = vld [vmem:[%s2476] sm:$0xf]
    %v2478 = vld [vmem:[%s2476 + $0x4] sm:$0xf]
    %v2479 = vld [vmem:[%s2476 + $0x8] sm:$0xf]
    %v2480 = vld [vmem:[%s2476 + $0xc] sm:$0xf]
    %v2481 = vld [vmem:[%s2476 + $0x10] sm:$0xf]
    %v2482 = vld [vmem:[%s2476 + $0x14] sm:$0xf]
    %v2483 = vld [vmem:[%s2476 + $0x18] sm:$0xf]
    %v2484 = vld [vmem:[%s2476 + $0x1c] sm:$0xf]
    %v2485 = vpack.c.bf16 %v2475, %v2474
    %s2486 = scalar_lea.vmem %s47, 1
    %v2487 = vld [vmem:[%s2486] sm:$0x1]
    %v2489 = vlaneseq
    %v2490 = vshrl.u32 %v2489, 7
    %v2491 = vsub.s32 0, %v2490
    %v2492 = vrot.slane %v2487, %v2491
    %v2502 = vunpack.c.l.b16 %v2477
    %v2503 = vunpack.c.l.b16 %v2478
    %v2504 = vunpack.c.l.b16 %v2479
    %v2505 = vunpack.c.l.b16 %v2480
    %v2506 = vunpack.c.l.b16 %v2481
    %v2507 = vunpack.c.l.b16 %v2482
    %v2508 = vunpack.c.l.b16 %v2483
    %v2509 = vunpack.c.l.b16 %v2484
    %v2510 = vpack.c.b16 %v2503, %v2502
    %v2511 = vpack.c.b16 %v2505, %v2504
    %v2512 = vpack.c.b16 %v2507, %v2506
    %v2513 = vpack.c.b16 %v2509, %v2508
    %v2519 = vsel %vm242, %v2485, 0
    %2521 = vmatprep.subr.bf16.mxu0 0
    %2522 = vmatpush1.bf16.msra.mxu0 0
    %2523 = vmatprep.subr.bf16.mxu0 0
    %2524 = vmatpush1.bf16.msra.mxu0 0
    %2525 = vmatprep.subr.bf16.mxu0 0
    %2526 = vmatpush1.bf16.msra.mxu0 0
    %2527 = vmatprep.subr.bf16.mxu0 0
    %2528 = vmatpush1.bf16.msra.mxu0 0
    %2529 = vmatprep.subr.bf16.mxu0 0
    %2530 = vmatpush1.bf16.msra.mxu0 %v2513
    %2531 = vmatprep.subr.bf16.mxu0 0
    %2532 = vmatpush1.bf16.msra.mxu0 %v2512
    %2533 = vmatprep.subr.bf16.mxu0 0
    %2534 = vmatpush1.bf16.msra.mxu0 %v2511
    %2535 = vmatprep.subr.bf16.mxu0 0
    %2536 = vmatpush1.bf16.msra.mxu0 %v2510
    %2537 = vmatprep.subr.bf16.mxu0 0
    %2538 = vmatpush2.bf16.msra.mxu0 0
    %2539 = vmatprep.subr.bf16.mxu0 0
    %2540 = vmatpush2.bf16.msra.mxu0 0
    %2541 = vmatprep.subr.bf16.mxu0 0
    %2542 = vmatpush2.bf16.msra.mxu0 0
    %2543 = vmatprep.subr.bf16.mxu0 0
    %2544 = vmatpush2.bf16.msra.mxu0 0
    %2545 = vmatprep.subr.bf16.mxu0 0
    %2546 = vmatpush2.bf16.msra.mxu0 0
    %2547 = vmatprep.subr.bf16.mxu0 0
    %2548 = vmatpush2.bf16.msra.mxu0 0
    %2549 = vmatprep.subr.bf16.mxu0 0
    %2550 = vmatpush2.bf16.msra.mxu0 0
    %2551 = vmatprep.subr.bf16.mxu0 0
    %2552 = vmatpush2.bf16.msra.mxu0 0
    %2553 = vmatprep.mubr.bf16.mxu0 0
    %2554 = vmatmul.mubr.bf16.gmra.mxu0 %v2519
    %v2555 = vpop.f32.mrf.mxu0
    %v2556 = vadd.f32 %v2492, %v2555
    %v2557 = vpop.f32.mrf.mxu0
    %v2558 = vpop.f32.mrf.mxu0
    %v2559 = vadd.f32 %v2492, %v2558
    %v2560 = vpop.f32.mrf.mxu0
    %2561 = vdwg.mxu0
    %v2562 = vmax.f32 %v2556, 0.0
    %v2563 = vmax.f32 %v2559, 0.0
    %vm2564 = vcmp.ne.f32.partialorder %v2556, %v2556
    %vm2565 = vcmp.ne.f32.partialorder %v2559, %v2559
    %v2566 = vadd.f32 %v2556, 0.0
    %v2567 = vadd.f32 %v2559, 0.0
    %v2568 = vand.u32 2147483647, %v2556
    %v2569 = vand.u32 2147483647, %v2559
    %v2570 = vsub.f32 0.0, %v2568
    %v2571 = vsub.f32 0.0, %v2569
    %v2572 = vmul.f32 %v2570, 1.442695
    %v2573 = vpow.pop %v2572
    %v2574 = vmul.f32 %v2571, 1.442695
    %v2575 = vpow.pop %v2574
    %v2576 = vadd.f32 %v2573, 1.0
    %v2577 = vlog2.pop %v2576
    %v2578 = vmul.f32 %v2577, 0.6931472
    %v2579 = vmul.f32 -0.5, %v2573
    %v2580 = vadd.f32 %v2579, 1.0
    %v2581 = vmul.f32 %v2580, %v2573
    %v2582 = vand.u32 2147483647, %v2573
    %vm2583 = vcmp.lt.f32.partialorder %v2582, 0.0004427343
    %v2584 = vsel %vm2583, %v2581, %v2578
    %v2585 = vadd.f32 %v2575, 1.0
    %v2586 = vlog2.pop %v2585
    %v2587 = vmul.f32 %v2586, 0.6931472
    %v2588 = vmul.f32 -0.5, %v2575
    %v2589 = vadd.f32 %v2588, 1.0
    %v2590 = vmul.f32 %v2589, %v2575
    %v2591 = vand.u32 2147483647, %v2575
    %vm2592 = vcmp.lt.f32.partialorder %v2591, 0.0004427343
    %v2593 = vsel %vm2592, %v2590, %v2587
    %v2594 = vadd.f32 %v2562, %v2584
    %v2595 = vadd.f32 %v2563, %v2593
    %v2596 = vsel %vm2564, %v2566, %v2594
    %v2597 = vsel %vm2565, %v2567, %v2595
    %s2598 = scalar_lea.vmem %s45, 32
    %v2599 = vld [vmem:[%s2598] sm:$0xf]
    %v2600 = vld [vmem:[%s2598 + $0x4] sm:$0xf]
    %v2601 = vld [vmem:[%s2598 + $0x8] sm:$0xf]
    %v2602 = vld [vmem:[%s2598 + $0xc] sm:$0xf]
    %v2603 = vld [vmem:[%s2598 + $0x10] sm:$0xf]
    %v2604 = vld [vmem:[%s2598 + $0x14] sm:$0xf]
    %v2605 = vld [vmem:[%s2598 + $0x18] sm:$0xf]
    %v2606 = vld [vmem:[%s2598 + $0x1c] sm:$0xf]
    %v2615 = vunpack.c.l.b16 %v2599
    %v2616 = vunpack.c.l.b16 %v2600
    %v2617 = vunpack.c.l.b16 %v2601
    %v2618 = vunpack.c.l.b16 %v2602
    %v2619 = vunpack.c.l.b16 %v2603
    %v2620 = vunpack.c.l.b16 %v2604
    %v2621 = vunpack.c.l.b16 %v2605
    %v2622 = vunpack.c.l.b16 %v2606
    %v2623 = vpack.c.b16 %v2616, %v2615
    %v2624 = vpack.c.b16 %v2618, %v2617
    %v2625 = vpack.c.b16 %v2620, %v2619
    %v2626 = vpack.c.b16 %v2622, %v2621
    %2631 = vmatprep.subr.bf16.mxu0 0
    %2632 = vmatpush1.bf16.msra.mxu0 0
    %2633 = vmatprep.subr.bf16.mxu0 0
    %2634 = vmatpush1.bf16.msra.mxu0 0
    %2635 = vmatprep.subr.bf16.mxu0 0
    %2636 = vmatpush1.bf16.msra.mxu0 0
    %2637 = vmatprep.subr.bf16.mxu0 0
    %2638 = vmatpush1.bf16.msra.mxu0 0
    %2639 = vmatprep.subr.bf16.mxu0 0
    %2640 = vmatpush1.bf16.msra.mxu0 %v2626
    %2641 = vmatprep.subr.bf16.mxu0 0
    %2642 = vmatpush1.bf16.msra.mxu0 %v2625
    %2643 = vmatprep.subr.bf16.mxu0 0
    %2644 = vmatpush1.bf16.msra.mxu0 %v2624
    %2645 = vmatprep.subr.bf16.mxu0 0
    %2646 = vmatpush1.bf16.msra.mxu0 %v2623
    %2647 = vmatprep.subr.bf16.mxu0 0
    %2648 = vmatpush2.bf16.msra.mxu0 0
    %2649 = vmatprep.subr.bf16.mxu0 0
    %2650 = vmatpush2.bf16.msra.mxu0 0
    %2651 = vmatprep.subr.bf16.mxu0 0
    %2652 = vmatpush2.bf16.msra.mxu0 0
    %2653 = vmatprep.subr.bf16.mxu0 0
    %2654 = vmatpush2.bf16.msra.mxu0 0
    %2655 = vmatprep.subr.bf16.mxu0 0
    %2656 = vmatpush2.bf16.msra.mxu0 0
    %2657 = vmatprep.subr.bf16.mxu0 0
    %2658 = vmatpush2.bf16.msra.mxu0 0
    %2659 = vmatprep.subr.bf16.mxu0 0
    %2660 = vmatpush2.bf16.msra.mxu0 0
    %2661 = vmatprep.subr.bf16.mxu0 0
    %2662 = vmatpush2.bf16.msra.mxu0 0
    %2663 = vmatprep.mubr.bf16.mxu0 0
    %2664 = vmatmul.mubr.bf16.gmra.mxu0 %v2519
    %v2665 = vpop.f32.mrf.mxu0
    %v2666 = vadd.f32 0.0, %v2665
    %v2667 = vpop.f32.mrf.mxu0
    %v2668 = vpop.f32.mrf.mxu0
    %v2669 = vadd.f32 0.0, %v2668
    %v2670 = vpop.f32.mrf.mxu0
    %2671 = vdwg.mxu0
    %v2672 = vmul.f32 %v2596, %v2474
    %v2673 = vmul.f32 %v2597, %v2475
    %v2675 = vsel %vm298, %v2597, 0
    %2677 = vmatprep.subr.mxu0 0.0
    %2678 = vmatpush1.msra.mxu0 0.0
    %2679 = vmatprep.subr.mxu0 0.0
    %2680 = vmatpush1.msra.mxu0 0.0
    %2681 = vmatprep.subr.mxu0 0.0
    %2682 = vmatpush1.msra.mxu0 0.0
    %2683 = vmatprep.subr.mxu0 0.0
    %2684 = vmatpush1.msra.mxu0 0.0
    %2685 = vmatprep.subr.mxu0 0.0
    %2686 = vmatpush1.msra.mxu0 0.0
    %2687 = vmatprep.subr.mxu0 0.0
    %2688 = vmatpush1.msra.mxu0 0.0
    %2689 = vmatprep.subr.mxu0 0.0
    %2690 = vmatpush1.msra.mxu0 0.0
    %2691 = vmatprep.subr.mxu0 0.0
    %2692 = vmatpush1.msra.mxu0 0.0
    %2693 = vmatprep.subr.mxu0 0.0
    %2694 = vmatpush1.msra.mxu0 0.0
    %2695 = vmatprep.subr.mxu0 0.0
    %2696 = vmatpush1.msra.mxu0 0.0
    %2697 = vmatprep.subr.mxu0 0.0
    %2698 = vmatpush1.msra.mxu0 0.0
    %2699 = vmatprep.subr.mxu0 0.0
    %2700 = vmatpush1.msra.mxu0 0.0
    %2701 = vmatprep.subr.mxu0 0.0
    %2702 = vmatpush1.msra.mxu0 0.0
    %2703 = vmatprep.subr.mxu0 0.0
    %2704 = vmatpush1.msra.mxu0 0.0
    %2705 = vmatprep.subr.mxu0 0.0
    %2706 = vmatpush1.msra.mxu0 %v2675
    %2707 = vmatprep.subr.mxu0 0.0
    %2708 = vmatpush1.msra.mxu0 %v2596
    %2709 = vmatprep.subr.mxu0 0.0
    %2710 = vmatpush2.msra.mxu0 0.0
    %2711 = vmatprep.subr.mxu0 0.0
    %2712 = vmatpush2.msra.mxu0 0.0
    %2713 = vmatprep.subr.mxu0 0.0
    %2714 = vmatpush2.msra.mxu0 0.0
    %2715 = vmatprep.subr.mxu0 0.0
    %2716 = vmatpush2.msra.mxu0 0.0
    %2717 = vmatprep.subr.mxu0 0.0
    %2718 = vmatpush2.msra.mxu0 0.0
    %2719 = vmatprep.subr.mxu0 0.0
    %2720 = vmatpush2.msra.mxu0 0.0
    %2721 = vmatprep.subr.mxu0 0.0
    %2722 = vmatpush2.msra.mxu0 0.0
    %2723 = vmatprep.subr.mxu0 0.0
    %2724 = vmatpush2.msra.mxu0 0.0
    %2725 = vmatprep.subr.mxu0 0.0
    %2726 = vmatpush2.msra.mxu0 0.0
    %2727 = vmatprep.subr.mxu0 0.0
    %2728 = vmatpush2.msra.mxu0 0.0
    %2729 = vmatprep.subr.mxu0 0.0
    %2730 = vmatpush2.msra.mxu0 0.0
    %2731 = vmatprep.subr.mxu0 0.0
    %2732 = vmatpush2.msra.mxu0 0.0
    %2733 = vmatprep.subr.mxu0 0.0
    %2734 = vmatpush2.msra.mxu0 0.0
    %2735 = vmatprep.subr.mxu0 0.0
    %2736 = vmatpush2.msra.mxu0 0.0
    %2737 = vmatprep.subr.mxu0 0.0
    %2738 = vmatpush2.msra.mxu0 0.0
    %2739 = vmatprep.subr.mxu0 0.0
    %2740 = vmatpush2.msra.mxu0 0.0
    %2741 = vmatprep.mubr.f32.mxu0 0.0
    %2742 = vmatmul.mubr.f32.gmra.mxu0 %v1120
    %v2743 = vpop.f32.mrf.mxu0
    %v2744 = vpop.f32.mrf.mxu0
    %2745 = vmatprep.mubr.f32.mxu0 0.0
    %2746 = vmatmul.mubr.f32.gmra.mxu0 %v1123
    %v2747 = vpop.f32.mrf.mxu0
    %v2748 = vadd.f32 0.0, %v2747
    %v2749 = vpop.f32.mrf.mxu0
    %2750 = vmatprep.mubr.f32.mxu0 0.0
    %2751 = vmatmul.mubr.f32.gmra.mxu0 %v1126
    %v2752 = vpop.f32.mrf.mxu0
    %v2753 = vadd.f32 0.0, %v2752
    %v2754 = vpop.f32.mrf.mxu0
    %2755 = vmatprep.mubr.f32.mxu0 0.0
    %2756 = vmatmul.mubr.f32.gmra.mxu0 %v1129
    %v2757 = vpop.f32.mrf.mxu0
    %v2758 = vadd.f32 0.0, %v2757
    %v2759 = vpop.f32.mrf.mxu0
    %2760 = vmatprep.mubr.f32.mxu0 0.0
    %2761 = vmatmul.mubr.f32.gmra.mxu0 %v1132
    %v2762 = vpop.f32.mrf.mxu0
    %v2763 = vadd.f32 0.0, %v2762
    %v2764 = vpop.f32.mrf.mxu0
    %2765 = vmatprep.mubr.f32.mxu0 0.0
    %2766 = vmatmul.mubr.f32.gmra.mxu0 %v1135
    %v2767 = vpop.f32.mrf.mxu0
    %v2768 = vpop.f32.mrf.mxu0
    %2769 = vmatprep.mubr.f32.mxu0 0.0
    %2770 = vmatmul.mubr.f32.gmra.mxu0 %v1138
    %v2771 = vpop.f32.mrf.mxu0
    %v2772 = vadd.f32 0.0, %v2771
    %v2773 = vpop.f32.mrf.mxu0
    %2774 = vmatprep.mubr.f32.mxu0 0.0
    %2775 = vmatmul.mubr.f32.gmra.mxu0 %v1141
    %v2776 = vpop.f32.mrf.mxu0
    %v2777 = vadd.f32 0.0, %v2776
    %v2778 = vpop.f32.mrf.mxu0
    %2779 = vmatprep.mubr.f32.mxu0 0.0
    %2780 = vmatmul.mubr.f32.gmra.mxu0 %v1144
    %v2781 = vpop.f32.mrf.mxu0
    %v2782 = vadd.f32 0.0, %v2781
    %v2783 = vpop.f32.mrf.mxu0
    %2784 = vmatprep.mubr.f32.mxu0 0.0
    %2785 = vmatmul.mubr.f32.gmra.mxu0 %v1147
    %v2786 = vpop.f32.mrf.mxu0
    %v2787 = vadd.f32 0.0, %v2786
    %v2788 = vpop.f32.mrf.mxu0
    %2789 = vdwg.mxu0
    %v2791 = vsel %vm298, %v2673, 0
    %2793 = vmatprep.subr.mxu0 0.0
    %2794 = vmatpush1.msra.mxu0 0.0
    %2795 = vmatprep.subr.mxu0 0.0
    %2796 = vmatpush1.msra.mxu0 0.0
    %2797 = vmatprep.subr.mxu0 0.0
    %2798 = vmatpush1.msra.mxu0 0.0
    %2799 = vmatprep.subr.mxu0 0.0
    %2800 = vmatpush1.msra.mxu0 0.0
    %2801 = vmatprep.subr.mxu0 0.0
    %2802 = vmatpush1.msra.mxu0 0.0
    %2803 = vmatprep.subr.mxu0 0.0
    %2804 = vmatpush1.msra.mxu0 0.0
    %2805 = vmatprep.subr.mxu0 0.0
    %2806 = vmatpush1.msra.mxu0 0.0
    %2807 = vmatprep.subr.mxu0 0.0
    %2808 = vmatpush1.msra.mxu0 0.0
    %2809 = vmatprep.subr.mxu0 0.0
    %2810 = vmatpush1.msra.mxu0 0.0
    %2811 = vmatprep.subr.mxu0 0.0
    %2812 = vmatpush1.msra.mxu0 0.0
    %2813 = vmatprep.subr.mxu0 0.0
    %2814 = vmatpush1.msra.mxu0 0.0
    %2815 = vmatprep.subr.mxu0 0.0
    %2816 = vmatpush1.msra.mxu0 0.0
    %2817 = vmatprep.subr.mxu0 0.0
    %2818 = vmatpush1.msra.mxu0 0.0
    %2819 = vmatprep.subr.mxu0 0.0
    %2820 = vmatpush1.msra.mxu0 0.0
    %2821 = vmatprep.subr.mxu0 0.0
    %2822 = vmatpush1.msra.mxu0 %v2791
    %2823 = vmatprep.subr.mxu0 0.0
    %2824 = vmatpush1.msra.mxu0 %v2672
    %2825 = vmatprep.subr.mxu0 0.0
    %2826 = vmatpush2.msra.mxu0 0.0
    %2827 = vmatprep.subr.mxu0 0.0
    %2828 = vmatpush2.msra.mxu0 0.0
    %2829 = vmatprep.subr.mxu0 0.0
    %2830 = vmatpush2.msra.mxu0 0.0
    %2831 = vmatprep.subr.mxu0 0.0
    %2832 = vmatpush2.msra.mxu0 0.0
    %2833 = vmatprep.subr.mxu0 0.0
    %2834 = vmatpush2.msra.mxu0 0.0
    %2835 = vmatprep.subr.mxu0 0.0
    %2836 = vmatpush2.msra.mxu0 0.0
    %2837 = vmatprep.subr.mxu0 0.0
    %2838 = vmatpush2.msra.mxu0 0.0
    %2839 = vmatprep.subr.mxu0 0.0
    %2840 = vmatpush2.msra.mxu0 0.0
    %2841 = vmatprep.subr.mxu0 0.0
    %2842 = vmatpush2.msra.mxu0 0.0
    %2843 = vmatprep.subr.mxu0 0.0
    %2844 = vmatpush2.msra.mxu0 0.0
    %2845 = vmatprep.subr.mxu0 0.0
    %2846 = vmatpush2.msra.mxu0 0.0
    %2847 = vmatprep.subr.mxu0 0.0
    %2848 = vmatpush2.msra.mxu0 0.0
    %2849 = vmatprep.subr.mxu0 0.0
    %2850 = vmatpush2.msra.mxu0 0.0
    %2851 = vmatprep.subr.mxu0 0.0
    %2852 = vmatpush2.msra.mxu0 0.0
    %2853 = vmatprep.subr.mxu0 0.0
    %2854 = vmatpush2.msra.mxu0 0.0
    %2855 = vmatprep.subr.mxu0 0.0
    %2856 = vmatpush2.msra.mxu0 0.0
    %2857 = vmatprep.mubr.f32.mxu0 0.0
    %2858 = vmatmul.mubr.f32.gmra.mxu0 %v1120
    %v2859 = vpop.f32.mrf.mxu0
    %v2860 = vadd.f32 0.0, %v2859
    %v2861 = vpop.f32.mrf.mxu0
    %2862 = vmatprep.mubr.f32.mxu0 0.0
    %2863 = vmatmul.mubr.f32.gmra.mxu0 %v1123
    %v2864 = vpop.f32.mrf.mxu0
    %v2865 = vadd.f32 0.0, %v2864
    %v2866 = vpop.f32.mrf.mxu0
    %2867 = vmatprep.mubr.f32.mxu0 0.0
    %2868 = vmatmul.mubr.f32.gmra.mxu0 %v1126
    %v2869 = vpop.f32.mrf.mxu0
    %v2870 = vadd.f32 0.0, %v2869
    %v2871 = vpop.f32.mrf.mxu0
    %2872 = vmatprep.mubr.f32.mxu0 0.0
    %2873 = vmatmul.mubr.f32.gmra.mxu0 %v1129
    %v2874 = vpop.f32.mrf.mxu0
    %v2875 = vadd.f32 0.0, %v2874
    %v2876 = vpop.f32.mrf.mxu0
    %2877 = vmatprep.mubr.f32.mxu0 0.0
    %2878 = vmatmul.mubr.f32.gmra.mxu0 %v1132
    %v2879 = vpop.f32.mrf.mxu0
    %v2880 = vadd.f32 0.0, %v2879
    %v2881 = vpop.f32.mrf.mxu0
    %2882 = vmatprep.mubr.f32.mxu0 0.0
    %2883 = vmatmul.mubr.f32.gmra.mxu0 %v1135
    %v2884 = vpop.f32.mrf.mxu0
    %v2885 = vadd.f32 0.0, %v2884
    %v2886 = vpop.f32.mrf.mxu0
    %2887 = vmatprep.mubr.f32.mxu0 0.0
    %2888 = vmatmul.mubr.f32.gmra.mxu0 %v1138
    %v2889 = vpop.f32.mrf.mxu0
    %v2890 = vadd.f32 0.0, %v2889
    %v2891 = vpop.f32.mrf.mxu0
    %2892 = vmatprep.mubr.f32.mxu0 0.0
    %2893 = vmatmul.mubr.f32.gmra.mxu0 %v1141
    %v2894 = vpop.f32.mrf.mxu0
    %v2895 = vadd.f32 0.0, %v2894
    %v2896 = vpop.f32.mrf.mxu0
    %2897 = vmatprep.mubr.f32.mxu0 0.0
    %2898 = vmatmul.mubr.f32.gmra.mxu0 %v1144
    %v2899 = vpop.f32.mrf.mxu0
    %v2900 = vadd.f32 0.0, %v2899
    %v2901 = vpop.f32.mrf.mxu0
    %2902 = vmatprep.mubr.f32.mxu0 0.0
    %2903 = vmatmul.mubr.f32.gmra.mxu0 %v1147
    %v2904 = vpop.f32.mrf.mxu0
    %v2905 = vadd.f32 0.0, %v2904
    %v2906 = vpop.f32.mrf.mxu0
    %2907 = vdwg.mxu0
    %v2909 = vsel %vm298, %v2669, 0
    %2911 = vmatprep.subr.mxu0 0.0
    %2912 = vmatpush1.msra.mxu0 0.0
    %2913 = vmatprep.subr.mxu0 0.0
    %2914 = vmatpush1.msra.mxu0 0.0
    %2915 = vmatprep.subr.mxu0 0.0
    %2916 = vmatpush1.msra.mxu0 0.0
    %2917 = vmatprep.subr.mxu0 0.0
    %2918 = vmatpush1.msra.mxu0 0.0
    %2919 = vmatprep.subr.mxu0 0.0
    %2920 = vmatpush1.msra.mxu0 0.0
    %2921 = vmatprep.subr.mxu0 0.0
    %2922 = vmatpush1.msra.mxu0 0.0
    %2923 = vmatprep.subr.mxu0 0.0
    %2924 = vmatpush1.msra.mxu0 0.0
    %2925 = vmatprep.subr.mxu0 0.0
    %2926 = vmatpush1.msra.mxu0 0.0
    %2927 = vmatprep.subr.mxu0 0.0
    %2928 = vmatpush1.msra.mxu0 0.0
    %2929 = vmatprep.subr.mxu0 0.0
    %2930 = vmatpush1.msra.mxu0 0.0
    %2931 = vmatprep.subr.mxu0 0.0
    %2932 = vmatpush1.msra.mxu0 0.0
    %2933 = vmatprep.subr.mxu0 0.0
    %2934 = vmatpush1.msra.mxu0 0.0
    %2935 = vmatprep.subr.mxu0 0.0
    %2936 = vmatpush1.msra.mxu0 0.0
    %2937 = vmatprep.subr.mxu0 0.0
    %2938 = vmatpush1.msra.mxu0 0.0
    %2939 = vmatprep.subr.mxu0 0.0
    %2940 = vmatpush1.msra.mxu0 %v2909
    %2941 = vmatprep.subr.mxu0 0.0
    %2942 = vmatpush1.msra.mxu0 %v2666
    %2943 = vmatprep.subr.mxu0 0.0
    %2944 = vmatpush2.msra.mxu0 0.0
    %2945 = vmatprep.subr.mxu0 0.0
    %2946 = vmatpush2.msra.mxu0 0.0
    %2947 = vmatprep.subr.mxu0 0.0
    %2948 = vmatpush2.msra.mxu0 0.0
    %2949 = vmatprep.subr.mxu0 0.0
    %2950 = vmatpush2.msra.mxu0 0.0
    %2951 = vmatprep.subr.mxu0 0.0
    %2952 = vmatpush2.msra.mxu0 0.0
    %2953 = vmatprep.subr.mxu0 0.0
    %2954 = vmatpush2.msra.mxu0 0.0
    %2955 = vmatprep.subr.mxu0 0.0
    %2956 = vmatpush2.msra.mxu0 0.0
    %2957 = vmatprep.subr.mxu0 0.0
    %2958 = vmatpush2.msra.mxu0 0.0
    %2959 = vmatprep.subr.mxu0 0.0
    %2960 = vmatpush2.msra.mxu0 0.0
    %2961 = vmatprep.subr.mxu0 0.0
    %2962 = vmatpush2.msra.mxu0 0.0
    %2963 = vmatprep.subr.mxu0 0.0
    %2964 = vmatpush2.msra.mxu0 0.0
    %2965 = vmatprep.subr.mxu0 0.0
    %2966 = vmatpush2.msra.mxu0 0.0
    %2967 = vmatprep.subr.mxu0 0.0
    %2968 = vmatpush2.msra.mxu0 0.0
    %2969 = vmatprep.subr.mxu0 0.0
    %2970 = vmatpush2.msra.mxu0 0.0
    %2971 = vmatprep.subr.mxu0 0.0
    %2972 = vmatpush2.msra.mxu0 0.0
    %2973 = vmatprep.subr.mxu0 0.0
    %2974 = vmatpush2.msra.mxu0 0.0
    %2975 = vmatprep.mubr.f32.mxu0 0.0
    %2976 = vmatmul.mubr.f32.gmra.mxu0 %v1120
    %v2977 = vpop.f32.mrf.mxu0
    %v2978 = vadd.f32 0.0, %v2977
    %v2979 = vpop.f32.mrf.mxu0
    %2980 = vmatprep.mubr.f32.mxu0 0.0
    %2981 = vmatmul.mubr.f32.gmra.mxu0 %v1123
    %v2982 = vpop.f32.mrf.mxu0
    %v2983 = vadd.f32 0.0, %v2982
    %v2984 = vpop.f32.mrf.mxu0
    %2985 = vmatprep.mubr.f32.mxu0 0.0
    %2986 = vmatmul.mubr.f32.gmra.mxu0 %v1126
    %v2987 = vpop.f32.mrf.mxu0
    %v2988 = vadd.f32 0.0, %v2987
    %v2989 = vpop.f32.mrf.mxu0
    %2990 = vmatprep.mubr.f32.mxu0 0.0
    %2991 = vmatmul.mubr.f32.gmra.mxu0 %v1129
    %v2992 = vpop.f32.mrf.mxu0
    %v2993 = vadd.f32 0.0, %v2992
    %v2994 = vpop.f32.mrf.mxu0
    %2995 = vmatprep.mubr.f32.mxu0 0.0
    %2996 = vmatmul.mubr.f32.gmra.mxu0 %v1132
    %v2997 = vpop.f32.mrf.mxu0
    %v2998 = vadd.f32 0.0, %v2997
    %v2999 = vpop.f32.mrf.mxu0
    %3000 = vmatprep.mubr.f32.mxu0 0.0
    %3001 = vmatmul.mubr.f32.gmra.mxu0 %v1135
    %v3002 = vpop.f32.mrf.mxu0
    %v3003 = vadd.f32 0.0, %v3002
    %v3004 = vpop.f32.mrf.mxu0
    %3005 = vmatprep.mubr.f32.mxu0 0.0
    %3006 = vmatmul.mubr.f32.gmra.mxu0 %v1138
    %v3007 = vpop.f32.mrf.mxu0
    %v3008 = vadd.f32 0.0, %v3007
    %v3009 = vpop.f32.mrf.mxu0
    %3010 = vmatprep.mubr.f32.mxu0 0.0
    %3011 = vmatmul.mubr.f32.gmra.mxu0 %v1141
    %v3012 = vpop.f32.mrf.mxu0
    %v3013 = vadd.f32 0.0, %v3012
    %v3014 = vpop.f32.mrf.mxu0
    %3015 = vmatprep.mubr.f32.mxu0 0.0
    %3016 = vmatmul.mubr.f32.gmra.mxu0 %v1144
    %v3017 = vpop.f32.mrf.mxu0
    %v3018 = vadd.f32 0.0, %v3017
    %v3019 = vpop.f32.mrf.mxu0
    %3020 = vmatprep.mubr.f32.mxu0 0.0
    %3021 = vmatmul.mubr.f32.gmra.mxu0 %v1147
    %v3022 = vpop.f32.mrf.mxu0
    %v3023 = vadd.f32 0.0, %v3022
    %v3024 = vpop.f32.mrf.mxu0
    %3025 = vdwg.mxu0
    %v3026 = vmul.f32 %v2978, %v330
    %v3027 = vmul.f32 %v2983, %v331
    %v3028 = vmul.f32 %v2988, %v332
    %v3029 = vmul.f32 %v2993, %v333
    %v3030 = vmul.f32 %v2998, %v334
    %v3031 = vmul.f32 %v3003, %v335
    %v3032 = vmul.f32 %v3008, %v336
    %v3033 = vmul.f32 %v3013, %v337
    %v3034 = vmul.f32 %v3018, %v338
    %v3035 = vmul.f32 %v3023, %v339
    %v3036 = vsel %vm1511, %v3026, 0.0
    %3037 = vadd.xlane.f32.xlu0 %v3036
    %v3038 = vpop.xlane.xlu0 %3037
    %v3039 = vsel %vm1511, %v3027, 0.0
    %3040 = vadd.xlane.f32.xlu0 %v3039
    %v3041 = vpop.xlane.xlu0 %3040
    %v3042 = vsel %vm1511, %v3028, 0.0
    %3043 = vadd.xlane.f32.xlu0 %v3042
    %v3044 = vpop.xlane.xlu0 %3043
    %v3045 = vsel %vm1511, %v3029, 0.0
    %3046 = vadd.xlane.f32.xlu0 %v3045
    %v3047 = vpop.xlane.xlu0 %3046
    %v3048 = vsel %vm1511, %v3030, 0.0
    %3049 = vadd.xlane.f32.xlu0 %v3048
    %v3050 = vpop.xlane.xlu0 %3049
    %v3051 = vsel %vm1511, %v3031, 0.0
    %3052 = vadd.xlane.f32.xlu0 %v3051
    %v3053 = vpop.xlane.xlu0 %3052
    %v3054 = vsel %vm1511, %v3032, 0.0
    %3055 = vadd.xlane.f32.xlu0 %v3054
    %v3056 = vpop.xlane.xlu0 %3055
    %v3057 = vsel %vm1511, %v3033, 0.0
    %3058 = vadd.xlane.f32.xlu0 %v3057
    %v3059 = vpop.xlane.xlu0 %3058
    %v3060 = vsel %vm1511, %v3034, 0.0
    %3061 = vadd.xlane.f32.xlu0 %v3060
    %v3062 = vpop.xlane.xlu0 %3061
    %v3063 = vsel %vm1511, %v3035, 0.0
    %3064 = vadd.xlane.f32.xlu0 %v3063
    %v3065 = vpop.xlane.xlu0 %3064
    %v3066 = vmul.f32 %v2978, %v1553
    %v3067 = vmul.f32 %v2983, %v1555
    %v3068 = vmul.f32 %v2988, %v1557
    %v3069 = vmul.f32 %v2993, %v1559
    %v3070 = vmul.f32 %v2998, %v1561
    %v3071 = vmul.f32 %v3003, %v1563
    %v3072 = vmul.f32 %v3008, %v1565
    %v3073 = vmul.f32 %v3013, %v1567
    %v3074 = vmul.f32 %v3018, %v1569
    %v3075 = vmul.f32 %v3023, %v1571
    %3086 = vrot.lane.b32.xlu0 %v3066, 120
    %v3087 = vpop.permute.xlu0 %3086
    %3088 = vrot.lane.b32.xlu0 %v3067, 120
    %v3089 = vpop.permute.xlu0 %3088
    %3090 = vrot.lane.b32.xlu0 %v3068, 120
    %v3091 = vpop.permute.xlu0 %3090
    %3092 = vrot.lane.b32.xlu0 %v3069, 120
    %v3093 = vpop.permute.xlu0 %3092
    %3094 = vrot.lane.b32.xlu0 %v3070, 120
    %v3095 = vpop.permute.xlu0 %3094
    %3096 = vrot.lane.b32.xlu0 %v3071, 120
    %v3097 = vpop.permute.xlu0 %3096
    %3098 = vrot.lane.b32.xlu0 %v3072, 120
    %v3099 = vpop.permute.xlu0 %3098
    %3100 = vrot.lane.b32.xlu0 %v3073, 120
    %v3101 = vpop.permute.xlu0 %3100
    %3102 = vrot.lane.b32.xlu0 %v3074, 120
    %v3103 = vpop.permute.xlu0 %3102
    %3104 = vrot.lane.b32.xlu0 %v3075, 120
    %v3105 = vpop.permute.xlu0 %3104
    %v3116 = vsel %vm1511, %v3087, 0.0
    %3117 = vadd.xlane.f32.xlu0 %v3116
    %v3118 = vpop.xlane.xlu0 %3117
    %v3119 = vsel %vm1511, %v3089, 0.0
    %3120 = vadd.xlane.f32.xlu0 %v3119
    %v3121 = vpop.xlane.xlu0 %3120
    %v3122 = vsel %vm1511, %v3091, 0.0
    %3123 = vadd.xlane.f32.xlu0 %v3122
    %v3124 = vpop.xlane.xlu0 %3123
    %v3125 = vsel %vm1511, %v3093, 0.0
    %3126 = vadd.xlane.f32.xlu0 %v3125
    %v3127 = vpop.xlane.xlu0 %3126
    %v3128 = vsel %vm1511, %v3095, 0.0
    %3129 = vadd.xlane.f32.xlu0 %v3128
    %v3130 = vpop.xlane.xlu0 %3129
    %v3131 = vsel %vm1511, %v3097, 0.0
    %3132 = vadd.xlane.f32.xlu0 %v3131
    %v3133 = vpop.xlane.xlu0 %3132
    %v3134 = vsel %vm1511, %v3099, 0.0
    %3135 = vadd.xlane.f32.xlu0 %v3134
    %v3136 = vpop.xlane.xlu0 %3135
    %v3137 = vsel %vm1511, %v3101, 0.0
    %3138 = vadd.xlane.f32.xlu0 %v3137
    %v3139 = vpop.xlane.xlu0 %3138
    %v3140 = vsel %vm1511, %v3103, 0.0
    %3141 = vadd.xlane.f32.xlu0 %v3140
    %v3142 = vpop.xlane.xlu0 %3141
    %v3143 = vsel %vm1511, %v3105, 0.0
    %3144 = vadd.xlane.f32.xlu0 %v3143
    %v3145 = vpop.xlane.xlu0 %3144
    %s3146 = scalar_lea.vmem %s49, 80
    %v3147 = vld [vmem:[%s3146 + $0x8] sm:$0xff]
    %v3148 = vld [vmem:[%s3146 + $0x10] sm:$0xff]
    %v3149 = vld [vmem:[%s3146 + $0x18] sm:$0xff]
    %v3150 = vld [vmem:[%s3146 + $0x20] sm:$0xff]
    %v3151 = vld [vmem:[%s3146 + $0x30] sm:$0xff]
    %v3152 = vld [vmem:[%s3146 + $0x38] sm:$0xff]
    %v3153 = vld [vmem:[%s3146 + $0x40] sm:$0xff]
    %v3154 = vld [vmem:[%s3146 + $0x48] sm:$0xff]
    %v3155 = vmul.f32 %v2748, %v3147
    %v3156 = vmul.f32 %v2753, %v3148
    %v3157 = vmul.f32 %v2758, %v3149
    %v3158 = vmul.f32 %v2763, %v3150
    %v3159 = vmul.f32 %v2772, %v3151
    %v3160 = vmul.f32 %v2777, %v3152
    %v3161 = vmul.f32 %v2782, %v3153
    %v3162 = vmul.f32 %v2787, %v3154
    %v3163 = vmul.f32 %v3155, 1.442695
    %v3164 = vpow.pop %v3163
    %v3165 = vmul.f32 %v3156, 1.442695
    %v3166 = vpow.pop %v3165
    %v3167 = vmul.f32 %v3157, 1.442695
    %v3168 = vpow.pop %v3167
    %v3169 = vmul.f32 %v3158, 1.442695
    %v3170 = vpow.pop %v3169
    %v3171 = vmul.f32 %v3159, 1.442695
    %v3172 = vpow.pop %v3171
    %v3173 = vmul.f32 %v3160, 1.442695
    %v3174 = vpow.pop %v3173
    %v3175 = vmul.f32 %v3161, 1.442695
    %v3176 = vpow.pop %v3175
    %v3177 = vmul.f32 %v3162, 1.442695
    %v3178 = vpow.pop %v3177
    %v3179 = vmul.f32 %v3038, %v2860
    %v3180 = vmul.f32 %v3041, %v2865
    %v3181 = vmul.f32 %v3044, %v2870
    %v3182 = vmul.f32 %v3047, %v2875
    %v3183 = vmul.f32 %v3050, %v2880
    %v3184 = vmul.f32 %v3053, %v2885
    %v3185 = vmul.f32 %v3056, %v2890
    %v3186 = vmul.f32 %v3059, %v2895
    %v3187 = vmul.f32 %v3062, %v2900
    %v3188 = vmul.f32 %v3065, %v2905
    %3189 = vst.msk [vmem:[#allocation2] sm:$0xff] %vm242, %v3179
    %v3190 = vmul.f32 %v3164, %v3179
    %v3191 = vadd.f32 %v3190, %v3180
    %3192 = vst.msk [vmem:[#allocation2 + $0x8] sm:$0xff] %vm242, %v3191
    %v3193 = vmul.f32 %v3166, %v3191
    %v3194 = vadd.f32 %v3193, %v3181
    %3195 = vst.msk [vmem:[#allocation2 + $0x10] sm:$0xff] %vm242, %v3194
    %v3196 = vmul.f32 %v3168, %v3194
    %v3197 = vadd.f32 %v3196, %v3182
    %3198 = vst.msk [vmem:[#allocation2 + $0x18] sm:$0xff] %vm242, %v3197
    %v3199 = vmul.f32 %v3170, %v3197
    %v3200 = vadd.f32 %v3199, %v3183
    %3201 = vst.msk [vmem:[#allocation2 + $0x20] sm:$0xff] %vm242, %v3200
    %3202 = vst.msk [vmem:[#allocation2 + $0x28] sm:$0xff] %vm242, %v3184
    %v3203 = vmul.f32 %v3172, %v3184
    %v3204 = vadd.f32 %v3203, %v3185
    %3205 = vst.msk [vmem:[#allocation2 + $0x30] sm:$0xff] %vm242, %v3204
    %v3206 = vmul.f32 %v3174, %v3204
    %v3207 = vadd.f32 %v3206, %v3186
    %3208 = vst.msk [vmem:[#allocation2 + $0x38] sm:$0xff] %vm242, %v3207
    %v3209 = vmul.f32 %v3176, %v3207
    %v3210 = vadd.f32 %v3209, %v3187
    %3211 = vst.msk [vmem:[#allocation2 + $0x40] sm:$0xff] %vm242, %v3210
    %v3212 = vmul.f32 %v3178, %v3210
    %v3213 = vadd.f32 %v3212, %v3188
    %3214 = vst.msk [vmem:[#allocation2 + $0x48] sm:$0xff] %vm242, %v3213
    %v3215 = vld [vmem:[#allocation2] sm:$0xff]
    %v3216 = vld [vmem:[#allocation2 + $0x8] sm:$0xff]
    %v3217 = vld [vmem:[#allocation2 + $0x10] sm:$0xff]
    %v3218 = vld [vmem:[#allocation2 + $0x18] sm:$0xff]
    %v3219 = vld [vmem:[#allocation2 + $0x20] sm:$0xff]
    %v3220 = vld [vmem:[#allocation2 + $0x28] sm:$0xff]
    %v3221 = vld [vmem:[#allocation2 + $0x30] sm:$0xff]
    %v3222 = vld [vmem:[#allocation2 + $0x38] sm:$0xff]
    %v3223 = vld [vmem:[#allocation2 + $0x40] sm:$0xff]
    %v3224 = vld [vmem:[#allocation2 + $0x48] sm:$0xff]
    %v3225 = vmul.f32 %v3118, %v3215
    %v3226 = vmul.f32 %v3121, %v3216
    %v3227 = vmul.f32 %v3124, %v3217
    %v3228 = vmul.f32 %v3127, %v3218
    %v3229 = vmul.f32 %v3130, %v3219
    %v3230 = vmul.f32 %v3133, %v3220
    %v3231 = vmul.f32 %v3136, %v3221
    %v3232 = vmul.f32 %v3139, %v3222
    %v3233 = vmul.f32 %v3142, %v3223
    %v3234 = vmul.f32 %v3145, %v3224
    %s3235 = scalar_lea.vmem %s51, 1
    %v3236 = vld [vmem:[%s3235] sm:$0x1]
    %v3238 = vlaneseq
    %v3239 = vshrl.u32 %v3238, 7
    %v3240 = vsub.s32 0, %v3239
    %v3241 = vrot.slane %v3236, %v3240
    %v3243 = vmul.f32 %v3241, %v2474
    %v3244 = vmul.f32 %v3241, %v2475
    %3245 = vmatprep.subr.mxu0 0.0
    %3246 = vmatpush1.msra.mxu0 0.0
    %3247 = vmatprep.subr.mxu0 0.0
    %3248 = vmatpush1.msra.mxu0 0.0
    %3249 = vmatprep.subr.mxu0 0.0
    %3250 = vmatpush1.msra.mxu0 0.0
    %3251 = vmatprep.subr.mxu0 0.0
    %3252 = vmatpush1.msra.mxu0 0.0
    %3253 = vmatprep.subr.mxu0 0.0
    %3254 = vmatpush1.msra.mxu0 0.0
    %3255 = vmatprep.subr.mxu0 0.0
    %3256 = vmatpush1.msra.mxu0 0.0
    %3257 = vmatprep.subr.mxu0 0.0
    %3258 = vmatpush1.msra.mxu0 %v3234
    %3259 = vmatprep.subr.mxu0 0.0
    %3260 = vmatpush1.msra.mxu0 %v3233
    %3261 = vmatprep.subr.mxu0 0.0
    %3262 = vmatpush1.msra.mxu0 %v3232
    %3263 = vmatprep.subr.mxu0 0.0
    %3264 = vmatpush1.msra.mxu0 %v3231
    %3265 = vmatprep.subr.mxu0 0.0
    %3266 = vmatpush1.msra.mxu0 %v3230
    %3267 = vmatprep.subr.mxu0 0.0
    %3268 = vmatpush1.msra.mxu0 %v3229
    %3269 = vmatprep.subr.mxu0 0.0
    %3270 = vmatpush1.msra.mxu0 %v3228
    %3271 = vmatprep.subr.mxu0 0.0
    %3272 = vmatpush1.msra.mxu0 %v3227
    %3273 = vmatprep.subr.mxu0 0.0
    %3274 = vmatpush1.msra.mxu0 %v3226
    %3275 = vmatprep.subr.mxu0 0.0
    %3276 = vmatpush1.msra.mxu0 %v3225
    %3277 = vmatprep.subr.mxu0 0.0
    %3278 = vmatpush2.msra.mxu0 0.0
    %3279 = vmatprep.subr.mxu0 0.0
    %3280 = vmatpush2.msra.mxu0 0.0
    %3281 = vmatprep.subr.mxu0 0.0
    %3282 = vmatpush2.msra.mxu0 0.0
    %3283 = vmatprep.subr.mxu0 0.0
    %3284 = vmatpush2.msra.mxu0 0.0
    %3285 = vmatprep.subr.mxu0 0.0
    %3286 = vmatpush2.msra.mxu0 0.0
    %3287 = vmatprep.subr.mxu0 0.0
    %3288 = vmatpush2.msra.mxu0 0.0
    %3289 = vmatprep.subr.mxu0 0.0
    %3290 = vmatpush2.msra.mxu0 0.0
    %3291 = vmatprep.subr.mxu0 0.0
    %3292 = vmatpush2.msra.mxu0 0.0
    %3293 = vmatprep.subr.mxu0 0.0
    %3294 = vmatpush2.msra.mxu0 0.0
    %3295 = vmatprep.subr.mxu0 0.0
    %3296 = vmatpush2.msra.mxu0 0.0
    %3297 = vmatprep.subr.mxu0 0.0
    %3298 = vmatpush2.msra.mxu0 0.0
    %3299 = vmatprep.subr.mxu0 0.0
    %3300 = vmatpush2.msra.mxu0 0.0
    %3301 = vmatprep.subr.mxu0 0.0
    %3302 = vmatpush2.msra.mxu0 0.0
    %3303 = vmatprep.subr.mxu0 0.0
    %3304 = vmatpush2.msra.mxu0 0.0
    %3305 = vmatprep.subr.mxu0 0.0
    %3306 = vmatpush2.msra.mxu0 0.0
    %3307 = vmatprep.subr.mxu0 0.0
    %3308 = vmatpush2.msra.mxu0 0.0
    %3309 = vmatprep.mubr.f32.mxu0 0.0
    %3310 = vmatmul.mubr.f32.gmra.mxu0 %v1761
    %v3311 = vpop.f32.mrf.mxu0
    %v3312 = vadd.f32 %v3243, %v3311
    %v3313 = vpop.f32.mrf.mxu0
    %3314 = vmatprep.mubr.f32.mxu0 0.0
    %3315 = vmatmul.mubr.f32.gmra.mxu0 %v1764
    %v3316 = vpop.f32.mrf.mxu0
    %v3317 = vadd.f32 %v3244, %v3316
    %v3318 = vpop.f32.mrf.mxu0
    %3319 = vdwg.mxu0
    %v3320 = vxor.u32 %v2379, 2147483648
    %v3321 = vxor.u32 %v2382, 2147483648
    %v3322 = vmul.f32 %v3320, 1.442695
    %v3323 = vpow.pop %v3322
    %v3324 = vmul.f32 %v3321, 1.442695
    %v3325 = vpow.pop %v3324
    %v3326 = vadd.f32 %v3323, 1.0
    %v3327 = vadd.f32 %v3325, 1.0
    %v3328 = vrcp.pop %v3326
    %v3329 = vmul.f32 1.0, %v3328
    %v3330 = vrcp.pop %v3327
    %v3331 = vmul.f32 1.0, %v3330
    %v3332 = vmul.f32 %v2379, %v3329
    %v3333 = vmul.f32 %v2382, %v3331
    %3336 = vrot.lane.b32.xlu0 %v3332, 64
    %v3337 = vpop.permute.xlu0 %3336
    %3338 = vrot.lane.b32.xlu0 %v3333, 64
    %v3339 = vpop.permute.xlu0 %3338
    %v3342 = vmul.f32 %v3312, %v3337
    %v3343 = vmul.f32 %v3317, %v3339
    %s3344 = scalar_lea.vmem %s53, 32
    %v3345 = vld [vmem:[%s3344] sm:$0xf]
    %v3346 = vld [vmem:[%s3344 + $0x4] sm:$0xf]
    %v3347 = vld [vmem:[%s3344 + $0x8] sm:$0xf]
    %v3348 = vld [vmem:[%s3344 + $0xc] sm:$0xf]
    %v3349 = vld [vmem:[%s3344 + $0x10] sm:$0xf]
    %v3350 = vld [vmem:[%s3344 + $0x14] sm:$0xf]
    %v3351 = vld [vmem:[%s3344 + $0x18] sm:$0xf]
    %v3352 = vld [vmem:[%s3344 + $0x1c] sm:$0xf]
    %v3353 = vpack.c.bf16 %v3343, %v3342
    %v3362 = vunpack.c.l.b16 %v3345
    %v3363 = vunpack.c.l.b16 %v3346
    %v3364 = vunpack.c.l.b16 %v3347
    %v3365 = vunpack.c.l.b16 %v3348
    %v3366 = vunpack.c.l.b16 %v3349
    %v3367 = vunpack.c.l.b16 %v3350
    %v3368 = vunpack.c.l.b16 %v3351
    %v3369 = vunpack.c.l.b16 %v3352
    %v3370 = vpack.c.b16 %v3363, %v3362
    %v3371 = vpack.c.b16 %v3365, %v3364
    %v3372 = vpack.c.b16 %v3367, %v3366
    %v3373 = vpack.c.b16 %v3369, %v3368
    %v3379 = vsel %vm242, %v3353, 0
    %3381 = vmatprep.subr.bf16.mxu0 0
    %3382 = vmatpush1.bf16.msra.mxu0 0
    %3383 = vmatprep.subr.bf16.mxu0 0
    %3384 = vmatpush1.bf16.msra.mxu0 0
    %3385 = vmatprep.subr.bf16.mxu0 0
    %3386 = vmatpush1.bf16.msra.mxu0 0
    %3387 = vmatprep.subr.bf16.mxu0 0
    %3388 = vmatpush1.bf16.msra.mxu0 0
    %3389 = vmatprep.subr.bf16.mxu0 0
    %3390 = vmatpush1.bf16.msra.mxu0 %v3373
    %3391 = vmatprep.subr.bf16.mxu0 0
    %3392 = vmatpush1.bf16.msra.mxu0 %v3372
    %3393 = vmatprep.subr.bf16.mxu0 0
    %3394 = vmatpush1.bf16.msra.mxu0 %v3371
    %3395 = vmatprep.subr.bf16.mxu0 0
    %3396 = vmatpush1.bf16.msra.mxu0 %v3370
    %3397 = vmatprep.subr.bf16.mxu0 0
    %3398 = vmatpush2.bf16.msra.mxu0 0
    %3399 = vmatprep.subr.bf16.mxu0 0
    %3400 = vmatpush2.bf16.msra.mxu0 0
    %3401 = vmatprep.subr.bf16.mxu0 0
    %3402 = vmatpush2.bf16.msra.mxu0 0
    %3403 = vmatprep.subr.bf16.mxu0 0
    %3404 = vmatpush2.bf16.msra.mxu0 0
    %3405 = vmatprep.subr.bf16.mxu0 0
    %3406 = vmatpush2.bf16.msra.mxu0 0
    %3407 = vmatprep.subr.bf16.mxu0 0
    %3408 = vmatpush2.bf16.msra.mxu0 0
    %3409 = vmatprep.subr.bf16.mxu0 0
    %3410 = vmatpush2.bf16.msra.mxu0 0
    %3411 = vmatprep.subr.bf16.mxu0 0
    %3412 = vmatpush2.bf16.msra.mxu0 0
    %3413 = vmatprep.mubr.bf16.mxu0 0
    %3414 = vmatmul.mubr.bf16.gmra.mxu0 %v3379
    %v3415 = vpop.f32.mrf.mxu0
    %v3416 = vadd.f32 0.0, %v3415
    %v3417 = vpop.f32.mrf.mxu0
    %v3418 = vpop.f32.mrf.mxu0
    %v3419 = vadd.f32 0.0, %v3418
    %v3420 = vpop.f32.mrf.mxu0
    %3421 = vdwg.mxu0
    %v3422 = vadd.f32 %v2275, %v3416
    %v3423 = vadd.f32 %v2276, %v3419
    %v3424 = vsel %vm382, %v3422, 0.0
    %3425 = vadd.xlane.f32.xlu0 %v3424
    %v3426 = vpop.xlane.xlu0 %3425
    %v3427 = vsel %vm693, %v3423, 0.0
    %3428 = vadd.xlane.f32.xlu0 %v3427
    %v3429 = vpop.xlane.xlu0 %3428
    %v3430 = vmul.f32 %v3426, %v697
    %v3431 = vmul.f32 %v3429, %v697
    %v3432 = vsub.f32 %v3422, %v3430
    %v3433 = vsub.f32 %v3423, %v3431
    %v3434 = vmul.f32 %v3432, %v3432
    %v3435 = vmul.f32 %v3433, %v3433
    %v3436 = vsel %vm382, %v3434, 0.0
    %3437 = vadd.xlane.f32.xlu0 %v3436
    %v3438 = vpop.xlane.xlu0 %3437
    %v3439 = vsel %vm693, %v3435, 0.0
    %3440 = vadd.xlane.f32.xlu0 %v3439
    %v3441 = vpop.xlane.xlu0 %3440
    %v3442 = vmul.f32 %v3438, %v697
    %v3443 = vmul.f32 %v3441, %v697
    %v3444 = vadd.f32 %v3442, 1e-05
    %v3445 = vadd.f32 %v3443, 1e-05
    %v3446 = vrsqrt.pop %v3444
    %v3447 = vrsqrt.pop %v3445
    %v3448 = vmul.f32 %v3432, %v3446
    %v3449 = vmul.f32 %v3433, %v3447
    %v3450 = vld [vmem:[%s55] sm:$0x1]
    %v3452 = vlaneseq
    %v3453 = vshrl.u32 %v3452, 7
    %v3454 = vsub.s32 0, %v3453
    %v3455 = vrot.slane %v3450, %v3454
    %v3457 = vmul.f32 %v3448, %v3455
    %v3458 = vmul.f32 %v3449, %v3455
    %v3459 = vld [vmem:[%s57] sm:$0x1]
    %v3461 = vlaneseq
    %v3462 = vshrl.u32 %v3461, 7
    %v3463 = vsub.s32 0, %v3462
    %v3464 = vrot.slane %v3459, %v3463
    %v3466 = vadd.f32 %v3457, %v3464
    %v3467 = vadd.f32 %v3458, %v3464
    %3468 = vst.msk [vmem:[%s65] sm:$0xff] %vm382, %v3466
    %3469 = vst.msk [vmem:[%s65 + $0x8] sm:$0x3] %vm693, %v3467
    %v3471 = vrot.slane %v3466, 2
    %v3473 = vrot.slane %v3466, 6
    %vm3475 = vcmask 1040384
    %v3476 = vsel %vm3475, %v3471, %v3473
    %v3477 = vld [vmem:[%s59] sm:$0xf]
    %v3478 = vld [vmem:[%s59 + $0x4] sm:$0xf]
    %v3479 = vld [vmem:[%s59 + $0x8] sm:$0xf]
    %v3480 = vld [vmem:[%s59 + $0xc] sm:$0xf]
    %v3481 = vpack.c.bf16 %v3476, %v3476
    %v3482 = vld [vmem:[%s61] sm:$0x1]
    %v3484 = vlaneseq
    %v3485 = vshrl.u32 %v3484, 7
    %v3486 = vsub.s32 0, %v3485
    %v3487 = vrot.slane %v3482, %v3486
    %v3493 = vunpack.c.l.b16 %v3477
    %v3494 = vunpack.c.l.b16 %v3478
    %v3495 = vunpack.c.l.b16 %v3479
    %v3496 = vunpack.c.l.b16 %v3480
    %v3497 = vpack.c.b16 %v3494, %v3493
    %v3498 = vpack.c.b16 %v3496, %v3495
    %v3502 = vsel %vm382, %v3481, 0
    %3504 = vmatprep.subr.bf16.mxu0 0
    %3505 = vmatpush1.bf16.msra.mxu0 0
    %3506 = vmatprep.subr.bf16.mxu0 0
    %3507 = vmatpush1.bf16.msra.mxu0 0
    %3508 = vmatprep.subr.bf16.mxu0 0
    %3509 = vmatpush1.bf16.msra.mxu0 0
    %3510 = vmatprep.subr.bf16.mxu0 0
    %3511 = vmatpush1.bf16.msra.mxu0 0
    %3512 = vmatprep.subr.bf16.mxu0 0
    %3513 = vmatpush1.bf16.msra.mxu0 0
    %3514 = vmatprep.subr.bf16.mxu0 0
    %3515 = vmatpush1.bf16.msra.mxu0 0
    %3516 = vmatprep.subr.bf16.mxu0 0
    %3517 = vmatpush1.bf16.msra.mxu0 %v3498
    %3518 = vmatprep.subr.bf16.mxu0 0
    %3519 = vmatpush1.bf16.msra.mxu0 %v3497
    %3520 = vmatprep.subr.bf16.mxu0 0
    %3521 = vmatpush2.bf16.msra.mxu0 0
    %3522 = vmatprep.subr.bf16.mxu0 0
    %3523 = vmatpush2.bf16.msra.mxu0 0
    %3524 = vmatprep.subr.bf16.mxu0 0
    %3525 = vmatpush2.bf16.msra.mxu0 0
    %3526 = vmatprep.subr.bf16.mxu0 0
    %3527 = vmatpush2.bf16.msra.mxu0 0
    %3528 = vmatprep.subr.bf16.mxu0 0
    %3529 = vmatpush2.bf16.msra.mxu0 0
    %3530 = vmatprep.subr.bf16.mxu0 0
    %3531 = vmatpush2.bf16.msra.mxu0 0
    %3532 = vmatprep.subr.bf16.mxu0 0
    %3533 = vmatpush2.bf16.msra.mxu0 0
    %3534 = vmatprep.subr.bf16.mxu0 0
    %3535 = vmatpush2.bf16.msra.mxu0 0
    %3536 = vmatprep.mubr.bf16.mxu0 0
    %3537 = vmatmul.mubr.bf16.gmra.mxu0 %v3502
    %v3538 = vpop.f32.mrf.mxu0
    %v3539 = vadd.f32 %v3487, %v3538
    %v3540 = vpop.f32.mrf.mxu0
    %v3541 = vpop.f32.mrf.mxu0
    %v3542 = vpop.f32.mrf.mxu0
    %3543 = vdwg.mxu0
    %vm3544 = vcmask 74752
    %3545 = vst.msk [vmem:[#allocation3] sm:$0x3] %vm3544, %v3539
    // Predicated region
    $region126: #{vision_mamba_forward.3} parent=1 // pred_check
      _
    $region127: #{vision_mamba_forward.3} parent=1 // pred_check_branch
      %3547 = sbr.rel (0) target = $region129
    $region128: #{vision_mamba_forward.3} parent=1 // pred_region
      %s3549 = ssub.s32 32, 32
      %3550 = vsyncadd [#allocation4], %s3549
      %s3552 = sshll.u32 [#allocation3], 4
      %s3553 = int_to_ptr.vmem [resolvable:$true] %s3552
      %3555 = dma.vmem_to_hbm [thread:$0]  %s3553, 32, %s63, [#allocation4]
    $region129: #{vision_mamba_forward.3} parent=1 // pred_fallthru
      _
    // Predicated region
    $region130: #{vision_mamba_forward.3} parent=1 // pred_check
      _
    $region131: #{vision_mamba_forward.3} parent=1 // pred_check_branch
      %3557 = sbr.rel (0) target = $region133
    $region132: #{vision_mamba_forward.3} parent=1 // pred_region
      _
    $region133: #{vision_mamba_forward.3} parent=1 // pred_fallthru
      _
    // Predicated region
    $region134: #{vision_mamba_forward.3} parent=1 // pred_check
      _
    $region135: #{vision_mamba_forward.3} parent=1 // pred_check_branch
      %3559 = sbr.rel (0) target = $region137
    $region136: #{vision_mamba_forward.3} parent=1 // pred_region
      %3560 = dma.done [#allocation4], 32
    $region137: #{vision_mamba_forward.3} parent=1 // pred_fallthru
      _
    // Predicated region
    $region138: #{vision_mamba_forward.3} parent=1 // pred_check
      _
    $region139: #{vision_mamba_forward.3} parent=1 // pred_check_branch
      %3562 = sbr.rel (0) target = $region141
    $region140: #{vision_mamba_forward.3} parent=1 // pred_region
      _
    $region141: #{vision_mamba_forward.3} parent=1 // pred_fallthru
      _
    %3563 = vsyncpa [#allocation4], 1

</llo_original>
